<compile_context>
chip_gen: v7x
topology: tpu7x:2x2x1
jax: 0.10.0
libtpu: 0.0.40
codegen_flags: <defaults>
</compile_context>

<pallas_src>
import jax
import jax.numpy as jnp
from jax.experimental import pallas as pl
from jax.experimental.pallas import tpu as pltpu

BN_EPS = 1e-5  # args.bnArgs['eps']

_COMPILER_PARAMS = pltpu.CompilerParams(
    dimension_semantics=("parallel", "parallel"),   # (batch, row-tile) -> both TCs on v7x
    vmem_limit_bytes=32 * 1024 * 1024,              # safe on v7x (64 MiB), fine on v5e/v6e
)


def _pick_row_tile(h, w, c_max):
    """Largest H row-tile that divides H, keeps the per-step working set bounded and
    leaves >=2 row tiles (grid parallelism) when the image is not tiny."""
    budget = 8 * 1024 * 1024                    # ~8 MiB working set per grid step
    bytes_per_row = max(1, w * c_max * 28)      # f32 I/O blocks + bf16 temps + fused LHS + acc
    for th in (64, 32, 16, 8, 4, 2, 1):
        if h % th:
            continue
        if th * bytes_per_row > budget:
            continue
        if th == h and h > 8:
            continue                            # keep >=2 row tiles for megacore sharding
        return th
    return 1


# ----------------------------------------------------------------------------
# Shared in-kernel helper: BN -> ReLU -> 3x3 conv on one row tile (with halo rows)
# ----------------------------------------------------------------------------
def _fused_bn_relu_conv3x3(main, top, bot, w3_ref, scale, shift, ti, nt):
    """main: (TH, W, C) raw rows of this tile; top/bot: (1, W, C) halo rows.
    Returns the f32 conv accumulator of shape (TH*W, Cout)."""
    th, w, c = main.shape
    cout = w3_ref.shape[2]

    def bn_relu(v):  # BN + ReLU in f32
        return jnp.maximum(v.astype(jnp.float32) * scale + shift, 0.0)

    a_mid = bn_relu(main)
    # halo rows: zero contribution at the image boundary (scalar predicate, no iota masks)
    a_top = bn_relu(top) * (ti > 0).astype(jnp.float32)
    a_bot = bn_relu(bot) * (ti < nt - 1).astype(jnp.float32)

    # single bf16 cast for all MXU operands (leading-dim concat is cheap)
    a_h = jnp.concatenate([a_top, a_mid, a_bot], axis=0).astype(jnp.bfloat16)  # (TH+2, W, C)

    # 3 dw-shifted planes fused along the contraction axis -> K = 3*C per dot
    zcol = jnp.zeros((th + 2, 1, c), jnp.bfloat16)
    a_lft = jnp.concatenate([zcol, a_h[:, :w - 1]], axis=1)   # input col (w-1) shifted right
    a_rgt = jnp.concatenate([a_h[:, 1:], zcol], axis=1)       # input col (w+1)
    a3 = jnp.concatenate([a_lft, a_h, a_rgt], axis=-1)        # (TH+2, W, 3C)

    acc = jnp.zeros((th * w, cout), jnp.float32)
    for dh in range(3):                                        # leading-dim slice: no relayout
        lhs = a3[dh:dh + th].reshape(th * w, 3 * c)
        acc = acc + jnp.dot(lhs, w3_ref[dh], preferred_element_type=jnp.float32)
    return acc


# ----------------------------------------------------------------------------
# Pass 1: per-(image, row-tile) BatchNorm partial statistics (sum, sum of squares)
# ----------------------------------------------------------------------------
def _bn_stats_kernel(x_ref, s_ref):
    th, w, c = x_ref.shape[1], x_ref.shape[2], x_ref.shape[3]
    xf = x_ref[0].astype(jnp.float32).reshape(th * w, c)
    s_ref[0, 0] = jnp.concatenate(
        [jnp.sum(xf, axis=0, keepdims=True),
         jnp.sum(xf * xf, axis=0, keepdims=True)], axis=0)


def _bn_partial_stats(x_nhwc, th):
    n, h, w, c = x_nhwc.shape
    nt = h // th
    return pl.pallas_call(
        _bn_stats_kernel,
        out_shape=jax.ShapeDtypeStruct((n, nt, 2, c), jnp.float32),
        grid=(n, nt),
        in_specs=[pl.BlockSpec((1, th, w, c), lambda i, j: (i, j, 0, 0))],
        out_specs=pl.BlockSpec((1, 1, 2, c), lambda i, j: (i, j, 0, 0)),
        compiler_params=_COMPILER_PARAMS,
    )(x_nhwc)


def _bn_scale_shift(partials, gamma, beta, count):
    """Finalize global BN stats (train-mode, biased variance) into scale/shift."""
    tot = jnp.sum(partials, axis=0)                       # (2, C)
    mean = tot[0] / count
    var = jnp.maximum(tot[1] / count - mean * mean, 0.0)
    scale = gamma * jax.lax.rsqrt(var + BN_EPS)
    shift = beta - mean * scale
    return scale[None, :], shift[None, :]                 # (1, C) each


# ----------------------------------------------------------------------------
# Pass 2: fused BN1 -> ReLU -> Conv3x3 (pad 1); y1 written unpadded in bf16,
#         plus per-tile partial stats of the conv output (feeds BN2).
# ----------------------------------------------------------------------------
def _bn_relu_conv1_kernel(xm_ref, xt_ref, xb_ref, w3_ref, scale_ref, shift_ref,
                          y_ref, stat_ref):
    ti = pl.program_id(1)
    nt = pl.num_programs(1)
    th, w = xm_ref.shape[1], xm_ref.shape[2]
    cout = w3_ref.shape[2]

    acc = _fused_bn_relu_conv3x3(xm_ref[0], xt_ref[0], xb_ref[0], w3_ref,
                                 scale_ref[...], shift_ref[...], ti, nt)

    # partial BN2 stats of this tile's conv output (f32 accumulator; y1 is stored in
    # bf16 -> tiny, documented inconsistency)
    stat_ref[0, 0] = jnp.concatenate(
        [jnp.sum(acc, axis=0, keepdims=True),
         jnp.sum(acc * acc, axis=0, keepdims=True)], axis=0)

    y_ref[0] = acc.reshape(th, w, cout).astype(y_ref.dtype)   # unpadded, offset-0 store


def _bn_relu_conv1(x, w3, scale, shift, th):
    n, h, w, cin = x.shape
    cout = w3.shape[2]
    nt = h // th
    main_map = lambda i, j: (i, j, 0, 0)
    top_map = lambda i, j: (i, jnp.maximum(j * th - 1, 0), 0, 0)      # 1-row halo above
    bot_map = lambda i, j: (i, jnp.minimum((j + 1) * th, h - 1), 0, 0)  # 1-row halo below
    return pl.pallas_call(
        _bn_relu_conv1_kernel,
        out_shape=(jax.ShapeDtypeStruct((n, h, w, cout), jnp.bfloat16),
                   jax.ShapeDtypeStruct((n, nt, 2, cout), jnp.float32)),
        grid=(n, nt),
        in_specs=[pl.BlockSpec((1, th, w, cin), main_map),
                  pl.BlockSpec((1, 1, w, cin), top_map),
                  pl.BlockSpec((1, 1, w, cin), bot_map),
                  pl.BlockSpec((3, 3 * cin, cout), lambda i, j: (0, 0, 0)),
                  pl.BlockSpec((1, cin), lambda i, j: (0, 0)),
                  pl.BlockSpec((1, cin), lambda i, j: (0, 0))],
        out_specs=(pl.BlockSpec((1, th, w, cout), main_map),
                   pl.BlockSpec((1, 1, 2, cout), lambda i, j: (i, j, 0, 0))),
        compiler_params=_COMPILER_PARAMS,
    )(x, x, x, w3, scale, shift)
# TODO(synk): on v5e, if xprof shows exposed DMA on the activation stream, raise that
# BlockSpec to pipeline_mode=pl.Buffered(3) (do not on v7x, where VMEM is the constraint).


# ----------------------------------------------------------------------------
# Pass 3: fused BN2 -> ReLU -> Conv3x3 + IdentityShortcut (1x1 conv or identity) + add
# ----------------------------------------------------------------------------
def _make_conv2_kernel(has_proj):
    def kernel(ym_ref, yt_ref, yb_ref, w3_ref, scale_ref, shift_ref, x_ref, *rest):
        if has_proj:
            wsc_ref, out_ref = rest
        else:
            (out_ref,) = rest
        ti = pl.program_id(1)
        nt = pl.num_programs(1)
        th, w = ym_ref.shape[1], ym_ref.shape[2]
        cout = w3_ref.shape[2]

        acc = _fused_bn_relu_conv3x3(ym_ref[0], yt_ref[0], yb_ref[0], w3_ref,
                                     scale_ref[...], shift_ref[...], ti, nt)

        if has_proj:   # IdentityShortcut: 1x1 conv (channel mismatch), stride 1, no bias
            csc = x_ref.shape[3]
            xflat = x_ref[0].reshape(th * w, csc).astype(jnp.bfloat16)
            acc = acc + jnp.dot(xflat, wsc_ref[...], preferred_element_type=jnp.float32)
        else:          # IdentityShortcut: plain residual add (equal channels)
            acc = acc + x_ref[0].astype(jnp.float32).reshape(th * w, cout)

        out_ref[0] = acc.reshape(th, w, cout).astype(out_ref.dtype)
    return kernel


def _bn_relu_conv2_shortcut(y1, w3, scale, shift, x, w_sc, th):
    n, h, w, cmid = y1.shape
    cout = w3.shape[2]
    cin = x.shape[3]
    nt = h // th
    has_proj = w_sc is not None
    main_map = lambda i, j: (i, j, 0, 0)
    top_map = lambda i, j: (i, jnp.maximum(j * th - 1, 0), 0, 0)
    bot_map = lambda i, j: (i, jnp.minimum((j + 1) * th, h - 1), 0, 0)

    in_specs = [pl.BlockSpec((1, th, w, cmid), main_map),
                pl.BlockSpec((1, 1, w, cmid), top_map),
                pl.BlockSpec((1, 1, w, cmid), bot_map),
                pl.BlockSpec((3, 3 * cmid, cout), lambda i, j: (0, 0, 0)),
                pl.BlockSpec((1, cmid), lambda i, j: (0, 0)),
                pl.BlockSpec((1, cmid), lambda i, j: (0, 0)),
                pl.BlockSpec((1, th, w, cin), main_map)]
    args = [y1, y1, y1, w3, scale, shift, x]
    if has_proj:
        in_specs.append(pl.BlockSpec((cin, cout), lambda i, j: (0, 0)))
        args.append(w_sc)

    return pl.pallas_call(
        _make_conv2_kernel(has_proj),
        out_shape=jax.ShapeDtypeStruct((n, h, w, cout), jnp.float32),
        grid=(n, nt),
        in_specs=in_specs,
        out_specs=pl.BlockSpec((1, th, w, cout), main_map),
        compiler_params=_COMPILER_PARAMS,
    )(*args)


# ----------------------------------------------------------------------------
# ResidualBlock (regular shortcut): parameter init + forward
# ----------------------------------------------------------------------------
def init_residual_block_params(key, in_channels, featmaps, filter_size=3):
    k1, k2, k3 = jax.random.split(key, 3)
    params = {
        "gamma1": jnp.ones((in_channels,), jnp.float32),
        "beta1": jnp.zeros((in_channels,), jnp.float32),
        "w1": 0.1 * jax.random.normal(
            k1, (filter_size, filter_size, in_channels, featmaps), jnp.float32),
        "gamma2": jnp.ones((featmaps,), jnp.float32),
        "beta2": jnp.zeros((featmaps,), jnp.float32),
        "w2": 0.1 * jax.random.normal(
            k2, (filter_size, filter_size, featmaps, featmaps), jnp.float32),
    }
    if in_channels != featmaps:  # IdentityShortcut uses a 1x1 conv when channels differ
        params["w_sc"] = 0.1 * jax.random.normal(k3, (in_channels, featmaps), jnp.float32)
    return params


def residual_block_forward(x_nchw, params):
    x = jnp.transpose(x_nchw, (0, 2, 3, 1)).astype(jnp.float32)     # NCHW -> NHWC
    n, h, w, cin = x.shape
    featmaps = params["w2"].shape[-1]
    count = n * h * w
    th = _pick_row_tile(h, w, max(cin, featmaps))

    # ---- layer1: BN1 -> ReLU -> Conv3x3(pad 1, no bias) ----
    part1 = _bn_partial_stats(x, th)
    scale1, shift1 = _bn_scale_shift(part1.reshape(-1, 2, cin),
                                     params["gamma1"], params["beta1"], count)
    # HWIO (3,3,Cin,F) -> tap-fused (3, 3*Cin, F) so each dot contracts over K = 3*Cin
    w1 = params["w1"].reshape(3, 3 * cin, featmaps).astype(jnp.bfloat16)
    y1, part2 = _bn_relu_conv1(x, w1, scale1, shift1, th)           # y1: bf16, unpadded

    # ---- layer2 + shortcut: BN2 -> ReLU -> Conv3x3 fused with 1x1-conv/identity add ----
    scale2, shift2 = _bn_scale_shift(part2.reshape(-1, 2, featmaps),
                                     params["gamma2"], params["beta2"], count)
    w2 = params["w2"].reshape(3, 3 * featmaps, featmaps).astype(jnp.bfloat16)
    w_sc = params.get("w_sc")
    w_sc = None if w_sc is None else w_sc.astype(jnp.bfloat16)
    out = _bn_relu_conv2_shortcut(y1, w2, scale2, shift2, x, w_sc, th)
    return jnp.transpose(out, (0, 3, 1, 2))                          # NHWC -> NCHW

# TODO(synk): shortcut='projection' (stride-2 conv1 + 3x3/stride-2 ProjectionShortcut +
# channel Concatenate) is not implemented; only the 'regular' shortcut path is covered.
# TODO(synk): torch.utils.checkpoint, Dropout2d(p=0) and BN running-stat updates are
# forward-value no-ops and are omitted.


if __name__ == "__main__":
    key = jax.random.PRNGKey(0)
    kx, kp = jax.random.split(key)

    N, C_IN, H, W = 2, 4, 16, 16
    FEATMAPS = 8   # != C_IN -> exercises the 1x1-conv IdentityShortcut branch

    x = jax.random.normal(kx, (N, C_IN, H, W), jnp.float32)
    params = init_residual_block_params(kp, C_IN, FEATMAPS)

    fwd = jax.jit(residual_block_forward)
    out = fwd(x, params)
    jax.block_until_ready(out)

    assert out.shape == (N, FEATMAPS, H, W), out.shape
    assert out.dtype == jnp.float32
    print("KERNEL_OK")
</pallas_src>

<mosaic_0001>
module attributes {stable_mosaic.version = 11 : i64} {
  func.func @_bn_stats_kernel(%arg0: i32, %arg1: i32, %arg2: memref<1x8x16x4xf32, #tpu.memory_space<vmem>>, %arg3: memref<1x1x2x4xf32, #tpu.memory_space<vmem>>) attributes {dimension_semantics = [#tpu.dimension_semantics<parallel>, #tpu.dimension_semantics<parallel>], iteration_bounds = array<i64: 2, 2>, scalar_prefetch = 0 : i64, scratch_operands = 0 : i64, tpu.core_type = #tpu.core_type<tc>, window_params = [{transform_indices = @transform_0, window_bounds = array<i64: 1, 8, 16, 4>}, {transform_indices = @transform_1, window_bounds = array<i64: 1, 1, 2, 4>}]} {
    %c0 = arith.constant 0 : index
    %c0_0 = arith.constant 0 : index
    %c0_1 = arith.constant 0 : index
    %c0_2 = arith.constant 0 : index
    %0 = vector.load %arg2[%c0, %c0_0, %c0_1, %c0_2] : memref<1x8x16x4xf32, #tpu.memory_space<vmem>>, vector<1x8x16x4xf32>
    %1 = vector.shape_cast %0 : vector<1x8x16x4xf32> to vector<8x16x4xf32>
    %2 = vector.shape_cast %1 : vector<8x16x4xf32> to vector<128x4xf32>
    %cst = arith.constant dense<0.000000e+00> : vector<4xf32>
    %3 = vector.multi_reduction <add>, %2, %cst [0] : vector<128x4xf32> to vector<4xf32>
    %4 = vector.shape_cast %3 : vector<4xf32> to vector<1x4xf32>
    %5 = arith.mulf %2, %2 : vector<128x4xf32>
    %cst_3 = arith.constant dense<0.000000e+00> : vector<4xf32>
    %6 = vector.multi_reduction <add>, %5, %cst_3 [0] : vector<128x4xf32> to vector<4xf32>
    %7 = vector.shape_cast %6 : vector<4xf32> to vector<1x4xf32>
    %8 = tpu.concatenate %4, %7 in 0 : vector<1x4xf32>, vector<1x4xf32> -> vector<2x4xf32>
    %c0_4 = arith.constant 0 : index
    %c0_5 = arith.constant 0 : index
    %c0_6 = arith.constant 0 : index
    %c0_7 = arith.constant 0 : index
    %9 = vector.load %arg3[%c0_4, %c0_5, %c0_6, %c0_7] : memref<1x1x2x4xf32, #tpu.memory_space<vmem>>, vector<1x1x2x4xf32>
    %10 = vector.shape_cast %9 : vector<1x1x2x4xf32> to vector<2x4xf32>
    %11 = vector.shape_cast %8 : vector<2x4xf32> to vector<1x1x2x4xf32>
    tpu.vector_store %arg3[%c0_4, %c0_5, %c0_6, %c0_7], %11 {strides = array<i32>} : memref<1x1x2x4xf32, #tpu.memory_space<vmem>>, vector<1x1x2x4xf32>,
    return
  }
  func.func @transform_0(%arg0: i32, %arg1: i32) -> (i32, i32, i32, i32) {
    %c0_i32 = arith.constant 0 : i32
    %c0_i32_0 = arith.constant 0 : i32
    %c0_i32_1 = arith.constant 0 : i32
    return %arg0, %arg1, %c0_i32, %c0_i32_0 : i32, i32, i32, i32
  }
  func.func @transform_1(%arg0: i32, %arg1: i32) -> (i32, i32, i32, i32) {
    %c0_i32 = arith.constant 0 : i32
    %c0_i32_0 = arith.constant 0 : i32
    %c0_i32_1 = arith.constant 0 : i32
    return %arg0, %arg1, %c0_i32, %c0_i32_0 : i32, i32, i32, i32
  }
}

module attributes {stable_mosaic.version = 11 : i64} {
  func.func @_bn_relu_conv1_kernel(%arg0: i32, %arg1: i32, %arg2: memref<1x8x16x4xf32, #tpu.memory_space<vmem>>, %arg3: memref<1x1x16x4xf32, #tpu.memory_space<vmem>>, %arg4: memref<1x1x16x4xf32, #tpu.memory_space<vmem>>, %arg5: memref<3x12x8xbf16, #tpu.memory_space<vmem>>, %arg6: memref<1x4xf32, #tpu.memory_space<vmem>>, %arg7: memref<1x4xf32, #tpu.memory_space<vmem>>, %arg8: memref<1x8x16x8xbf16, #tpu.memory_space<vmem>>, %arg9: memref<1x1x2x8xf32, #tpu.memory_space<vmem>>) attributes {dimension_semantics = [#tpu.dimension_semantics<parallel>, #tpu.dimension_semantics<parallel>], iteration_bounds = array<i64: 2, 2>, scalar_prefetch = 0 : i64, scratch_operands = 0 : i64, tpu.core_type = #tpu.core_type<tc>, window_params = [{transform_indices = @transform_0, window_bounds = array<i64: 1, 8, 16, 4>}, {transform_indices = @transform_1, window_bounds = array<i64: 1, 1, 16, 4>}, {transform_indices = @transform_2, window_bounds = array<i64: 1, 1, 16, 4>}, {pipeline_mode = #tpu.pipeline_mode<synchronous>, transform_indices = @transform_3, window_bounds = array<i64: 3, 12, 8>}, {pipeline_mode = #tpu.pipeline_mode<synchronous>, transform_indices = @transform_4, window_bounds = array<i64: 1, 4>}, {pipeline_mode = #tpu.pipeline_mode<synchronous>, transform_indices = @transform_5, window_bounds = array<i64: 1, 4>}, {transform_indices = @transform_6, window_bounds = array<i64: 1, 8, 16, 8>}, {transform_indices = @transform_7, window_bounds = array<i64: 1, 1, 2, 8>}]} {
    %c0 = arith.constant 0 : index
    %c0_0 = arith.constant 0 : index
    %c0_1 = arith.constant 0 : index
    %c0_2 = arith.constant 0 : index
    %0 = vector.load %arg2[%c0, %c0_0, %c0_1, %c0_2] : memref<1x8x16x4xf32, #tpu.memory_space<vmem>>, vector<1x8x16x4xf32>
    %1 = vector.shape_cast %0 : vector<1x8x16x4xf32> to vector<8x16x4xf32>
    %c0_3 = arith.constant 0 : index
    %c0_4 = arith.constant 0 : index
    %c0_5 = arith.constant 0 : index
    %c0_6 = arith.constant 0 : index
    %2 = vector.load %arg3[%c0_3, %c0_4, %c0_5, %c0_6] : memref<1x1x16x4xf32, #tpu.memory_space<vmem>>, vector<1x1x16x4xf32>
    %3 = vector.shape_cast %2 : vector<1x1x16x4xf32> to vector<1x16x4xf32>
    %c0_7 = arith.constant 0 : index
    %c0_8 = arith.constant 0 : index
    %c0_9 = arith.constant 0 : index
    %c0_10 = arith.constant 0 : index
    %4 = vector.load %arg4[%c0_7, %c0_8, %c0_9, %c0_10] : memref<1x1x16x4xf32, #tpu.memory_space<vmem>>, vector<1x1x16x4xf32>
    %5 = vector.shape_cast %4 : vector<1x1x16x4xf32> to vector<1x16x4xf32>
    %c0_11 = arith.constant 0 : index
    %c0_12 = arith.constant 0 : index
    %6 = vector.load %arg6[%c0_11, %c0_12] : memref<1x4xf32, #tpu.memory_space<vmem>>, vector<1x4xf32>
    %c0_13 = arith.constant 0 : index
    %c0_14 = arith.constant 0 : index
    %7 = vector.load %arg7[%c0_13, %c0_14] : memref<1x4xf32, #tpu.memory_space<vmem>>, vector<1x4xf32>
    %8 = vector.shape_cast %6 : vector<1x4xf32> to vector<1x1x4xf32>
    %9 = vector.broadcast %8 : vector<1x1x4xf32> to vector<8x16x4xf32>
    %10 = arith.mulf %1, %9 : vector<8x16x4xf32>
    %11 = vector.shape_cast %7 : vector<1x4xf32> to vector<1x1x4xf32>
    %12 = vector.broadcast %11 : vector<1x1x4xf32> to vector<8x16x4xf32>
    %13 = arith.addf %10, %12 : vector<8x16x4xf32>
    %cst = arith.constant 0.000000e+00 : f32
    %14 = vector.broadcast %cst : f32 to vector<8x16x4xf32>
    %15 = arith.maximumf %13, %14 : vector<8x16x4xf32>
    %16 = vector.shape_cast %6 : vector<1x4xf32> to vector<1x1x4xf32>
    %17 = vector.broadcast %16 : vector<1x1x4xf32> to vector<1x16x4xf32>
    %18 = arith.mulf %3, %17 : vector<1x16x4xf32>
    %19 = vector.shape_cast %7 : vector<1x4xf32> to vector<1x1x4xf32>
    %20 = vector.broadcast %19 : vector<1x1x4xf32> to vector<1x16x4xf32>
    %21 = arith.addf %18, %20 : vector<1x16x4xf32>
    %cst_15 = arith.constant 0.000000e+00 : f32
    %22 = vector.broadcast %cst_15 : f32 to vector<1x16x4xf32>
    %23 = arith.maximumf %21, %22 : vector<1x16x4xf32>
    %c0_i32 = arith.constant 0 : i32
    %24 = arith.cmpi sgt, %arg1, %c0_i32 : i32
    %25 = arith.extui %24 : i1 to i32
    %26 = arith.sitofp %25 : i32 to f32
    %27 = vector.broadcast %26 : f32 to vector<1x16x4xf32>
    %28 = arith.mulf %23, %27 : vector<1x16x4xf32>
    %29 = vector.shape_cast %6 : vector<1x4xf32> to vector<1x1x4xf32>
    %30 = vector.broadcast %29 : vector<1x1x4xf32> to vector<1x16x4xf32>
    %31 = arith.mulf %5, %30 : vector<1x16x4xf32>
    %32 = vector.shape_cast %7 : vector<1x4xf32> to vector<1x1x4xf32>
    %33 = vector.broadcast %32 : vector<1x1x4xf32> to vector<1x16x4xf32>
    %34 = arith.addf %31, %33 : vector<1x16x4xf32>
    %cst_16 = arith.constant 0.000000e+00 : f32
    %35 = vector.broadcast %cst_16 : f32 to vector<1x16x4xf32>
    %36 = arith.maximumf %34, %35 : vector<1x16x4xf32>
    %c1_i32 = arith.constant 1 : i32
    %37 = arith.cmpi slt, %arg1, %c1_i32 : i32
    %38 = arith.extui %37 : i1 to i32
    %39 = arith.sitofp %38 : i32 to f32
    %40 = vector.broadcast %39 : f32 to vector<1x16x4xf32>
    %41 = arith.mulf %36, %40 : vector<1x16x4xf32>
    %42 = tpu.concatenate %28, %15, %41 in 0 : vector<1x16x4xf32>, vector<8x16x4xf32>, vector<1x16x4xf32> -> vector<10x16x4xf32>
    %43 = arith.truncf %42 : vector<10x16x4xf32> to vector<10x16x4xbf16>
    %cst_17 = arith.constant 0.000000e+00 : bf16
    %44 = vector.broadcast %cst_17 : bf16 to vector<10x1x4xbf16>
    %45 = vector.extract_strided_slice %43 {offsets = [0, 0, 0], sizes = [10, 15, 4], strides = [1, 1, 1]} : vector<10x16x4xbf16> to vector<10x15x4xbf16>
    %46 = tpu.concatenate %44, %45 in 1 : vector<10x1x4xbf16>, vector<10x15x4xbf16> -> vector<10x16x4xbf16>
    %47 = vector.extract_strided_slice %43 {offsets = [0, 1, 0], sizes = [10, 15, 4], strides = [1, 1, 1]} : vector<10x16x4xbf16> to vector<10x15x4xbf16>
    %48 = tpu.concatenate %47, %44 in 1 : vector<10x15x4xbf16>, vector<10x1x4xbf16> -> vector<10x16x4xbf16>
    %49 = tpu.concatenate %46, %43, %48 in 2 : vector<10x16x4xbf16>, vector<10x16x4xbf16>, vector<10x16x4xbf16> -> vector<10x16x12xbf16>
    %cst_18 = arith.constant 0.000000e+00 : f32
    %50 = vector.broadcast %cst_18 : f32 to vector<128x8xf32>
    %51 = vector.extract_strided_slice %49 {offsets = [0, 0, 0], sizes = [8, 16, 12], strides = [1, 1, 1]} : vector<10x16x12xbf16> to vector<8x16x12xbf16>
    %52 = vector.shape_cast %51 : vector<8x16x12xbf16> to vector<128x12xbf16>
    %c0_19 = arith.constant 0 : index
    %c0_20 = arith.constant 0 : index
    %c0_21 = arith.constant 0 : index
    %53 = vector.load %arg5[%c0_19, %c0_20, %c0_21] : memref<3x12x8xbf16, #tpu.memory_space<vmem>>, vector<1x12x8xbf16>
    %54 = vector.shape_cast %53 : vector<1x12x8xbf16> to vector<12x8xbf16>
    %cst_22 = arith.constant dense<0.000000e+00> : vector<128x8xf32>
    %55 = tpu.matmul %52, %54, %cst_22 {dimension_numbers = #tpu.dot_dimension_numbers<[1], [0], [0], [1], [0, 0, 1, 1], [], []>} : vector<128x12xbf16>, vector<12x8xbf16>, vector<128x8xf32> -> vector<128x8xf32>
    %56 = arith.addf %50, %55 : vector<128x8xf32>
    %57 = vector.extract_strided_slice %49 {offsets = [1, 0, 0], sizes = [8, 16, 12], strides = [1, 1, 1]} : vector<10x16x12xbf16> to vector<8x16x12xbf16>
    %58 = vector.shape_cast %57 : vector<8x16x12xbf16> to vector<128x12xbf16>
    %c1 = arith.constant 1 : index
    %c0_23 = arith.constant 0 : index
    %c0_24 = arith.constant 0 : index
    %59 = vector.load %arg5[%c1, %c0_23, %c0_24] : memref<3x12x8xbf16, #tpu.memory_space<vmem>>, vector<1x12x8xbf16>
    %60 = vector.shape_cast %59 : vector<1x12x8xbf16> to vector<12x8xbf16>
    %cst_25 = arith.constant dense<0.000000e+00> : vector<128x8xf32>
    %61 = tpu.matmul %58, %60, %cst_25 {dimension_numbers = #tpu.dot_dimension_numbers<[1], [0], [0], [1], [0, 0, 1, 1], [], []>} : vector<128x12xbf16>, vector<12x8xbf16>, vector<128x8xf32> -> vector<128x8xf32>
    %62 = arith.addf %56, %61 : vector<128x8xf32>
    %63 = vector.extract_strided_slice %49 {offsets = [2, 0, 0], sizes = [8, 16, 12], strides = [1, 1, 1]} : vector<10x16x12xbf16> to vector<8x16x12xbf16>
    %64 = vector.shape_cast %63 : vector<8x16x12xbf16> to vector<128x12xbf16>
    %c2 = arith.constant 2 : index
    %c0_26 = arith.constant 0 : index
    %c0_27 = arith.constant 0 : index
    %65 = vector.load %arg5[%c2, %c0_26, %c0_27] : memref<3x12x8xbf16, #tpu.memory_space<vmem>>, vector<1x12x8xbf16>
    %66 = vector.shape_cast %65 : vector<1x12x8xbf16> to vector<12x8xbf16>
    %cst_28 = arith.constant dense<0.000000e+00> : vector<128x8xf32>
    %67 = tpu.matmul %64, %66, %cst_28 {dimension_numbers = #tpu.dot_dimension_numbers<[1], [0], [0], [1], [0, 0, 1, 1], [], []>} : vector<128x12xbf16>, vector<12x8xbf16>, vector<128x8xf32> -> vector<128x8xf32>
    %68 = arith.addf %62, %67 : vector<128x8xf32>
    %cst_29 = arith.constant dense<0.000000e+00> : vector<8xf32>
    %69 = vector.multi_reduction <add>, %68, %cst_29 [0] : vector<128x8xf32> to vector<8xf32>
    %70 = vector.shape_cast %69 : vector<8xf32> to vector<1x8xf32>
    %71 = arith.mulf %68, %68 : vector<128x8xf32>
    %cst_30 = arith.constant dense<0.000000e+00> : vector<8xf32>
    %72 = vector.multi_reduction <add>, %71, %cst_30 [0] : vector<128x8xf32> to vector<8xf32>
    %73 = vector.shape_cast %72 : vector<8xf32> to vector<1x8xf32>
    %74 = tpu.concatenate %70, %73 in 0 : vector<1x8xf32>, vector<1x8xf32> -> vector<2x8xf32>
    %c0_31 = arith.constant 0 : index
    %c0_32 = arith.constant 0 : index
    %c0_33 = arith.constant 0 : index
    %c0_34 = arith.constant 0 : index
    %75 = vector.load %arg9[%c0_31, %c0_32, %c0_33, %c0_34] : memref<1x1x2x8xf32, #tpu.memory_space<vmem>>, vector<1x1x2x8xf32>
    %76 = vector.shape_cast %75 : vector<1x1x2x8xf32> to vector<2x8xf32>
    %77 = vector.shape_cast %74 : vector<2x8xf32> to vector<1x1x2x8xf32>
    tpu.vector_store %arg9[%c0_31, %c0_32, %c0_33, %c0_34], %77 {strides = array<i32>} : memref<1x1x2x8xf32, #tpu.memory_space<vmem>>, vector<1x1x2x8xf32>,
    %78 = vector.shape_cast %68 : vector<128x8xf32> to vector<8x16x8xf32>
    %79 = arith.truncf %78 : vector<8x16x8xf32> to vector<8x16x8xbf16>
    %c0_35 = arith.constant 0 : index
    %c0_36 = arith.constant 0 : index
    %c0_37 = arith.constant 0 : index
    %c0_38 = arith.constant 0 : index
    %80 = vector.load %arg8[%c0_35, %c0_36, %c0_37, %c0_38] : memref<1x8x16x8xbf16, #tpu.memory_space<vmem>>, vector<1x8x16x8xbf16>
    %81 = vector.shape_cast %80 : vector<1x8x16x8xbf16> to vector<8x16x8xbf16>
    %82 = vector.shape_cast %79 : vector<8x16x8xbf16> to vector<1x8x16x8xbf16>
    tpu.vector_store %arg8[%c0_35, %c0_36, %c0_37, %c0_38], %82 {strides = array<i32>} : memref<1x8x16x8xbf16, #tpu.memory_space<vmem>>, vector<1x8x16x8xbf16>,
    return
  }
  func.func @transform_0(%arg0: i32, %arg1: i32) -> (i32, i32, i32, i32) {
    %c0_i32 = arith.constant 0 : i32
    %c0_i32_0 = arith.constant 0 : i32
    %c0_i32_1 = arith.constant 0 : i32
    return %arg0, %arg1, %c0_i32, %c0_i32_0 : i32, i32, i32, i32
  }
  func.func @transform_1(%arg0: i32, %arg1: i32) -> (i32, i32, i32, i32) {
    %c8_i32 = arith.constant 8 : i32
    %0 = arith.muli %arg1, %c8_i32 : i32
    %c1_i32 = arith.constant 1 : i32
    %1 = arith.subi %0, %c1_i32 : i32
    %c0_i32 = arith.constant 0 : i32
    %2 = arith.maxsi %1, %c0_i32 : i32
    %c0_i32_0 = arith.constant 0 : i32
    %c0_i32_1 = arith.constant 0 : i32
    %c0_i32_2 = arith.constant 0 : i32
    return %arg0, %2, %c0_i32_0, %c0_i32_1 : i32, i32, i32, i32
  }
  func.func @transform_2(%arg0: i32, %arg1: i32) -> (i32, i32, i32, i32) {
    %c1_i32 = arith.constant 1 : i32
    %0 = arith.addi %arg1, %c1_i32 : i32
    %c8_i32 = arith.constant 8 : i32
    %1 = arith.muli %0, %c8_i32 : i32
    %c15_i32 = arith.constant 15 : i32
    %2 = arith.minsi %1, %c15_i32 : i32
    %c0_i32 = arith.constant 0 : i32
    %c0_i32_0 = arith.constant 0 : i32
    %c0_i32_1 = arith.constant 0 : i32
    return %arg0, %2, %c0_i32, %c0_i32_0 : i32, i32, i32, i32
  }
  func.func @transform_3(%arg0: i32, %arg1: i32) -> (i32, i32, i32) {
    %c0_i32 = arith.constant 0 : i32
    %c0_i32_0 = arith.constant 0 : i32
    %c0_i32_1 = arith.constant 0 : i32
    %c0_i32_2 = arith.constant 0 : i32
    return %c0_i32, %c0_i32_0, %c0_i32_1 : i32, i32, i32
  }
  func.func @transform_4(%arg0: i32, %arg1: i32) -> (i32, i32) {
    %c0_i32 = arith.constant 0 : i32
    %c0_i32_0 = arith.constant 0 : i32
    %c0_i32_1 = arith.constant 0 : i32
    return %c0_i32, %c0_i32_0 : i32, i32
  }
  func.func @transform_5(%arg0: i32, %arg1: i32) -> (i32, i32) {
    %c0_i32 = arith.constant 0 : i32
    %c0_i32_0 = arith.constant 0 : i32
    %c0_i32_1 = arith.constant 0 : i32
    return %c0_i32, %c0_i32_0 : i32, i32
  }
  func.func @transform_6(%arg0: i32, %arg1: i32) -> (i32, i32, i32, i32) {
    %c0_i32 = arith.constant 0 : i32
    %c0_i32_0 = arith.constant 0 : i32
    %c0_i32_1 = arith.constant 0 : i32
    return %arg0, %arg1, %c0_i32, %c0_i32_0 : i32, i32, i32, i32
  }
  func.func @transform_7(%arg0: i32, %arg1: i32) -> (i32, i32, i32, i32) {
    %c0_i32 = arith.constant 0 : i32
    %c0_i32_0 = arith.constant 0 : i32
    %c0_i32_1 = arith.constant 0 : i32
    return %arg0, %arg1, %c0_i32, %c0_i32_0 : i32, i32, i32, i32
  }
}

module attributes {stable_mosaic.version = 11 : i64} {
  func.func @kernel(%arg0: i32, %arg1: i32, %arg2: memref<1x8x16x8xbf16, #tpu.memory_space<vmem>>, %arg3: memref<1x1x16x8xbf16, #tpu.memory_space<vmem>>, %arg4: memref<1x1x16x8xbf16, #tpu.memory_space<vmem>>, %arg5: memref<3x24x8xbf16, #tpu.memory_space<vmem>>, %arg6: memref<1x8xf32, #tpu.memory_space<vmem>>, %arg7: memref<1x8xf32, #tpu.memory_space<vmem>>, %arg8: memref<1x8x16x4xf32, #tpu.memory_space<vmem>>, %arg9: memref<4x8xbf16, #tpu.memory_space<vmem>>, %arg10: memref<1x8x16x8xf32, #tpu.memory_space<vmem>>) attributes {dimension_semantics = [#tpu.dimension_semantics<parallel>, #tpu.dimension_semantics<parallel>], iteration_bounds = array<i64: 2, 2>, scalar_prefetch = 0 : i64, scratch_operands = 0 : i64, tpu.core_type = #tpu.core_type<tc>, window_params = [{transform_indices = @transform_0, window_bounds = array<i64: 1, 8, 16, 8>}, {transform_indices = @transform_1, window_bounds = array<i64: 1, 1, 16, 8>}, {transform_indices = @transform_2, window_bounds = array<i64: 1, 1, 16, 8>}, {pipeline_mode = #tpu.pipeline_mode<synchronous>, transform_indices = @transform_3, window_bounds = array<i64: 3, 24, 8>}, {pipeline_mode = #tpu.pipeline_mode<synchronous>, transform_indices = @transform_4, window_bounds = array<i64: 1, 8>}, {pipeline_mode = #tpu.pipeline_mode<synchronous>, transform_indices = @transform_5, window_bounds = array<i64: 1, 8>}, {transform_indices = @transform_6, window_bounds = array<i64: 1, 8, 16, 4>}, {pipeline_mode = #tpu.pipeline_mode<synchronous>, transform_indices = @transform_7, window_bounds = array<i64: 4, 8>}, {transform_indices = @transform_8, window_bounds = array<i64: 1, 8, 16, 8>}]} {
    %c0 = arith.constant 0 : index
    %c0_0 = arith.constant 0 : index
    %c0_1 = arith.constant 0 : index
    %c0_2 = arith.constant 0 : index
    %0 = vector.load %arg2[%c0, %c0_0, %c0_1, %c0_2] : memref<1x8x16x8xbf16, #tpu.memory_space<vmem>>, vector<1x8x16x8xbf16>
    %1 = vector.shape_cast %0 : vector<1x8x16x8xbf16> to vector<8x16x8xbf16>
    %c0_3 = arith.constant 0 : index
    %c0_4 = arith.constant 0 : index
    %c0_5 = arith.constant 0 : index
    %c0_6 = arith.constant 0 : index
    %2 = vector.load %arg3[%c0_3, %c0_4, %c0_5, %c0_6] : memref<1x1x16x8xbf16, #tpu.memory_space<vmem>>, vector<1x1x16x8xbf16>
    %3 = vector.shape_cast %2 : vector<1x1x16x8xbf16> to vector<1x16x8xbf16>
    %c0_7 = arith.constant 0 : index
    %c0_8 = arith.constant 0 : index
    %c0_9 = arith.constant 0 : index
    %c0_10 = arith.constant 0 : index
    %4 = vector.load %arg4[%c0_7, %c0_8, %c0_9, %c0_10] : memref<1x1x16x8xbf16, #tpu.memory_space<vmem>>, vector<1x1x16x8xbf16>
    %5 = vector.shape_cast %4 : vector<1x1x16x8xbf16> to vector<1x16x8xbf16>
    %c0_11 = arith.constant 0 : index
    %c0_12 = arith.constant 0 : index
    %6 = vector.load %arg6[%c0_11, %c0_12] : memref<1x8xf32, #tpu.memory_space<vmem>>, vector<1x8xf32>
    %c0_13 = arith.constant 0 : index
    %c0_14 = arith.constant 0 : index
    %7 = vector.load %arg7[%c0_13, %c0_14] : memref<1x8xf32, #tpu.memory_space<vmem>>, vector<1x8xf32>
    %8 = arith.extf %1 : vector<8x16x8xbf16> to vector<8x16x8xf32>
    %9 = vector.shape_cast %6 : vector<1x8xf32> to vector<1x1x8xf32>
    %10 = vector.broadcast %9 : vector<1x1x8xf32> to vector<8x16x8xf32>
    %11 = arith.mulf %8, %10 : vector<8x16x8xf32>
    %12 = vector.shape_cast %7 : vector<1x8xf32> to vector<1x1x8xf32>
    %13 = vector.broadcast %12 : vector<1x1x8xf32> to vector<8x16x8xf32>
    %14 = arith.addf %11, %13 : vector<8x16x8xf32>
    %cst = arith.constant 0.000000e+00 : f32
    %15 = vector.broadcast %cst : f32 to vector<8x16x8xf32>
    %16 = arith.maximumf %14, %15 : vector<8x16x8xf32>
    %17 = arith.extf %3 : vector<1x16x8xbf16> to vector<1x16x8xf32>
    %18 = vector.shape_cast %6 : vector<1x8xf32> to vector<1x1x8xf32>
    %19 = vector.broadcast %18 : vector<1x1x8xf32> to vector<1x16x8xf32>
    %20 = arith.mulf %17, %19 : vector<1x16x8xf32>
    %21 = vector.shape_cast %7 : vector<1x8xf32> to vector<1x1x8xf32>
    %22 = vector.broadcast %21 : vector<1x1x8xf32> to vector<1x16x8xf32>
    %23 = arith.addf %20, %22 : vector<1x16x8xf32>
    %cst_15 = arith.constant 0.000000e+00 : f32
    %24 = vector.broadcast %cst_15 : f32 to vector<1x16x8xf32>
    %25 = arith.maximumf %23, %24 : vector<1x16x8xf32>
    %c0_i32 = arith.constant 0 : i32
    %26 = arith.cmpi sgt, %arg1, %c0_i32 : i32
    %27 = arith.extui %26 : i1 to i32
    %28 = arith.sitofp %27 : i32 to f32
    %29 = vector.broadcast %28 : f32 to vector<1x16x8xf32>
    %30 = arith.mulf %25, %29 : vector<1x16x8xf32>
    %31 = arith.extf %5 : vector<1x16x8xbf16> to vector<1x16x8xf32>
    %32 = vector.shape_cast %6 : vector<1x8xf32> to vector<1x1x8xf32>
    %33 = vector.broadcast %32 : vector<1x1x8xf32> to vector<1x16x8xf32>
    %34 = arith.mulf %31, %33 : vector<1x16x8xf32>
    %35 = vector.shape_cast %7 : vector<1x8xf32> to vector<1x1x8xf32>
    %36 = vector.broadcast %35 : vector<1x1x8xf32> to vector<1x16x8xf32>
    %37 = arith.addf %34, %36 : vector<1x16x8xf32>
    %cst_16 = arith.constant 0.000000e+00 : f32
    %38 = vector.broadcast %cst_16 : f32 to vector<1x16x8xf32>
    %39 = arith.maximumf %37, %38 : vector<1x16x8xf32>
    %c1_i32 = arith.constant 1 : i32
    %40 = arith.cmpi slt, %arg1, %c1_i32 : i32
    %41 = arith.extui %40 : i1 to i32
    %42 = arith.sitofp %41 : i32 to f32
    %43 = vector.broadcast %42 : f32 to vector<1x16x8xf32>
    %44 = arith.mulf %39, %43 : vector<1x16x8xf32>
    %45 = tpu.concatenate %30, %16, %44 in 0 : vector<1x16x8xf32>, vector<8x16x8xf32>, vector<1x16x8xf32> -> vector<10x16x8xf32>
    %46 = arith.truncf %45 : vector<10x16x8xf32> to vector<10x16x8xbf16>
    %cst_17 = arith.constant 0.000000e+00 : bf16
    %47 = vector.broadcast %cst_17 : bf16 to vector<10x1x8xbf16>
    %48 = vector.extract_strided_slice %46 {offsets = [0, 0, 0], sizes = [10, 15, 8], strides = [1, 1, 1]} : vector<10x16x8xbf16> to vector<10x15x8xbf16>
    %49 = tpu.concatenate %47, %48 in 1 : vector<10x1x8xbf16>, vector<10x15x8xbf16> -> vector<10x16x8xbf16>
    %50 = vector.extract_strided_slice %46 {offsets = [0, 1, 0], sizes = [10, 15, 8], strides = [1, 1, 1]} : vector<10x16x8xbf16> to vector<10x15x8xbf16>
    %51 = tpu.concatenate %50, %47 in 1 : vector<10x15x8xbf16>, vector<10x1x8xbf16> -> vector<10x16x8xbf16>
    %52 = tpu.concatenate %49, %46, %51 in 2 : vector<10x16x8xbf16>, vector<10x16x8xbf16>, vector<10x16x8xbf16> -> vector<10x16x24xbf16>
    %cst_18 = arith.constant 0.000000e+00 : f32
    %53 = vector.broadcast %cst_18 : f32 to vector<128x8xf32>
    %54 = vector.extract_strided_slice %52 {offsets = [0, 0, 0], sizes = [8, 16, 24], strides = [1, 1, 1]} : vector<10x16x24xbf16> to vector<8x16x24xbf16>
    %55 = vector.shape_cast %54 : vector<8x16x24xbf16> to vector<128x24xbf16>
    %c0_19 = arith.constant 0 : index
    %c0_20 = arith.constant 0 : index
    %c0_21 = arith.constant 0 : index
    %56 = vector.load %arg5[%c0_19, %c0_20, %c0_21] : memref<3x24x8xbf16, #tpu.memory_space<vmem>>, vector<1x24x8xbf16>
    %57 = vector.shape_cast %56 : vector<1x24x8xbf16> to vector<24x8xbf16>
    %cst_22 = arith.constant dense<0.000000e+00> : vector<128x8xf32>
    %58 = tpu.matmul %55, %57, %cst_22 {dimension_numbers = #tpu.dot_dimension_numbers<[1], [0], [0], [1], [0, 0, 1, 1], [], []>} : vector<128x24xbf16>, vector<24x8xbf16>, vector<128x8xf32> -> vector<128x8xf32>
    %59 = arith.addf %53, %58 : vector<128x8xf32>
    %60 = vector.extract_strided_slice %52 {offsets = [1, 0, 0], sizes = [8, 16, 24], strides = [1, 1, 1]} : vector<10x16x24xbf16> to vector<8x16x24xbf16>
    %61 = vector.shape_cast %60 : vector<8x16x24xbf16> to vector<128x24xbf16>
    %c1 = arith.constant 1 : index
    %c0_23 = arith.constant 0 : index
    %c0_24 = arith.constant 0 : index
    %62 = vector.load %arg5[%c1, %c0_23, %c0_24] : memref<3x24x8xbf16, #tpu.memory_space<vmem>>, vector<1x24x8xbf16>
    %63 = vector.shape_cast %62 : vector<1x24x8xbf16> to vector<24x8xbf16>
    %cst_25 = arith.constant dense<0.000000e+00> : vector<128x8xf32>
    %64 = tpu.matmul %61, %63, %cst_25 {dimension_numbers = #tpu.dot_dimension_numbers<[1], [0], [0], [1], [0, 0, 1, 1], [], []>} : vector<128x24xbf16>, vector<24x8xbf16>, vector<128x8xf32> -> vector<128x8xf32>
    %65 = arith.addf %59, %64 : vector<128x8xf32>
    %66 = vector.extract_strided_slice %52 {offsets = [2, 0, 0], sizes = [8, 16, 24], strides = [1, 1, 1]} : vector<10x16x24xbf16> to vector<8x16x24xbf16>
    %67 = vector.shape_cast %66 : vector<8x16x24xbf16> to vector<128x24xbf16>
    %c2 = arith.constant 2 : index
    %c0_26 = arith.constant 0 : index
    %c0_27 = arith.constant 0 : index
    %68 = vector.load %arg5[%c2, %c0_26, %c0_27] : memref<3x24x8xbf16, #tpu.memory_space<vmem>>, vector<1x24x8xbf16>
    %69 = vector.shape_cast %68 : vector<1x24x8xbf16> to vector<24x8xbf16>
    %cst_28 = arith.constant dense<0.000000e+00> : vector<128x8xf32>
    %70 = tpu.matmul %67, %69, %cst_28 {dimension_numbers = #tpu.dot_dimension_numbers<[1], [0], [0], [1], [0, 0, 1, 1], [], []>} : vector<128x24xbf16>, vector<24x8xbf16>, vector<128x8xf32> -> vector<128x8xf32>
    %71 = arith.addf %65, %70 : vector<128x8xf32>
    %c0_29 = arith.constant 0 : index
    %c0_30 = arith.constant 0 : index
    %c0_31 = arith.constant 0 : index
    %c0_32 = arith.constant 0 : index
    %72 = vector.load %arg8[%c0_29, %c0_30, %c0_31, %c0_32] : memref<1x8x16x4xf32, #tpu.memory_space<vmem>>, vector<1x8x16x4xf32>
    %73 = vector.shape_cast %72 : vector<1x8x16x4xf32> to vector<8x16x4xf32>
    %74 = vector.shape_cast %73 : vector<8x16x4xf32> to vector<128x4xf32>
    %75 = arith.truncf %74 : vector<128x4xf32> to vector<128x4xbf16>
    %c0_33 = arith.constant 0 : index
    %c0_34 = arith.constant 0 : index
    %76 = vector.load %arg9[%c0_33, %c0_34] : memref<4x8xbf16, #tpu.memory_space<vmem>>, vector<4x8xbf16>
    %cst_35 = arith.constant dense<0.000000e+00> : vector<128x8xf32>
    %77 = tpu.matmul %75, %76, %cst_35 {dimension_numbers = #tpu.dot_dimension_numbers<[1], [0], [0], [1], [0, 0, 1, 1], [], []>} : vector<128x4xbf16>, vector<4x8xbf16>, vector<128x8xf32> -> vector<128x8xf32>
    %78 = arith.addf %71, %77 : vector<128x8xf32>
    %79 = vector.shape_cast %78 : vector<128x8xf32> to vector<8x16x8xf32>
    %c0_36 = arith.constant 0 : index
    %c0_37 = arith.constant 0 : index
    %c0_38 = arith.constant 0 : index
    %c0_39 = arith.constant 0 : index
    %80 = vector.load %arg10[%c0_36, %c0_37, %c0_38, %c0_39] : memref<1x8x16x8xf32, #tpu.memory_space<vmem>>, vector<1x8x16x8xf32>
    %81 = vector.shape_cast %80 : vector<1x8x16x8xf32> to vector<8x16x8xf32>
    %82 = vector.shape_cast %79 : vector<8x16x8xf32> to vector<1x8x16x8xf32>
    tpu.vector_store %arg10[%c0_36, %c0_37, %c0_38, %c0_39], %82 {strides = array<i32>} : memref<1x8x16x8xf32, #tpu.memory_space<vmem>>, vector<1x8x16x8xf32>,
    return
  }
  func.func @transform_0(%arg0: i32, %arg1: i32) -> (i32, i32, i32, i32) {
    %c0_i32 = arith.constant 0 : i32
    %c0_i32_0 = arith.constant 0 : i32
    %c0_i32_1 = arith.constant 0 : i32
    return %arg0, %arg1, %c0_i32, %c0_i32_0 : i32, i32, i32, i32
  }
  func.func @transform_1(%arg0: i32, %arg1: i32) -> (i32, i32, i32, i32) {
    %c8_i32 = arith.constant 8 : i32
    %0 = arith.muli %arg1, %c8_i32 : i32
    %c1_i32 = arith.constant 1 : i32
    %1 = arith.subi %0, %c1_i32 : i32
    %c0_i32 = arith.constant 0 : i32
    %2 = arith.maxsi %1, %c0_i32 : i32
    %c0_i32_0 = arith.constant 0 : i32
    %c0_i32_1 = arith.constant 0 : i32
    %c0_i32_2 = arith.constant 0 : i32
    return %arg0, %2, %c0_i32_0, %c0_i32_1 : i32, i32, i32, i32
  }
  func.func @transform_2(%arg0: i32, %arg1: i32) -> (i32, i32, i32, i32) {
    %c1_i32 = arith.constant 1 : i32
    %0 = arith.addi %arg1, %c1_i32 : i32
    %c8_i32 = arith.constant 8 : i32
    %1 = arith.muli %0, %c8_i32 : i32
    %c15_i32 = arith.constant 15 : i32
    %2 = arith.minsi %1, %c15_i32 : i32
    %c0_i32 = arith.constant 0 : i32
    %c0_i32_0 = arith.constant 0 : i32
    %c0_i32_1 = arith.constant 0 : i32
    return %arg0, %2, %c0_i32, %c0_i32_0 : i32, i32, i32, i32
  }
  func.func @transform_3(%arg0: i32, %arg1: i32) -> (i32, i32, i32) {
    %c0_i32 = arith.constant 0 : i32
    %c0_i32_0 = arith.constant 0 : i32
    %c0_i32_1 = arith.constant 0 : i32
    %c0_i32_2 = arith.constant 0 : i32
    return %c0_i32, %c0_i32_0, %c0_i32_1 : i32, i32, i32
  }
  func.func @transform_4(%arg0: i32, %arg1: i32) -> (i32, i32) {
    %c0_i32 = arith.constant 0 : i32
    %c0_i32_0 = arith.constant 0 : i32
    %c0_i32_1 = arith.constant 0 : i32
    return %c0_i32, %c0_i32_0 : i32, i32
  }
  func.func @transform_5(%arg0: i32, %arg1: i32) -> (i32, i32) {
    %c0_i32 = arith.constant 0 : i32
    %c0_i32_0 = arith.constant 0 : i32
    %c0_i32_1 = arith.constant 0 : i32
    return %c0_i32, %c0_i32_0 : i32, i32
  }
  func.func @transform_6(%arg0: i32, %arg1: i32) -> (i32, i32, i32, i32) {
    %c0_i32 = arith.constant 0 : i32
    %c0_i32_0 = arith.constant 0 : i32
    %c0_i32_1 = arith.constant 0 : i32
    return %arg0, %arg1, %c0_i32, %c0_i32_0 : i32, i32, i32, i32
  }
  func.func @transform_7(%arg0: i32, %arg1: i32) -> (i32, i32) {
    %c0_i32 = arith.constant 0 : i32
    %c0_i32_0 = arith.constant 0 : i32
    %c0_i32_1 = arith.constant 0 : i32
    return %c0_i32, %c0_i32_0 : i32, i32
  }
  func.func @transform_8(%arg0: i32, %arg1: i32) -> (i32, i32, i32, i32) {
    %c0_i32 = arith.constant 0 : i32
    %c0_i32_0 = arith.constant 0 : i32
    %c0_i32_1 = arith.constant 0 : i32
    return %arg0, %arg1, %c0_i32, %c0_i32_0 : i32, i32, i32, i32
  }
}

</mosaic_0001>

<llo_original>
// kernel: residual_block_forward.3
$region0: #{residual_block_forward.3}
  #allocation0 [shape = 'u32[]', space=smem, size = 0x4, offset = 0x4, fixed_abs, tag = 'smem constant byte address 0x4 - core index']
  #allocation1 [shape = 'u32[144,128]{1,0:T(1,128)}', space=vmem, size = 0x12000, scoped, tag = 'internal scratch']
  %s0 = inlined_call_operand.vmem [shape: f32[2,16,16,4], index: 0, kind: input, shape index: {}]
  %s1 = inlined_call_operand.vmem [shape: f32[2,2,2,4], index: 1, kind: output, shape index: {}]
  %s2 = sld [smem:[#allocation0]]
  $region37: #{residual_block_forward.3} parent=0
    _
  %s4 = ssub.s32 1, %s2
  %s5 = scalar_select 0, %s4, %s2
  loop: start=0, step=1, limit=6
  $region2: #{residual_block_forward.3} parent=0 // loop_pre_header
    _
  $region3: #{residual_block_forward.3} parent=0 // loop_header
    %s7 = sphi 0, %s11
    %p8 = scmp.ge.s32.totalorder %s7, 6
    %s14 = sphi 0, %s26
    %s15 = sphi 0, %s22
    %s16 = sphi 0, %s14
    %s17 = sphi 0, %s15
    %s18 = sphi 0, %s16
    %s19 = sphi 0, %s17
    %s31 = sphi 0, %s33
    %s34 = sphi 0, %s31
    %s35 = sphi 0, %s34
    %s51 = sphi 0, %s35
    %s59 = sphi 0, %s61
    %s62 = sphi 0, %s59
    %s63 = sphi 0, %s62
    %s79 = sphi 0, %s63
  $region4: #{residual_block_forward.3} parent=0 // loop_header_branch
    %10 = sbr.rel (%p8) target = $region8
  $region5: #{residual_block_forward.3} parent=0 // loop_body
    %s12 = ssub.s32 %s7, 1
    %s13 = ssub.s32 %s7, 2
    %s20 = sadd.s32 1, %s15
    %p21 = scmp.ge.s32.totalorder %s20, 2
    %s22 = scalar_select %p21, 0, %s20
    %s23 = sadd.s32 1, %s14
    %s24 = scalar_select %p21, %s23, %s14
    %p25 = scmp.ge.s32.totalorder %s24, 2
    %s26 = scalar_select %p25, 0, %s24
    %s27 = ssub.s32 %s14, %s26
    %s28 = ssub.s32 %s15, %s22
    %s29 = sor.u32 %s27, %s28
    %p30 = scmp.eq.s32.totalorder %s29, 0
    %s32 = sadd.s32 %s31, 1
    %s33 = scalar_select %p30, %s31, %s32
    %p36 = pneg %p30
    %p37 = scmp.eq.s32.totalorder %s7, 3
    %p38 = por %p36, %p37
    %p39 = scmp.ne.s32.totalorder %s31, %s34
    %p40 = scmp.eq.s32.totalorder %s7, 0
    %p41 = por %p39, %p40
    %p42 = scmp.ne.s32.totalorder %s31, %s34
    %p43 = scmp.eq.s32.totalorder %s12, 3
    %p44 = por %p42, %p43
    %p45 = scmp.ne.s32.totalorder %s34, %s35
    %p46 = scmp.eq.s32.totalorder %s12, 0
    %p47 = por %p45, %p46
    %p48 = scmp.ne.s32.totalorder %s34, %s35
    %p49 = scmp.eq.s32.totalorder %s13, 3
    %p50 = por %p48, %p49
    %p52 = scmp.ne.s32.totalorder %s35, %s51
    %p53 = scmp.eq.s32.totalorder %s13, 0
    %p54 = por %p52, %p53
    %s55 = ssub.s32 %s14, %s26
    %s56 = ssub.s32 %s15, %s22
    %s57 = sor.u32 %s55, %s56
    %p58 = scmp.eq.s32.totalorder %s57, 0
    %s60 = sadd.s32 %s59, 1
    %s61 = scalar_select %p58, %s59, %s60
    %p64 = pneg %p58
    %p65 = scmp.eq.s32.totalorder %s7, 3
    %p66 = por %p64, %p65
    %p67 = scmp.ne.s32.totalorder %s59, %s62
    %p68 = scmp.eq.s32.totalorder %s7, 0
    %p69 = por %p67, %p68
    %p70 = scmp.ne.s32.totalorder %s59, %s62
    %p71 = scmp.eq.s32.totalorder %s12, 3
    %p72 = por %p70, %p71
    %p73 = scmp.ne.s32.totalorder %s62, %s63
    %p74 = scmp.eq.s32.totalorder %s12, 0
    %p75 = por %p73, %p74
    %p76 = scmp.ne.s32.totalorder %s62, %s63
    %p77 = scmp.eq.s32.totalorder %s13, 3
    %p78 = por %p76, %p77
    %p80 = scmp.ne.s32.totalorder %s63, %s79
    %p81 = scmp.eq.s32.totalorder %s13, 0
    %p82 = por %p80, %p81
    %p83 = scmp.le.s32.totalorder 1, %s7
    %p84 = scmp.lt.s32.totalorder %s7, 5
    %p85 = pnand %p83, %p84
    %p86 = pneg %p85
    // Predicated region
    $region9: #{residual_block_forward.3} parent=5 // pred_check
      _
    $region10: #{residual_block_forward.3} parent=5 // pred_check_branch
      %88 = sbr.rel (%p85) target = $region12
    $region11: #{residual_block_forward.3} parent=5 // pred_region
      %s89 = ssub.s32 %s7, 1
    $region12: #{residual_block_forward.3} parent=5 // pred_fallthru
      _
    %p90 = scmp.lt.s32.totalorder %s7, 4
    // Predicated region
    $region13: #{residual_block_forward.3} parent=5 // pred_check
      %p91 = pneg %p90
    $region14: #{residual_block_forward.3} parent=5 // pred_check_branch
      %93 = sbr.rel (%p91) target = $region16
    $region15: #{residual_block_forward.3} parent=5 // pred_region
      // Predicated region
      $region17: #{residual_block_forward.3} parent=15 // pred_check
        %p94 = pneg %p41
      $region18: #{residual_block_forward.3} parent=15 // pred_check_branch
        %96 = sbr.rel (%p94) target = $region20
      $region19: #{residual_block_forward.3} parent=15 // pred_region
        %s97 = smul.u32 8, %s15
        %p98 = scmp.lt.s32.totalorder %s14, 1
        %s99 = scalar_select %p98, %s14, 1
        %p100 = scmp.lt.s32.totalorder %s97, 15
        %s101 = scalar_select %p100, %s97, 15
        %s102 = smul.addr %s101, 2
        %s103 = smul.addr %s99, 32
        %s104 = sadd.s32 %s102, %s103
        %s105 = smul.addr %s104, 8
        %s106 = scalar_lea.vmem %s0, %s105
        %s107 = smul.u32 8, %s15
      $region20: #{residual_block_forward.3} parent=15 // pred_fallthru
        _
    $region16: #{residual_block_forward.3} parent=5 // pred_fallthru
      _
    %p108 = scmp.le.s32.totalorder 1, %s7
    %p109 = scmp.lt.s32.totalorder %s7, 5
    %p110 = pnand %p108, %p109
    %p111 = pneg %p110
    // Predicated region
    $region21: #{residual_block_forward.3} parent=5 // pred_check
      _
    $region22: #{residual_block_forward.3} parent=5 // pred_check_branch
      %113 = sbr.rel (%p110) target = $region24
    $region23: #{residual_block_forward.3} parent=5 // pred_region
      %s114 = ssub.s32 %s7, 1
      %s115 = smul.u32 8, %s17
      %p116 = scmp.lt.s32.totalorder %s16, 1
      %s117 = scalar_select %p116, %s16, 1
      %p118 = scmp.lt.s32.totalorder %s115, 15
      %s119 = scalar_select %p118, %s115, 15
      %s120 = smul.addr %s119, 2
      %s121 = smul.addr %s117, 32
      %s122 = sadd.s32 %s120, %s121
      %s123 = smul.addr %s122, 8
      %s124 = scalar_lea.vmem %s0, %s123
      %p125 = pneg %p47
      %p126 = pneg %p44
      %p127 = pneg %p75
      %p128 = pneg %p72
      %p129 = scmp.lt.s32.totalorder %s16, 1
      %s130 = scalar_select %p129, %s16, 1
      %p131 = scmp.lt.s32.totalorder %s17, 1
      %s132 = scalar_select %p131, %s17, 1
      %s133 = smul.addr %s130, 2
      %s134 = sadd.s32 %s132, %s133
      %s135 = smul.addr %s134, 2
      %s136 = scalar_lea.vmem %s1, %s135
      %s137 = smul.u32 8, %s17
      %p138 = scmp.lt.s32.totalorder %s16, 1
      %s139 = scalar_select %p138, %s16, 1
      %p140 = scmp.lt.s32.totalorder %s137, 15
      %s141 = scalar_select %p140, %s137, 15
      %s142 = smul.addr %s141, 2
      %s143 = smul.addr %s139, 32
      %s144 = sadd.s32 %s142, %s143
      %s145 = smul.addr %s144, 8
      %s146 = scalar_lea.vmem %s0, %s145
      %s147 = smul.u32 8, %s17
      %p148 = scmp.lt.s32.totalorder %s16, 1
      %s149 = scalar_select %p148, %s16, 1
      %p150 = scmp.lt.s32.totalorder %s17, 1
      %s151 = scalar_select %p150, %s17, 1
      %s152 = smul.addr %s149, 2
      %s153 = sadd.s32 %s151, %s152
      %s154 = smul.addr %s153, 2
      %s155 = scalar_lea.vmem %s1, %s154
      %v156 = vld [vmem:[%s146] sm:$0xff]
      %v157 = vld [vmem:[%s146 + $0x8] sm:$0xff]
      %v158 = vld [vmem:[%s146 + $0x10] sm:$0xff]
      %v159 = vld [vmem:[%s146 + $0x18] sm:$0xff]
      %v160 = vld [vmem:[%s146 + $0x20] sm:$0xff]
      %v161 = vld [vmem:[%s146 + $0x28] sm:$0xff]
      %v162 = vld [vmem:[%s146 + $0x30] sm:$0xff]
      %v163 = vld [vmem:[%s146 + $0x38] sm:$0xff]
      %v164 = vld [vmem:[%s146 + $0x40] sm:$0xff]
      %v165 = vld [vmem:[%s146 + $0x48] sm:$0xff]
      %v166 = vld [vmem:[%s146 + $0x50] sm:$0xff]
      %v167 = vld [vmem:[%s146 + $0x58] sm:$0xff]
      %v168 = vld [vmem:[%s146 + $0x60] sm:$0xff]
      %v169 = vld [vmem:[%s146 + $0x68] sm:$0xff]
      %v170 = vld [vmem:[%s146 + $0x70] sm:$0xff]
      %v171 = vld [vmem:[%s146 + $0x78] sm:$0xff]
      %vm172 = vcmask 31744
      %v173 = vsel %vm172, %v156, 0.0
      %v174 = vsel %vm172, %v157, 0.0
      %v175 = vadd.f32 %v173, %v174
      %v176 = vsel %vm172, %v158, 0.0
      %v177 = vadd.f32 %v175, %v176
      %v178 = vsel %vm172, %v159, 0.0
      %v179 = vadd.f32 %v177, %v178
      %v180 = vsel %vm172, %v160, 0.0
      %v181 = vadd.f32 %v179, %v180
      %v182 = vsel %vm172, %v161, 0.0
      %v183 = vadd.f32 %v181, %v182
      %v184 = vsel %vm172, %v162, 0.0
      %v185 = vadd.f32 %v183, %v184
      %v186 = vsel %vm172, %v163, 0.0
      %v187 = vadd.f32 %v185, %v186
      %v188 = vsel %vm172, %v164, 0.0
      %v189 = vadd.f32 %v187, %v188
      %v190 = vsel %vm172, %v165, 0.0
      %v191 = vadd.f32 %v189, %v190
      %v192 = vsel %vm172, %v166, 0.0
      %v193 = vadd.f32 %v191, %v192
      %v194 = vsel %vm172, %v167, 0.0
      %v195 = vadd.f32 %v193, %v194
      %v196 = vsel %vm172, %v168, 0.0
      %v197 = vadd.f32 %v195, %v196
      %v198 = vsel %vm172, %v169, 0.0
      %v199 = vadd.f32 %v197, %v198
      %v200 = vsel %vm172, %v170, 0.0
      %v201 = vadd.f32 %v199, %v200
      %v202 = vsel %vm172, %v171, 0.0
      %v203 = vadd.f32 %v201, %v202
      %v204 = vrot.slane %v203, 4
      %v205 = vadd.f32 %v203, %v204
      %v206 = vrot.slane %v205, 2
      %v207 = vadd.f32 %v205, %v206
      %v208 = vrot.slane %v207, 1
      %v209 = vadd.f32 %v207, %v208
      %v210 = vmul.f32 %v156, %v156
      %v211 = vmul.f32 %v157, %v157
      %v212 = vmul.f32 %v158, %v158
      %v213 = vmul.f32 %v159, %v159
      %v214 = vmul.f32 %v160, %v160
      %v215 = vmul.f32 %v161, %v161
      %v216 = vmul.f32 %v162, %v162
      %v217 = vmul.f32 %v163, %v163
      %v218 = vmul.f32 %v164, %v164
      %v219 = vmul.f32 %v165, %v165
      %v220 = vmul.f32 %v166, %v166
      %v221 = vmul.f32 %v167, %v167
      %v222 = vmul.f32 %v168, %v168
      %v223 = vmul.f32 %v169, %v169
      %v224 = vmul.f32 %v170, %v170
      %v225 = vmul.f32 %v171, %v171
      %v226 = vsel %vm172, %v210, 0.0
      %v227 = vsel %vm172, %v211, 0.0
      %v228 = vadd.f32 %v226, %v227
      %v229 = vsel %vm172, %v212, 0.0
      %v230 = vadd.f32 %v228, %v229
      %v231 = vsel %vm172, %v213, 0.0
      %v232 = vadd.f32 %v230, %v231
      %v233 = vsel %vm172, %v214, 0.0
      %v234 = vadd.f32 %v232, %v233
      %v235 = vsel %vm172, %v215, 0.0
      %v236 = vadd.f32 %v234, %v235
      %v237 = vsel %vm172, %v216, 0.0
      %v238 = vadd.f32 %v236, %v237
      %v239 = vsel %vm172, %v217, 0.0
      %v240 = vadd.f32 %v238, %v239
      %v241 = vsel %vm172, %v218, 0.0
      %v242 = vadd.f32 %v240, %v241
      %v243 = vsel %vm172, %v219, 0.0
      %v244 = vadd.f32 %v242, %v243
      %v245 = vsel %vm172, %v220, 0.0
      %v246 = vadd.f32 %v244, %v245
      %v247 = vsel %vm172, %v221, 0.0
      %v248 = vadd.f32 %v246, %v247
      %v249 = vsel %vm172, %v222, 0.0
      %v250 = vadd.f32 %v248, %v249
      %v251 = vsel %vm172, %v223, 0.0
      %v252 = vadd.f32 %v250, %v251
      %v253 = vsel %vm172, %v224, 0.0
      %v254 = vadd.f32 %v252, %v253
      %v255 = vsel %vm172, %v225, 0.0
      %v256 = vadd.f32 %v254, %v255
      %v257 = vrot.slane %v256, 4
      %v258 = vadd.f32 %v256, %v257
      %v259 = vrot.slane %v258, 2
      %v260 = vadd.f32 %v258, %v259
      %v261 = vrot.slane %v260, 1
      %v262 = vadd.f32 %v260, %v261
      %vm263 = vcmask 1040384
      %v264 = vsel %vm263, %v209, %v262
      %vm265 = vcmask 25600
      %266 = vst.msk [vmem:[%s155] sm:$0x3] %vm265, %v264
      %p267 = scmp.lt.s32.totalorder %s16, 1
      %s268 = scalar_select %p267, %s16, 1
      %p269 = scmp.lt.s32.totalorder %s17, 1
      %s270 = scalar_select %p269, %s17, 1
      %s271 = smul.addr %s268, 2
      %s272 = sadd.s32 %s270, %s271
      %s273 = smul.addr %s272, 2
      %s274 = scalar_lea.vmem %s1, %s273
      // Predicated region
      $region25: #{residual_block_forward.3} parent=23 // pred_check
        %p275 = pneg %p72
      $region26: #{residual_block_forward.3} parent=23 // pred_check_branch
        %277 = sbr.rel (%p275) target = $region28
      $region27: #{residual_block_forward.3} parent=23 // pred_region
        _
      $region28: #{residual_block_forward.3} parent=23 // pred_fallthru
        _
    $region24: #{residual_block_forward.3} parent=5 // pred_fallthru
      _
    %p278 = scmp.le.s32.totalorder 2, %s7
    // Predicated region
    $region29: #{residual_block_forward.3} parent=5 // pred_check
      %p279 = pneg %p278
    $region30: #{residual_block_forward.3} parent=5 // pred_check_branch
      %281 = sbr.rel (%p279) target = $region32
    $region31: #{residual_block_forward.3} parent=5 // pred_region
      %s282 = ssub.s32 %s7, 2
      // Predicated region
      $region33: #{residual_block_forward.3} parent=31 // pred_check
        %p283 = pneg %p78
      $region34: #{residual_block_forward.3} parent=31 // pred_check_branch
        %285 = sbr.rel (%p283) target = $region36
      $region35: #{residual_block_forward.3} parent=31 // pred_region
        %p286 = scmp.lt.s32.totalorder %s18, 1
        %s287 = scalar_select %p286, %s18, 1
        %p288 = scmp.lt.s32.totalorder %s19, 1
        %s289 = scalar_select %p288, %s19, 1
        %s290 = smul.addr %s287, 2
        %s291 = sadd.s32 %s289, %s290
        %s292 = smul.addr %s291, 2
        %s293 = scalar_lea.vmem %s1, %s292
      $region36: #{residual_block_forward.3} parent=31 // pred_fallthru
        _
    $region32: #{residual_block_forward.3} parent=5 // pred_fallthru
      _
  $region6: #{residual_block_forward.3} parent=0 // loop_footer
    %s11 = sadd.s32 1, %s7
  $region7: #{residual_block_forward.3} parent=0 // loop_footer_branch
    %6 = sbr.rel target = $region3
  $region8: #{residual_block_forward.3} parent=0 // loop_exit
    _

// kernel: residual_block_forward.4
$region0: #{residual_block_forward.4}
  #allocation0 [shape = 'u32[]', space=smem, size = 0x4, offset = 0x4, fixed_abs, tag = 'smem constant byte address 0x4 - core index']
  #allocation1 [shape = 'u32[144,128]{1,0:T(1,128)}', space=vmem, size = 0x12000, scoped, tag = 'internal scratch']
  %s0 = inlined_call_operand.vmem [shape: f32[2,16,16,4], index: 0, kind: input, shape index: {}, may-alias: {0,1,2}]
  %s1 = inlined_call_operand.vmem [shape: f32[2,16,16,4], index: 1, kind: input, shape index: {}, may-alias: {0,1,2}]
  %s2 = inlined_call_operand.vmem [shape: f32[2,16,16,4], index: 2, kind: input, shape index: {}, may-alias: {0,1,2}]
  %s3 = inlined_call_operand.vmem [shape: bf16[3,12,8], index: 3, kind: input, shape index: {}]
  %s4 = inlined_call_operand.vmem [shape: f32[1,4], index: 4, kind: input, shape index: {}]
  %s5 = inlined_call_operand.vmem [shape: f32[1,4], index: 5, kind: input, shape index: {}]
  %s6 = inlined_call_operand.vmem [shape: bf16[2,16,16,8], index: 6, kind: output, shape index: {0}]
  %s7 = inlined_call_operand.vmem [shape: f32[2,2,2,8], index: 7, kind: output, shape index: {1}]
  %8 = xla_tuple %s6, %s7
  %s9 = sld [smem:[#allocation0]]
  $region65: #{residual_block_forward.4} parent=0
    _
  %s11 = ssub.s32 1, %s9
  %s12 = scalar_select 0, %s11, %s9
  loop: start=0, step=1, limit=6
  $region2: #{residual_block_forward.4} parent=0 // loop_pre_header
    _
  $region3: #{residual_block_forward.4} parent=0 // loop_header
    %s14 = sphi 0, %s18
    %p15 = scmp.ge.s32.totalorder %s14, 6
    %s21 = sphi 0, %s33
    %s22 = sphi 0, %s29
    %s23 = sphi 0, %s21
    %s24 = sphi 0, %s22
    %s25 = sphi 0, %s23
    %s26 = sphi 0, %s24
    %s38 = sphi 0, %s40
    %s41 = sphi 0, %s38
    %s42 = sphi 0, %s41
    %s58 = sphi 0, %s42
    %s74 = sphi 0, %s76
    %s77 = sphi 0, %s74
    %s78 = sphi 0, %s77
    %s94 = sphi 0, %s78
    %s110 = sphi 0, %s112
    %s113 = sphi 0, %s110
    %s114 = sphi 0, %s113
    %s130 = sphi 0, %s114
    %s134 = sphi 0, %s134
    %s136 = sphi 0, %s134
    %s137 = sphi 0, %s136
    %s151 = sphi 0, %s137
    %s155 = sphi 0, %s155
    %s157 = sphi 0, %s155
    %s158 = sphi 0, %s157
    %s172 = sphi 0, %s158
    %s176 = sphi 0, %s176
    %s178 = sphi 0, %s176
    %s179 = sphi 0, %s178
    %s193 = sphi 0, %s179
    %s201 = sphi 0, %s203
    %s204 = sphi 0, %s201
    %s205 = sphi 0, %s204
    %s221 = sphi 0, %s205
    %s229 = sphi 0, %s231
    %s232 = sphi 0, %s229
    %s233 = sphi 0, %s232
    %s249 = sphi 0, %s233
  $region4: #{residual_block_forward.4} parent=0 // loop_header_branch
    %17 = sbr.rel (%p15) target = $region8
  $region5: #{residual_block_forward.4} parent=0 // loop_body
    %s19 = ssub.s32 %s14, 1
    %s20 = ssub.s32 %s14, 2
    %s27 = sadd.s32 1, %s22
    %p28 = scmp.ge.s32.totalorder %s27, 2
    %s29 = scalar_select %p28, 0, %s27
    %s30 = sadd.s32 1, %s21
    %s31 = scalar_select %p28, %s30, %s21
    %p32 = scmp.ge.s32.totalorder %s31, 2
    %s33 = scalar_select %p32, 0, %s31
    %s34 = ssub.s32 %s21, %s33
    %s35 = ssub.s32 %s22, %s29
    %s36 = sor.u32 %s34, %s35
    %p37 = scmp.eq.s32.totalorder %s36, 0
    %s39 = sadd.s32 %s38, 1
    %s40 = scalar_select %p37, %s38, %s39
    %p43 = pneg %p37
    %p44 = scmp.eq.s32.totalorder %s14, 3
    %p45 = por %p43, %p44
    %p46 = scmp.ne.s32.totalorder %s38, %s41
    %p47 = scmp.eq.s32.totalorder %s14, 0
    %p48 = por %p46, %p47
    %p49 = scmp.ne.s32.totalorder %s38, %s41
    %p50 = scmp.eq.s32.totalorder %s19, 3
    %p51 = por %p49, %p50
    %p52 = scmp.ne.s32.totalorder %s41, %s42
    %p53 = scmp.eq.s32.totalorder %s19, 0
    %p54 = por %p52, %p53
    %p55 = scmp.ne.s32.totalorder %s41, %s42
    %p56 = scmp.eq.s32.totalorder %s20, 3
    %p57 = por %p55, %p56
    %p59 = scmp.ne.s32.totalorder %s42, %s58
    %p60 = scmp.eq.s32.totalorder %s20, 0
    %p61 = por %p59, %p60
    %s62 = smul.u32 %s22, 8
    %s63 = ssub.s32 %s62, 1
    %p64 = scmp.gt.s32.totalorder %s63, 0
    %s65 = scalar_select %p64, %s63, 0
    %s66 = smul.u32 %s29, 8
    %s67 = ssub.s32 %s66, 1
    %p68 = scmp.gt.s32.totalorder %s67, 0
    %s69 = scalar_select %p68, %s67, 0
    %s70 = ssub.s32 %s21, %s33
    %s71 = ssub.s32 %s65, %s69
    %s72 = sor.u32 %s70, %s71
    %p73 = scmp.eq.s32.totalorder %s72, 0
    %s75 = sadd.s32 %s74, 1
    %s76 = scalar_select %p73, %s74, %s75
    %p79 = pneg %p73
    %p80 = scmp.eq.s32.totalorder %s14, 3
    %p81 = por %p79, %p80
    %p82 = scmp.ne.s32.totalorder %s74, %s77
    %p83 = scmp.eq.s32.totalorder %s14, 0
    %p84 = por %p82, %p83
    %p85 = scmp.ne.s32.totalorder %s74, %s77
    %p86 = scmp.eq.s32.totalorder %s19, 3
    %p87 = por %p85, %p86
    %p88 = scmp.ne.s32.totalorder %s77, %s78
    %p89 = scmp.eq.s32.totalorder %s19, 0
    %p90 = por %p88, %p89
    %p91 = scmp.ne.s32.totalorder %s77, %s78
    %p92 = scmp.eq.s32.totalorder %s20, 3
    %p93 = por %p91, %p92
    %p95 = scmp.ne.s32.totalorder %s78, %s94
    %p96 = scmp.eq.s32.totalorder %s20, 0
    %p97 = por %p95, %p96
    %s98 = sadd.s32 %s22, 1
    %s99 = smul.u32 %s98, 8
    %p100 = scmp.lt.s32.totalorder %s99, 15
    %s101 = scalar_select %p100, %s99, 15
    %s102 = sadd.s32 %s29, 1
    %s103 = smul.u32 %s102, 8
    %p104 = scmp.lt.s32.totalorder %s103, 15
    %s105 = scalar_select %p104, %s103, 15
    %s106 = ssub.s32 %s21, %s33
    %s107 = ssub.s32 %s101, %s105
    %s108 = sor.u32 %s106, %s107
    %p109 = scmp.eq.s32.totalorder %s108, 0
    %s111 = sadd.s32 %s110, 1
    %s112 = scalar_select %p109, %s110, %s111
    %p115 = pneg %p109
    %p116 = scmp.eq.s32.totalorder %s14, 3
    %p117 = por %p115, %p116
    %p118 = scmp.ne.s32.totalorder %s110, %s113
    %p119 = scmp.eq.s32.totalorder %s14, 0
    %p120 = por %p118, %p119
    %p121 = scmp.ne.s32.totalorder %s110, %s113
    %p122 = scmp.eq.s32.totalorder %s19, 3
    %p123 = por %p121, %p122
    %p124 = scmp.ne.s32.totalorder %s113, %s114
    %p125 = scmp.eq.s32.totalorder %s19, 0
    %p126 = por %p124, %p125
    %p127 = scmp.ne.s32.totalorder %s113, %s114
    %p128 = scmp.eq.s32.totalorder %s20, 3
    %p129 = por %p127, %p128
    %p131 = scmp.ne.s32.totalorder %s114, %s130
    %p132 = scmp.eq.s32.totalorder %s20, 0
    %p133 = por %p131, %p132
    %s135 = sadd.s32 %s134, 1
    %p138 = scmp.eq.s32.totalorder %s14, 3
    %p139 = scmp.ne.s32.totalorder %s134, %s136
    %p140 = scmp.eq.s32.totalorder %s14, 0
    %p141 = por %p139, %p140
    %p142 = scmp.ne.s32.totalorder %s134, %s136
    %p143 = scmp.eq.s32.totalorder %s19, 3
    %p144 = por %p142, %p143
    %p145 = scmp.ne.s32.totalorder %s136, %s137
    %p146 = scmp.eq.s32.totalorder %s19, 0
    %p147 = por %p145, %p146
    %p148 = scmp.ne.s32.totalorder %s136, %s137
    %p149 = scmp.eq.s32.totalorder %s20, 3
    %p150 = por %p148, %p149
    %p152 = scmp.ne.s32.totalorder %s137, %s151
    %p153 = scmp.eq.s32.totalorder %s20, 0
    %p154 = por %p152, %p153
    %s156 = sadd.s32 %s155, 1
    %p159 = scmp.eq.s32.totalorder %s14, 3
    %p160 = scmp.ne.s32.totalorder %s155, %s157
    %p161 = scmp.eq.s32.totalorder %s14, 0
    %p162 = por %p160, %p161
    %p163 = scmp.ne.s32.totalorder %s155, %s157
    %p164 = scmp.eq.s32.totalorder %s19, 3
    %p165 = por %p163, %p164
    %p166 = scmp.ne.s32.totalorder %s157, %s158
    %p167 = scmp.eq.s32.totalorder %s19, 0
    %p168 = por %p166, %p167
    %p169 = scmp.ne.s32.totalorder %s157, %s158
    %p170 = scmp.eq.s32.totalorder %s20, 3
    %p171 = por %p169, %p170
    %p173 = scmp.ne.s32.totalorder %s158, %s172
    %p174 = scmp.eq.s32.totalorder %s20, 0
    %p175 = por %p173, %p174
    %s177 = sadd.s32 %s176, 1
    %p180 = scmp.eq.s32.totalorder %s14, 3
    %p181 = scmp.ne.s32.totalorder %s176, %s178
    %p182 = scmp.eq.s32.totalorder %s14, 0
    %p183 = por %p181, %p182
    %p184 = scmp.ne.s32.totalorder %s176, %s178
    %p185 = scmp.eq.s32.totalorder %s19, 3
    %p186 = por %p184, %p185
    %p187 = scmp.ne.s32.totalorder %s178, %s179
    %p188 = scmp.eq.s32.totalorder %s19, 0
    %p189 = por %p187, %p188
    %p190 = scmp.ne.s32.totalorder %s178, %s179
    %p191 = scmp.eq.s32.totalorder %s20, 3
    %p192 = por %p190, %p191
    %p194 = scmp.ne.s32.totalorder %s179, %s193
    %p195 = scmp.eq.s32.totalorder %s20, 0
    %p196 = por %p194, %p195
    %s197 = ssub.s32 %s21, %s33
    %s198 = ssub.s32 %s22, %s29
    %s199 = sor.u32 %s197, %s198
    %p200 = scmp.eq.s32.totalorder %s199, 0
    %s202 = sadd.s32 %s201, 1
    %s203 = scalar_select %p200, %s201, %s202
    %p206 = pneg %p200
    %p207 = scmp.eq.s32.totalorder %s14, 3
    %p208 = por %p206, %p207
    %p209 = scmp.ne.s32.totalorder %s201, %s204
    %p210 = scmp.eq.s32.totalorder %s14, 0
    %p211 = por %p209, %p210
    %p212 = scmp.ne.s32.totalorder %s201, %s204
    %p213 = scmp.eq.s32.totalorder %s19, 3
    %p214 = por %p212, %p213
    %p215 = scmp.ne.s32.totalorder %s204, %s205
    %p216 = scmp.eq.s32.totalorder %s19, 0
    %p217 = por %p215, %p216
    %p218 = scmp.ne.s32.totalorder %s204, %s205
    %p219 = scmp.eq.s32.totalorder %s20, 3
    %p220 = por %p218, %p219
    %p222 = scmp.ne.s32.totalorder %s205, %s221
    %p223 = scmp.eq.s32.totalorder %s20, 0
    %p224 = por %p222, %p223
    %s225 = ssub.s32 %s21, %s33
    %s226 = ssub.s32 %s22, %s29
    %s227 = sor.u32 %s225, %s226
    %p228 = scmp.eq.s32.totalorder %s227, 0
    %s230 = sadd.s32 %s229, 1
    %s231 = scalar_select %p228, %s229, %s230
    %p234 = pneg %p228
    %p235 = scmp.eq.s32.totalorder %s14, 3
    %p236 = por %p234, %p235
    %p237 = scmp.ne.s32.totalorder %s229, %s232
    %p238 = scmp.eq.s32.totalorder %s14, 0
    %p239 = por %p237, %p238
    %p240 = scmp.ne.s32.totalorder %s229, %s232
    %p241 = scmp.eq.s32.totalorder %s19, 3
    %p242 = por %p240, %p241
    %p243 = scmp.ne.s32.totalorder %s232, %s233
    %p244 = scmp.eq.s32.totalorder %s19, 0
    %p245 = por %p243, %p244
    %p246 = scmp.ne.s32.totalorder %s232, %s233
    %p247 = scmp.eq.s32.totalorder %s20, 3
    %p248 = por %p246, %p247
    %p250 = scmp.ne.s32.totalorder %s233, %s249
    %p251 = scmp.eq.s32.totalorder %s20, 0
    %p252 = por %p250, %p251
    %p253 = scmp.le.s32.totalorder 1, %s14
    %p254 = scmp.lt.s32.totalorder %s14, 5
    %p255 = pnand %p253, %p254
    %p256 = pneg %p255
    // Predicated region
    $region9: #{residual_block_forward.4} parent=5 // pred_check
      _
    $region10: #{residual_block_forward.4} parent=5 // pred_check_branch
      %258 = sbr.rel (%p255) target = $region12
    $region11: #{residual_block_forward.4} parent=5 // pred_region
      %s259 = ssub.s32 %s14, 1
      // Predicated region
      $region13: #{residual_block_forward.4} parent=11 // pred_check
        %p260 = pneg %p147
      $region14: #{residual_block_forward.4} parent=11 // pred_check_branch
        %262 = sbr.rel (%p260) target = $region16
      $region15: #{residual_block_forward.4} parent=11 // pred_region
        _
      $region16: #{residual_block_forward.4} parent=11 // pred_fallthru
        _
      // Predicated region
      $region17: #{residual_block_forward.4} parent=11 // pred_check
        %p263 = pneg %p168
      $region18: #{residual_block_forward.4} parent=11 // pred_check_branch
        %265 = sbr.rel (%p263) target = $region20
      $region19: #{residual_block_forward.4} parent=11 // pred_region
        _
      $region20: #{residual_block_forward.4} parent=11 // pred_fallthru
        _
      // Predicated region
      $region21: #{residual_block_forward.4} parent=11 // pred_check
        %p266 = pneg %p189
      $region22: #{residual_block_forward.4} parent=11 // pred_check_branch
        %268 = sbr.rel (%p266) target = $region24
      $region23: #{residual_block_forward.4} parent=11 // pred_region
        _
      $region24: #{residual_block_forward.4} parent=11 // pred_fallthru
        _
    $region12: #{residual_block_forward.4} parent=5 // pred_fallthru
      _
    %p269 = scmp.lt.s32.totalorder %s14, 4
    // Predicated region
    $region25: #{residual_block_forward.4} parent=5 // pred_check
      %p270 = pneg %p269
    $region26: #{residual_block_forward.4} parent=5 // pred_check_branch
      %272 = sbr.rel (%p270) target = $region28
    $region27: #{residual_block_forward.4} parent=5 // pred_region
      // Predicated region
      $region29: #{residual_block_forward.4} parent=27 // pred_check
        %p273 = pneg %p48
      $region30: #{residual_block_forward.4} parent=27 // pred_check_branch
        %275 = sbr.rel (%p273) target = $region32
      $region31: #{residual_block_forward.4} parent=27 // pred_region
        %s276 = smul.u32 8, %s22
        %p277 = scmp.lt.s32.totalorder %s21, 1
        %s278 = scalar_select %p277, %s21, 1
        %p279 = scmp.lt.s32.totalorder %s276, 15
        %s280 = scalar_select %p279, %s276, 15
        %s281 = smul.addr %s280, 2
        %s282 = smul.addr %s278, 32
        %s283 = sadd.s32 %s281, %s282
        %s284 = smul.addr %s283, 8
        %s285 = scalar_lea.vmem %s0, %s284
        %s286 = smul.u32 8, %s22
      $region32: #{residual_block_forward.4} parent=27 // pred_fallthru
        _
      // Predicated region
      $region33: #{residual_block_forward.4} parent=27 // pred_check
        %p287 = pneg %p84
      $region34: #{residual_block_forward.4} parent=27 // pred_check_branch
        %289 = sbr.rel (%p287) target = $region36
      $region35: #{residual_block_forward.4} parent=27 // pred_region
        %s290 = smul.u32 %s22, 8
        %s291 = ssub.s32 %s290, 1
        %p292 = scmp.gt.s32.totalorder %s291, 0
        %s293 = scalar_select %p292, %s291, 0
        %p294 = scmp.lt.s32.totalorder %s21, 1
        %s295 = scalar_select %p294, %s21, 1
        %p296 = scmp.lt.s32.totalorder %s293, 15
        %s297 = scalar_select %p296, %s293, 15
        %s298 = smul.addr %s297, 2
        %s299 = smul.addr %s295, 32
        %s300 = sadd.s32 %s298, %s299
        %s301 = smul.addr %s300, 8
        %s302 = scalar_lea.vmem %s1, %s301
        %s303 = smul.u32 %s22, 8
        %s304 = ssub.s32 %s303, 1
        %p305 = scmp.gt.s32.totalorder %s304, 0
        %s306 = scalar_select %p305, %s304, 0
      $region36: #{residual_block_forward.4} parent=27 // pred_fallthru
        _
      // Predicated region
      $region37: #{residual_block_forward.4} parent=27 // pred_check
        %p307 = pneg %p120
      $region38: #{residual_block_forward.4} parent=27 // pred_check_branch
        %309 = sbr.rel (%p307) target = $region40
      $region39: #{residual_block_forward.4} parent=27 // pred_region
        %s310 = sadd.s32 %s22, 1
        %s311 = smul.u32 %s310, 8
        %p312 = scmp.lt.s32.totalorder %s311, 15
        %s313 = scalar_select %p312, %s311, 15
        %p314 = scmp.lt.s32.totalorder %s21, 1
        %s315 = scalar_select %p314, %s21, 1
        %p316 = scmp.lt.s32.totalorder %s313, 15
        %s317 = scalar_select %p316, %s313, 15
        %s318 = smul.addr %s317, 2
        %s319 = smul.addr %s315, 32
        %s320 = sadd.s32 %s318, %s319
        %s321 = smul.addr %s320, 8
        %s322 = scalar_lea.vmem %s2, %s321
        %s323 = sadd.s32 %s22, 1
        %s324 = smul.u32 %s323, 8
        %p325 = scmp.lt.s32.totalorder %s324, 15
        %s326 = scalar_select %p325, %s324, 15
      $region40: #{residual_block_forward.4} parent=27 // pred_fallthru
        _
    $region28: #{residual_block_forward.4} parent=5 // pred_fallthru
      _
    %p327 = scmp.le.s32.totalorder 1, %s14
    %p328 = scmp.lt.s32.totalorder %s14, 5
    %p329 = pnand %p327, %p328
    %p330 = pneg %p329
    // Predicated region
    $region41: #{residual_block_forward.4} parent=5 // pred_check
      _
    $region42: #{residual_block_forward.4} parent=5 // pred_check_branch
      %332 = sbr.rel (%p329) target = $region44
    $region43: #{residual_block_forward.4} parent=5 // pred_region
      %s333 = ssub.s32 %s14, 1
      %s334 = smul.u32 8, %s24
      %p335 = scmp.lt.s32.totalorder %s23, 1
      %s336 = scalar_select %p335, %s23, 1
      %p337 = scmp.lt.s32.totalorder %s334, 15
      %s338 = scalar_select %p337, %s334, 15
      %s339 = smul.addr %s338, 2
      %s340 = smul.addr %s336, 32
      %s341 = sadd.s32 %s339, %s340
      %s342 = smul.addr %s341, 8
      %s343 = scalar_lea.vmem %s0, %s342
      %p344 = pneg %p54
      %p345 = pneg %p51
      %s346 = smul.u32 %s24, 8
      %s347 = ssub.s32 %s346, 1
      %p348 = scmp.gt.s32.totalorder %s347, 0
      %s349 = scalar_select %p348, %s347, 0
      %p350 = scmp.lt.s32.totalorder %s23, 1
      %s351 = scalar_select %p350, %s23, 1
      %p352 = scmp.lt.s32.totalorder %s349, 15
      %s353 = scalar_select %p352, %s349, 15
      %s354 = smul.addr %s353, 2
      %s355 = smul.addr %s351, 32
      %s356 = sadd.s32 %s354, %s355
      %s357 = smul.addr %s356, 8
      %s358 = scalar_lea.vmem %s1, %s357
      %p359 = pneg %p90
      %p360 = pneg %p87
      %s361 = sadd.s32 %s24, 1
      %s362 = smul.u32 %s361, 8
      %p363 = scmp.lt.s32.totalorder %s362, 15
      %s364 = scalar_select %p363, %s362, 15
      %p365 = scmp.lt.s32.totalorder %s23, 1
      %s366 = scalar_select %p365, %s23, 1
      %p367 = scmp.lt.s32.totalorder %s364, 15
      %s368 = scalar_select %p367, %s364, 15
      %s369 = smul.addr %s368, 2
      %s370 = smul.addr %s366, 32
      %s371 = sadd.s32 %s369, %s370
      %s372 = smul.addr %s371, 8
      %s373 = scalar_lea.vmem %s2, %s372
      %p374 = pneg %p126
      %p375 = pneg %p123
      %p376 = pneg %p147
      %p377 = pneg %p144
      %p378 = pneg %p168
      %p379 = pneg %p165
      %p380 = pneg %p189
      %p381 = pneg %p186
      %p382 = pneg %p217
      %p383 = pneg %p214
      %s384 = smul.u32 8, %s24
      %p385 = scmp.lt.s32.totalorder %s23, 1
      %s386 = scalar_select %p385, %s23, 1
      %p387 = scmp.lt.s32.totalorder %s384, 15
      %s388 = scalar_select %p387, %s384, 15
      %s389 = smul.addr %s388, 2
      %s390 = smul.addr %s386, 32
      %s391 = sadd.s32 %s389, %s390
      %s392 = smul.addr %s391, 4
      %s393 = scalar_lea.vmem %s6, %s392
      %p394 = pneg %p245
      %p395 = pneg %p242
      %p396 = scmp.lt.s32.totalorder %s23, 1
      %s397 = scalar_select %p396, %s23, 1
      %p398 = scmp.lt.s32.totalorder %s24, 1
      %s399 = scalar_select %p398, %s24, 1
      %s400 = smul.addr %s397, 2
      %s401 = sadd.s32 %s399, %s400
      %s402 = smul.addr %s401, 2
      %s403 = scalar_lea.vmem %s7, %s402
      %s404 = smul.u32 8, %s24
      %p405 = scmp.lt.s32.totalorder %s23, 1
      %s406 = scalar_select %p405, %s23, 1
      %p407 = scmp.lt.s32.totalorder %s404, 15
      %s408 = scalar_select %p407, %s404, 15
      %s409 = smul.addr %s408, 2
      %s410 = smul.addr %s406, 32
      %s411 = sadd.s32 %s409, %s410
      %s412 = smul.addr %s411, 8
      %s413 = scalar_lea.vmem %s0, %s412
      %s414 = smul.u32 8, %s24
      %s415 = smul.u32 %s24, 8
      %s416 = ssub.s32 %s415, 1
      %p417 = scmp.gt.s32.totalorder %s416, 0
      %s418 = scalar_select %p417, %s416, 0
      %p419 = scmp.lt.s32.totalorder %s23, 1
      %s420 = scalar_select %p419, %s23, 1
      %p421 = scmp.lt.s32.totalorder %s418, 15
      %s422 = scalar_select %p421, %s418, 15
      %s423 = smul.addr %s422, 2
      %s424 = smul.addr %s420, 32
      %s425 = sadd.s32 %s423, %s424
      %s426 = smul.addr %s425, 8
      %s427 = scalar_lea.vmem %s1, %s426
      %s428 = smul.u32 %s24, 8
      %s429 = ssub.s32 %s428, 1
      %p430 = scmp.gt.s32.totalorder %s429, 0
      %s431 = scalar_select %p430, %s429, 0
      %s432 = sadd.s32 %s24, 1
      %s433 = smul.u32 %s432, 8
      %p434 = scmp.lt.s32.totalorder %s433, 15
      %s435 = scalar_select %p434, %s433, 15
      %p436 = scmp.lt.s32.totalorder %s23, 1
      %s437 = scalar_select %p436, %s23, 1
      %p438 = scmp.lt.s32.totalorder %s435, 15
      %s439 = scalar_select %p438, %s435, 15
      %s440 = smul.addr %s439, 2
      %s441 = smul.addr %s437, 32
      %s442 = sadd.s32 %s440, %s441
      %s443 = smul.addr %s442, 8
      %s444 = scalar_lea.vmem %s2, %s443
      %s445 = sadd.s32 %s24, 1
      %s446 = smul.u32 %s445, 8
      %p447 = scmp.lt.s32.totalorder %s446, 15
      %s448 = scalar_select %p447, %s446, 15
      %s449 = smul.u32 8, %s24
      %p450 = scmp.lt.s32.totalorder %s23, 1
      %s451 = scalar_select %p450, %s23, 1
      %p452 = scmp.lt.s32.totalorder %s449, 15
      %s453 = scalar_select %p452, %s449, 15
      %s454 = smul.addr %s453, 2
      %s455 = smul.addr %s451, 32
      %s456 = sadd.s32 %s454, %s455
      %s457 = smul.addr %s456, 4
      %s458 = scalar_lea.vmem %s6, %s457
      %s459 = smul.u32 8, %s24
      %p460 = scmp.lt.s32.totalorder %s23, 1
      %s461 = scalar_select %p460, %s23, 1
      %p462 = scmp.lt.s32.totalorder %s24, 1
      %s463 = scalar_select %p462, %s24, 1
      %s464 = smul.addr %s461, 2
      %s465 = sadd.s32 %s463, %s464
      %s466 = smul.addr %s465, 2
      %s467 = scalar_lea.vmem %s7, %s466
      %v469 = vld [vmem:[%s413] sm:$0xff]
      %v470 = vld [vmem:[%s413 + $0x8] sm:$0xff]
      %v471 = vld [vmem:[%s413 + $0x10] sm:$0xff]
      %v472 = vld [vmem:[%s413 + $0x18] sm:$0xff]
      %v473 = vld [vmem:[%s413 + $0x20] sm:$0xff]
      %v474 = vld [vmem:[%s413 + $0x28] sm:$0xff]
      %v475 = vld [vmem:[%s413 + $0x30] sm:$0xff]
      %v476 = vld [vmem:[%s413 + $0x38] sm:$0xff]
      %v477 = vld [vmem:[%s413 + $0x40] sm:$0xff]
      %v478 = vld [vmem:[%s413 + $0x48] sm:$0xff]
      %v479 = vld [vmem:[%s413 + $0x50] sm:$0xff]
      %v480 = vld [vmem:[%s413 + $0x58] sm:$0xff]
      %v481 = vld [vmem:[%s413 + $0x60] sm:$0xff]
      %v482 = vld [vmem:[%s413 + $0x68] sm:$0xff]
      %v483 = vld [vmem:[%s413 + $0x70] sm:$0xff]
      %v484 = vld [vmem:[%s413 + $0x78] sm:$0xff]
      %v485 = vld [vmem:[%s427] sm:$0xff]
      %v486 = vld [vmem:[%s427 + $0x8] sm:$0xff]
      %v487 = vld [vmem:[%s444] sm:$0xff]
      %v488 = vld [vmem:[%s444 + $0x8] sm:$0xff]
      %v489 = vld [vmem:[%s4] sm:$0x1]
      %v490 = vld [vmem:[%s5] sm:$0x1]
      %v492 = vlaneseq
      %v493 = vshrl.u32 %v492, 7
      %v494 = vsub.s32 0, %v493
      %v495 = vrot.slane %v489, %v494
      %v497 = vmul.f32 %v469, %v495
      %v498 = vmul.f32 %v470, %v495
      %v499 = vmul.f32 %v471, %v495
      %v500 = vmul.f32 %v472, %v495
      %v501 = vmul.f32 %v473, %v495
      %v502 = vmul.f32 %v474, %v495
      %v503 = vmul.f32 %v475, %v495
      %v504 = vmul.f32 %v476, %v495
      %v505 = vmul.f32 %v477, %v495
      %v506 = vmul.f32 %v478, %v495
      %v507 = vmul.f32 %v479, %v495
      %v508 = vmul.f32 %v480, %v495
      %v509 = vmul.f32 %v481, %v495
      %v510 = vmul.f32 %v482, %v495
      %v511 = vmul.f32 %v483, %v495
      %v512 = vmul.f32 %v484, %v495
      %v514 = vlaneseq
      %v515 = vshrl.u32 %v514, 7
      %v516 = vsub.s32 0, %v515
      %v517 = vrot.slane %v490, %v516
      %v519 = vadd.f32 %v497, %v517
      %v520 = vadd.f32 %v498, %v517
      %v521 = vadd.f32 %v499, %v517
      %v522 = vadd.f32 %v500, %v517
      %v523 = vadd.f32 %v501, %v517
      %v524 = vadd.f32 %v502, %v517
      %v525 = vadd.f32 %v503, %v517
      %v526 = vadd.f32 %v504, %v517
      %v527 = vadd.f32 %v505, %v517
      %v528 = vadd.f32 %v506, %v517
      %v529 = vadd.f32 %v507, %v517
      %v530 = vadd.f32 %v508, %v517
      %v531 = vadd.f32 %v509, %v517
      %v532 = vadd.f32 %v510, %v517
      %v533 = vadd.f32 %v511, %v517
      %v534 = vadd.f32 %v512, %v517
      %v535 = vmax.f32 %v519, 0.0
      %v536 = vmax.f32 %v520, 0.0
      %v537 = vmax.f32 %v521, 0.0
      %v538 = vmax.f32 %v522, 0.0
      %v539 = vmax.f32 %v523, 0.0
      %v540 = vmax.f32 %v524, 0.0
      %v541 = vmax.f32 %v525, 0.0
      %v542 = vmax.f32 %v526, 0.0
      %v543 = vmax.f32 %v527, 0.0
      %v544 = vmax.f32 %v528, 0.0
      %v545 = vmax.f32 %v529, 0.0
      %v546 = vmax.f32 %v530, 0.0
      %v547 = vmax.f32 %v531, 0.0
      %v548 = vmax.f32 %v532, 0.0
      %v549 = vmax.f32 %v533, 0.0
      %v550 = vmax.f32 %v534, 0.0
      %v551 = vmul.f32 %v485, %v495
      %v552 = vmul.f32 %v486, %v495
      %v553 = vadd.f32 %v551, %v517
      %v554 = vadd.f32 %v552, %v517
      %v555 = vmax.f32 %v553, 0.0
      %v556 = vmax.f32 %v554, 0.0
      %p557 = scmp.gt.s32.totalorder %s24, 0
      %s558 = scalar_select %p557, 1, 0
      %s559 = scvt.s32.f32 %s558
      %v560 = vstv %s559
      %v561 = vmul.f32 %v555, %v560
      %v562 = vmul.f32 %v556, %v560
      %v563 = vmul.f32 %v487, %v495
      %v564 = vmul.f32 %v488, %v495
      %v565 = vadd.f32 %v563, %v517
      %v566 = vadd.f32 %v564, %v517
      %v567 = vmax.f32 %v565, 0.0
      %v568 = vmax.f32 %v566, 0.0
      %p569 = scmp.lt.s32.totalorder %s24, 1
      %s570 = scalar_select %p569, 1, 0
      %s571 = scvt.s32.f32 %s570
      %v572 = vstv %s571
      %v573 = vmul.f32 %v567, %v572
      %v574 = vmul.f32 %v568, %v572
      %v575 = vpack.c.bf16 %v562, %v561
      %v576 = vpack.c.bf16 %v536, %v535
      %v577 = vpack.c.bf16 %v538, %v537
      %v578 = vpack.c.bf16 %v540, %v539
      %v579 = vpack.c.bf16 %v542, %v541
      %v580 = vpack.c.bf16 %v544, %v543
      %v581 = vpack.c.bf16 %v546, %v545
      %v582 = vpack.c.bf16 %v548, %v547
      %v583 = vpack.c.bf16 %v550, %v549
      %v584 = vpack.c.bf16 %v574, %v573
      %v586 = vshrl.u32 %v575, 16
      %v588 = vrot.slane %v586, 7
      %v589 = vshll.u32 %v575, 16
      %v591 = vor.u32 %v588, %v589
      %v593 = vshrl.u32 %v576, 16
      %v595 = vrot.slane %v593, 7
      %v596 = vshll.u32 %v576, 16
      %v598 = vor.u32 %v595, %v596
      %v600 = vshrl.u32 %v577, 16
      %v602 = vrot.slane %v600, 7
      %v603 = vshll.u32 %v577, 16
      %v605 = vor.u32 %v602, %v603
      %v607 = vshrl.u32 %v578, 16
      %v609 = vrot.slane %v607, 7
      %v610 = vshll.u32 %v578, 16
      %v612 = vor.u32 %v609, %v610
      %v614 = vshrl.u32 %v579, 16
      %v616 = vrot.slane %v614, 7
      %v617 = vshll.u32 %v579, 16
      %v619 = vor.u32 %v616, %v617
      %v621 = vshrl.u32 %v580, 16
      %v623 = vrot.slane %v621, 7
      %v624 = vshll.u32 %v580, 16
      %v626 = vor.u32 %v623, %v624
      %v628 = vshrl.u32 %v581, 16
      %v630 = vrot.slane %v628, 7
      %v631 = vshll.u32 %v581, 16
      %v633 = vor.u32 %v630, %v631
      %v635 = vshrl.u32 %v582, 16
      %v637 = vrot.slane %v635, 7
      %v638 = vshll.u32 %v582, 16
      %v640 = vor.u32 %v637, %v638
      %v642 = vshrl.u32 %v583, 16
      %v644 = vrot.slane %v642, 7
      %v645 = vshll.u32 %v583, 16
      %v647 = vor.u32 %v644, %v645
      %v649 = vshrl.u32 %v584, 16
      %v651 = vrot.slane %v649, 7
      %v652 = vshll.u32 %v584, 16
      %v654 = vor.u32 %v651, %v652
      %vm665 = vcmask 1040384
      %vm666 = vsmask.f32 256
      %vm667 = vmand %vm665, %vm666
      %v668 = vsel %vm667, 0, %v591
      %v669 = vsel %vm667, 0, %v598
      %v670 = vsel %vm667, 0, %v605
      %v671 = vsel %vm667, 0, %v612
      %v672 = vsel %vm667, 0, %v619
      %v673 = vsel %vm667, 0, %v626
      %v674 = vsel %vm667, 0, %v633
      %v675 = vsel %vm667, 0, %v640
      %v676 = vsel %vm667, 0, %v647
      %v677 = vsel %vm667, 0, %v654
      %v678 = vrot.slane %v589, 1
      %v679 = vor.u32 %v586, %v678
      %v680 = vrot.slane %v596, 1
      %v681 = vor.u32 %v593, %v680
      %v682 = vrot.slane %v603, 1
      %v683 = vor.u32 %v600, %v682
      %v684 = vrot.slane %v610, 1
      %v685 = vor.u32 %v607, %v684
      %v686 = vrot.slane %v617, 1
      %v687 = vor.u32 %v614, %v686
      %v688 = vrot.slane %v624, 1
      %v689 = vor.u32 %v621, %v688
      %v690 = vrot.slane %v631, 1
      %v691 = vor.u32 %v628, %v690
      %v692 = vrot.slane %v638, 1
      %v693 = vor.u32 %v635, %v692
      %v694 = vrot.slane %v645, 1
      %v695 = vor.u32 %v642, %v694
      %v696 = vrot.slane %v652, 1
      %v697 = vor.u32 %v649, %v696
      %vm708 = vcmask 1047552
      %vm709 = vsmask.f32 7424
      %vm710 = vmand %vm708, %vm709
      %v711 = vsel %vm710, %v679, 0
      %v712 = vsel %vm710, %v681, 0
      %v713 = vsel %vm710, %v683, 0
      %v714 = vsel %vm710, %v685, 0
      %v715 = vsel %vm710, %v687, 0
      %v716 = vsel %vm710, %v689, 0
      %v717 = vsel %vm710, %v691, 0
      %v718 = vsel %vm710, %v693, 0
      %v719 = vsel %vm710, %v695, 0
      %v720 = vsel %vm710, %v697, 0
      %731 = vrot.lane.b32.xlu0 %v575, 4
      %v732 = vpop.permute.xlu0 %731
      %733 = vrot.lane.b32.xlu0 %v576, 4
      %v734 = vpop.permute.xlu0 %733
      %735 = vrot.lane.b32.xlu0 %v577, 4
      %v736 = vpop.permute.xlu0 %735
      %737 = vrot.lane.b32.xlu0 %v578, 4
      %v738 = vpop.permute.xlu0 %737
      %739 = vrot.lane.b32.xlu0 %v579, 4
      %v740 = vpop.permute.xlu0 %739
      %741 = vrot.lane.b32.xlu0 %v580, 4
      %v742 = vpop.permute.xlu0 %741
      %743 = vrot.lane.b32.xlu0 %v581, 4
      %v744 = vpop.permute.xlu0 %743
      %745 = vrot.lane.b32.xlu0 %v582, 4
      %v746 = vpop.permute.xlu0 %745
      %747 = vrot.lane.b32.xlu0 %v583, 4
      %v748 = vpop.permute.xlu0 %747
      %749 = vrot.lane.b32.xlu0 %v584, 4
      %v750 = vpop.permute.xlu0 %749
      %761 = vrot.lane.b32.xlu0 %v711, 8
      %v762 = vpop.permute.xlu0 %761
      %763 = vrot.lane.b32.xlu0 %v712, 8
      %v764 = vpop.permute.xlu0 %763
      %765 = vrot.lane.b32.xlu0 %v713, 8
      %v766 = vpop.permute.xlu0 %765
      %767 = vrot.lane.b32.xlu0 %v714, 8
      %v768 = vpop.permute.xlu0 %767
      %769 = vrot.lane.b32.xlu0 %v715, 8
      %v770 = vpop.permute.xlu0 %769
      %771 = vrot.lane.b32.xlu0 %v716, 8
      %v772 = vpop.permute.xlu0 %771
      %773 = vrot.lane.b32.xlu0 %v717, 8
      %v774 = vpop.permute.xlu0 %773
      %775 = vrot.lane.b32.xlu0 %v718, 8
      %v776 = vpop.permute.xlu0 %775
      %777 = vrot.lane.b32.xlu0 %v719, 8
      %v778 = vpop.permute.xlu0 %777
      %779 = vrot.lane.b32.xlu0 %v720, 8
      %v780 = vpop.permute.xlu0 %779
      %vm781 = vcmask 31744
      %v784 = vsel %vm781, %v668, %v732
      %v787 = vsel %vm781, %v669, %v734
      %v790 = vsel %vm781, %v670, %v736
      %v793 = vsel %vm781, %v671, %v738
      %v796 = vsel %vm781, %v672, %v740
      %v799 = vsel %vm781, %v673, %v742
      %v802 = vsel %vm781, %v674, %v744
      %v805 = vsel %vm781, %v675, %v746
      %v808 = vsel %vm781, %v676, %v748
      %v811 = vsel %vm781, %v677, %v750
      %vm812 = vcmask 64512
      %v814 = vsel %vm812, %v784, %v762
      %v816 = vsel %vm812, %v787, %v764
      %v818 = vsel %vm812, %v790, %v766
      %v820 = vsel %vm812, %v793, %v768
      %v822 = vsel %vm812, %v796, %v770
      %v824 = vsel %vm812, %v799, %v772
      %v826 = vsel %vm812, %v802, %v774
      %v828 = vsel %vm812, %v805, %v776
      %v830 = vsel %vm812, %v808, %v778
      %v832 = vsel %vm812, %v811, %v780
      %v833 = vld [vmem:[%s3] sm:$0xf]
      %v834 = vld [vmem:[%s3 + $0x4] sm:$0x3]
      %s835 = scalar_lea.vmem %s3, 8
      %v836 = vld [vmem:[%s835] sm:$0xf]
      %v837 = vld [vmem:[%s835 + $0x4] sm:$0x3]
      %v840 = vunpack.c.l.b16 %v836
      %v841 = vunpack.c.l.b16 %v837
      %v842 = vpack.c.b16 %v841, %v840
      %vm843 = vcmask 97280
      %v844 = vsel %vm843, %v816, 0
      %v846 = vsel %vm843, %v818, 0
      %v848 = vsel %vm843, %v820, 0
      %v850 = vsel %vm843, %v822, 0
      %v852 = vsel %vm843, %v824, 0
      %v854 = vsel %vm843, %v826, 0
      %v856 = vsel %vm843, %v828, 0
      %v858 = vsel %vm843, %v830, 0
      %vm860 = vcmask 1045504
      %v862 = vsel %vm860, %v842, 0
      %864 = vmatprep.subr.bf16.mxu0 0
      %865 = vmatpush1.bf16.msra.mxu0 %v862
      %866 = vmatprep.subr.bf16.mxu0 0
      %867 = vmatpush1.bf16.msra.mxu0 0
      %868 = vmatprep.subr.bf16.mxu0 0
      %869 = vmatpush1.bf16.msra.mxu0 0
      %870 = vmatprep.subr.bf16.mxu0 0
      %871 = vmatpush1.bf16.msra.mxu0 0
      %872 = vmatprep.subr.bf16.mxu0 0
      %873 = vmatpush1.bf16.msra.mxu0 0
      %874 = vmatprep.subr.bf16.mxu0 0
      %875 = vmatpush1.bf16.msra.mxu0 0
      %876 = vmatprep.subr.bf16.mxu0 0
      %877 = vmatpush1.bf16.msra.mxu0 0
      %878 = vmatprep.subr.bf16.mxu0 0
      %879 = vmatpush1.bf16.msra.mxu0 0
      %880 = vmatprep.subr.bf16.mxu0 0
      %881 = vmatpush1.bf16.msra.mxu0 0
      %882 = vmatprep.subr.bf16.mxu0 0
      %883 = vmatpush1.bf16.msra.mxu0 0
      %884 = vmatprep.subr.bf16.mxu0 0
      %885 = vmatpush1.bf16.msra.mxu0 0
      %886 = vmatprep.subr.bf16.mxu0 0
      %887 = vmatpush1.bf16.msra.mxu0 0
      %888 = vmatprep.subr.bf16.mxu0 0
      %889 = vmatpush1.bf16.msra.mxu0 0
      %890 = vmatprep.subr.bf16.mxu0 0
      %891 = vmatpush1.bf16.msra.mxu0 0
      %892 = vmatprep.subr.bf16.mxu0 0
      %893 = vmatpush1.bf16.msra.mxu0 0
      %894 = vmatprep.subr.bf16.mxu0 0
      %895 = vmatpush1.bf16.msra.mxu0 0
      %896 = vmatprep.mubr.bf16.mxu0 0
      %897 = vmatmul.mubr.bf16.gmra.mrb[0].mxu0 %v844
      %v898 = vpop.f32.mrb[0].mxu0
      %v899 = vadd.f32 0.0, %v898
      %v900 = vpop.f32.mrb[0].mxu0
      %v901 = vpop.f32.mrb[0].mxu0
      %v902 = vadd.f32 0.0, %v901
      %v903 = vpop.f32.mrb[0].mxu0
      %904 = vmatprep.mubr.bf16.mxu0 0
      %905 = vmatmul.mubr.bf16.gmra.mrb[0].mxu0 %v846
      %v906 = vpop.f32.mrb[0].mxu0
      %v907 = vadd.f32 0.0, %v906
      %v908 = vpop.f32.mrb[0].mxu0
      %v909 = vpop.f32.mrb[0].mxu0
      %v910 = vadd.f32 0.0, %v909
      %v911 = vpop.f32.mrb[0].mxu0
      %912 = vmatprep.mubr.bf16.mxu0 0
      %913 = vmatmul.mubr.bf16.gmra.mrb[0].mxu0 %v848
      %v914 = vpop.f32.mrb[0].mxu0
      %v915 = vadd.f32 0.0, %v914
      %v916 = vpop.f32.mrb[0].mxu0
      %v917 = vpop.f32.mrb[0].mxu0
      %v918 = vadd.f32 0.0, %v917
      %v919 = vpop.f32.mrb[0].mxu0
      %920 = vmatprep.mubr.bf16.mxu0 0
      %921 = vmatmul.mubr.bf16.gmra.mrb[0].mxu0 %v850
      %v922 = vpop.f32.mrb[0].mxu0
      %v923 = vadd.f32 0.0, %v922
      %v924 = vpop.f32.mrb[0].mxu0
      %v925 = vpop.f32.mrb[0].mxu0
      %v926 = vadd.f32 0.0, %v925
      %v927 = vpop.f32.mrb[0].mxu0
      %928 = vmatprep.mubr.bf16.mxu0 0
      %929 = vmatmul.mubr.bf16.gmra.mrb[0].mxu0 %v852
      %v930 = vpop.f32.mrb[0].mxu0
      %v931 = vadd.f32 0.0, %v930
      %v932 = vpop.f32.mrb[0].mxu0
      %v933 = vpop.f32.mrb[0].mxu0
      %v934 = vadd.f32 0.0, %v933
      %v935 = vpop.f32.mrb[0].mxu0
      %936 = vmatprep.mubr.bf16.mxu0 0
      %937 = vmatmul.mubr.bf16.gmra.mrb[0].mxu0 %v854
      %v938 = vpop.f32.mrb[0].mxu0
      %v939 = vadd.f32 0.0, %v938
      %v940 = vpop.f32.mrb[0].mxu0
      %v941 = vpop.f32.mrb[0].mxu0
      %v942 = vadd.f32 0.0, %v941
      %v943 = vpop.f32.mrb[0].mxu0
      %944 = vmatprep.mubr.bf16.mxu0 0
      %945 = vmatmul.mubr.bf16.gmra.mrb[0].mxu0 %v856
      %v946 = vpop.f32.mrb[0].mxu0
      %v947 = vadd.f32 0.0, %v946
      %v948 = vpop.f32.mrb[0].mxu0
      %v949 = vpop.f32.mrb[0].mxu0
      %v950 = vadd.f32 0.0, %v949
      %v951 = vpop.f32.mrb[0].mxu0
      %952 = vmatprep.mubr.bf16.mxu0 0
      %953 = vmatmul.mubr.bf16.gmra.mrb[0].mxu0 %v858
      %v954 = vpop.f32.mrb[0].mxu0
      %v955 = vadd.f32 0.0, %v954
      %v956 = vpop.f32.mrb[0].mxu0
      %v957 = vpop.f32.mrb[0].mxu0
      %v958 = vadd.f32 0.0, %v957
      %v959 = vpop.f32.mrb[0].mxu0
      %960 = vdwg.mxu0
      %v963 = vunpack.c.l.b16 %v833
      %v964 = vunpack.c.l.b16 %v834
      %v965 = vpack.c.b16 %v964, %v963
      %v966 = vsel %vm843, %v814, 0
      %v969 = vsel %vm860, %v965, 0
      %971 = vmatprep.subr.bf16.mxu0 0
      %972 = vmatpush1.bf16.msra.mxu0 %v969
      %973 = vmatprep.subr.bf16.mxu0 0
      %974 = vmatpush1.bf16.msra.mxu0 0
      %975 = vmatprep.subr.bf16.mxu0 0
      %976 = vmatpush1.bf16.msra.mxu0 0
      %977 = vmatprep.subr.bf16.mxu0 0
      %978 = vmatpush1.bf16.msra.mxu0 0
      %979 = vmatprep.subr.bf16.mxu0 0
      %980 = vmatpush1.bf16.msra.mxu0 0
      %981 = vmatprep.subr.bf16.mxu0 0
      %982 = vmatpush1.bf16.msra.mxu0 0
      %983 = vmatprep.subr.bf16.mxu0 0
      %984 = vmatpush1.bf16.msra.mxu0 0
      %985 = vmatprep.subr.bf16.mxu0 0
      %986 = vmatpush1.bf16.msra.mxu0 0
      %987 = vmatprep.subr.bf16.mxu0 0
      %988 = vmatpush1.bf16.msra.mxu0 0
      %989 = vmatprep.subr.bf16.mxu0 0
      %990 = vmatpush1.bf16.msra.mxu0 0
      %991 = vmatprep.subr.bf16.mxu0 0
      %992 = vmatpush1.bf16.msra.mxu0 0
      %993 = vmatprep.subr.bf16.mxu0 0
      %994 = vmatpush1.bf16.msra.mxu0 0
      %995 = vmatprep.subr.bf16.mxu0 0
      %996 = vmatpush1.bf16.msra.mxu0 0
      %997 = vmatprep.subr.bf16.mxu0 0
      %998 = vmatpush1.bf16.msra.mxu0 0
      %999 = vmatprep.subr.bf16.mxu0 0
      %1000 = vmatpush1.bf16.msra.mxu0 0
      %1001 = vmatprep.subr.bf16.mxu0 0
      %1002 = vmatpush1.bf16.msra.mxu0 0
      %1003 = vmatprep.mubr.bf16.mxu0 0
      %1004 = vmatmul.mubr.bf16.gmra.mrb[0].mxu0 %v966
      %v1005 = vpop.f32.mrb[0].mxu0
      %v1006 = vadd.f32 %v899, %v1005
      %v1007 = vpop.f32.mrb[0].mxu0
      %v1008 = vpop.f32.mrb[0].mxu0
      %v1009 = vadd.f32 %v902, %v1008
      %v1010 = vpop.f32.mrb[0].mxu0
      %1011 = vmatprep.mubr.bf16.mxu0 0
      %1012 = vmatmul.mubr.bf16.gmra.mrb[0].mxu0 %v844
      %v1013 = vpop.f32.mrb[0].mxu0
      %v1014 = vadd.f32 %v907, %v1013
      %v1015 = vpop.f32.mrb[0].mxu0
      %v1016 = vpop.f32.mrb[0].mxu0
      %v1017 = vadd.f32 %v910, %v1016
      %v1018 = vpop.f32.mrb[0].mxu0
      %1019 = vmatprep.mubr.bf16.mxu0 0
      %1020 = vmatmul.mubr.bf16.gmra.mrb[0].mxu0 %v846
      %v1021 = vpop.f32.mrb[0].mxu0
      %v1022 = vadd.f32 %v915, %v1021
      %v1023 = vpop.f32.mrb[0].mxu0
      %v1024 = vpop.f32.mrb[0].mxu0
      %v1025 = vadd.f32 %v918, %v1024
      %v1026 = vpop.f32.mrb[0].mxu0
      %1027 = vmatprep.mubr.bf16.mxu0 0
      %1028 = vmatmul.mubr.bf16.gmra.mrb[0].mxu0 %v848
      %v1029 = vpop.f32.mrb[0].mxu0
      %v1030 = vadd.f32 %v923, %v1029
      %v1031 = vpop.f32.mrb[0].mxu0
      %v1032 = vpop.f32.mrb[0].mxu0
      %v1033 = vadd.f32 %v926, %v1032
      %v1034 = vpop.f32.mrb[0].mxu0
      %1035 = vmatprep.mubr.bf16.mxu0 0
      %1036 = vmatmul.mubr.bf16.gmra.mrb[0].mxu0 %v850
      %v1037 = vpop.f32.mrb[0].mxu0
      %v1038 = vadd.f32 %v931, %v1037
      %v1039 = vpop.f32.mrb[0].mxu0
      %v1040 = vpop.f32.mrb[0].mxu0
      %v1041 = vadd.f32 %v934, %v1040
      %v1042 = vpop.f32.mrb[0].mxu0
      %1043 = vmatprep.mubr.bf16.mxu0 0
      %1044 = vmatmul.mubr.bf16.gmra.mrb[0].mxu0 %v852
      %v1045 = vpop.f32.mrb[0].mxu0
      %v1046 = vadd.f32 %v939, %v1045
      %v1047 = vpop.f32.mrb[0].mxu0
      %v1048 = vpop.f32.mrb[0].mxu0
      %v1049 = vadd.f32 %v942, %v1048
      %v1050 = vpop.f32.mrb[0].mxu0
      %1051 = vmatprep.mubr.bf16.mxu0 0
      %1052 = vmatmul.mubr.bf16.gmra.mrb[0].mxu0 %v854
      %v1053 = vpop.f32.mrb[0].mxu0
      %v1054 = vadd.f32 %v947, %v1053
      %v1055 = vpop.f32.mrb[0].mxu0
      %v1056 = vpop.f32.mrb[0].mxu0
      %v1057 = vadd.f32 %v950, %v1056
      %v1058 = vpop.f32.mrb[0].mxu0
      %1059 = vmatprep.mubr.bf16.mxu0 0
      %1060 = vmatmul.mubr.bf16.gmra.mrb[0].mxu0 %v856
      %v1061 = vpop.f32.mrb[0].mxu0
      %v1062 = vadd.f32 %v955, %v1061
      %v1063 = vpop.f32.mrb[0].mxu0
      %v1064 = vpop.f32.mrb[0].mxu0
      %v1065 = vadd.f32 %v958, %v1064
      %v1066 = vpop.f32.mrb[0].mxu0
      %1067 = vdwg.mxu0
      %s1068 = scalar_lea.vmem %s3, 16
      %v1069 = vld [vmem:[%s1068] sm:$0xf]
      %v1070 = vld [vmem:[%s1068 + $0x4] sm:$0x3]
      %v1073 = vunpack.c.l.b16 %v1069
      %v1074 = vunpack.c.l.b16 %v1070
      %v1075 = vpack.c.b16 %v1074, %v1073
      %v1076 = vsel %vm843, %v832, 0
      %v1079 = vsel %vm860, %v1075, 0
      %1081 = vmatprep.subr.bf16.mxu0 0
      %1082 = vmatpush1.bf16.msra.mxu0 %v1079
      %1083 = vmatprep.subr.bf16.mxu0 0
      %1084 = vmatpush1.bf16.msra.mxu0 0
      %1085 = vmatprep.subr.bf16.mxu0 0
      %1086 = vmatpush1.bf16.msra.mxu0 0
      %1087 = vmatprep.subr.bf16.mxu0 0
      %1088 = vmatpush1.bf16.msra.mxu0 0
      %1089 = vmatprep.subr.bf16.mxu0 0
      %1090 = vmatpush1.bf16.msra.mxu0 0
      %1091 = vmatprep.subr.bf16.mxu0 0
      %1092 = vmatpush1.bf16.msra.mxu0 0
      %1093 = vmatprep.subr.bf16.mxu0 0
      %1094 = vmatpush1.bf16.msra.mxu0 0
      %1095 = vmatprep.subr.bf16.mxu0 0
      %1096 = vmatpush1.bf16.msra.mxu0 0
      %1097 = vmatprep.subr.bf16.mxu0 0
      %1098 = vmatpush1.bf16.msra.mxu0 0
      %1099 = vmatprep.subr.bf16.mxu0 0
      %1100 = vmatpush1.bf16.msra.mxu0 0
      %1101 = vmatprep.subr.bf16.mxu0 0
      %1102 = vmatpush1.bf16.msra.mxu0 0
      %1103 = vmatprep.subr.bf16.mxu0 0
      %1104 = vmatpush1.bf16.msra.mxu0 0
      %1105 = vmatprep.subr.bf16.mxu0 0
      %1106 = vmatpush1.bf16.msra.mxu0 0
      %1107 = vmatprep.subr.bf16.mxu0 0
      %1108 = vmatpush1.bf16.msra.mxu0 0
      %1109 = vmatprep.subr.bf16.mxu0 0
      %1110 = vmatpush1.bf16.msra.mxu0 0
      %1111 = vmatprep.subr.bf16.mxu0 0
      %1112 = vmatpush1.bf16.msra.mxu0 0
      %1113 = vmatprep.mubr.bf16.mxu0 0
      %1114 = vmatmul.mubr.bf16.gmra.mrb[0].mxu0 %v846
      %v1115 = vpop.f32.mrb[0].mxu0
      %v1116 = vadd.f32 0.0, %v1115
      %v1117 = vpop.f32.mrb[0].mxu0
      %v1118 = vpop.f32.mrb[0].mxu0
      %v1119 = vadd.f32 0.0, %v1118
      %v1120 = vpop.f32.mrb[0].mxu0
      %1121 = vmatprep.mubr.bf16.mxu0 0
      %1122 = vmatmul.mubr.bf16.gmra.mrb[0].mxu0 %v848
      %v1123 = vpop.f32.mrb[0].mxu0
      %v1124 = vadd.f32 0.0, %v1123
      %v1125 = vpop.f32.mrb[0].mxu0
      %v1126 = vpop.f32.mrb[0].mxu0
      %v1127 = vadd.f32 0.0, %v1126
      %v1128 = vpop.f32.mrb[0].mxu0
      %1129 = vmatprep.mubr.bf16.mxu0 0
      %1130 = vmatmul.mubr.bf16.gmra.mrb[0].mxu0 %v850
      %v1131 = vpop.f32.mrb[0].mxu0
      %v1132 = vadd.f32 0.0, %v1131
      %v1133 = vpop.f32.mrb[0].mxu0
      %v1134 = vpop.f32.mrb[0].mxu0
      %v1135 = vadd.f32 0.0, %v1134
      %v1136 = vpop.f32.mrb[0].mxu0
      %1137 = vmatprep.mubr.bf16.mxu0 0
      %1138 = vmatmul.mubr.bf16.gmra.mrb[0].mxu0 %v852
      %v1139 = vpop.f32.mrb[0].mxu0
      %v1140 = vadd.f32 0.0, %v1139
      %v1141 = vpop.f32.mrb[0].mxu0
      %v1142 = vpop.f32.mrb[0].mxu0
      %v1143 = vadd.f32 0.0, %v1142
      %v1144 = vpop.f32.mrb[0].mxu0
      %1145 = vmatprep.mubr.bf16.mxu0 0
      %1146 = vmatmul.mubr.bf16.gmra.mrb[0].mxu0 %v854
      %v1147 = vpop.f32.mrb[0].mxu0
      %v1148 = vadd.f32 0.0, %v1147
      %v1149 = vpop.f32.mrb[0].mxu0
      %v1150 = vpop.f32.mrb[0].mxu0
      %v1151 = vadd.f32 0.0, %v1150
      %v1152 = vpop.f32.mrb[0].mxu0
      %1153 = vmatprep.mubr.bf16.mxu0 0
      %1154 = vmatmul.mubr.bf16.gmra.mrb[0].mxu0 %v856
      %v1155 = vpop.f32.mrb[0].mxu0
      %v1156 = vadd.f32 0.0, %v1155
      %v1157 = vpop.f32.mrb[0].mxu0
      %v1158 = vpop.f32.mrb[0].mxu0
      %v1159 = vadd.f32 0.0, %v1158
      %v1160 = vpop.f32.mrb[0].mxu0
      %1161 = vmatprep.mubr.bf16.mxu0 0
      %1162 = vmatmul.mubr.bf16.gmra.mrb[0].mxu0 %v858
      %v1163 = vpop.f32.mrb[0].mxu0
      %v1164 = vadd.f32 0.0, %v1163
      %v1165 = vpop.f32.mrb[0].mxu0
      %v1166 = vpop.f32.mrb[0].mxu0
      %v1167 = vadd.f32 0.0, %v1166
      %v1168 = vpop.f32.mrb[0].mxu0
      %1169 = vmatprep.mubr.bf16.mxu0 0
      %1170 = vmatmul.mubr.bf16.gmra.mrb[0].mxu0 %v1076
      %v1171 = vpop.f32.mrb[0].mxu0
      %v1172 = vadd.f32 0.0, %v1171
      %v1173 = vpop.f32.mrb[0].mxu0
      %v1174 = vpop.f32.mrb[0].mxu0
      %v1175 = vadd.f32 0.0, %v1174
      %v1176 = vpop.f32.mrb[0].mxu0
      %1177 = vdwg.mxu0
      %v1178 = vadd.f32 %v1006, %v1116
      %v1179 = vadd.f32 %v1009, %v1119
      %v1180 = vadd.f32 %v1014, %v1124
      %v1181 = vadd.f32 %v1017, %v1127
      %v1182 = vadd.f32 %v1022, %v1132
      %v1183 = vadd.f32 %v1025, %v1135
      %v1184 = vadd.f32 %v1030, %v1140
      %v1185 = vadd.f32 %v1033, %v1143
      %v1186 = vadd.f32 %v1038, %v1148
      %v1187 = vadd.f32 %v1041, %v1151
      %v1188 = vadd.f32 %v1046, %v1156
      %v1189 = vadd.f32 %v1049, %v1159
      %v1190 = vadd.f32 %v1054, %v1164
      %v1191 = vadd.f32 %v1057, %v1167
      %v1192 = vadd.f32 %v1062, %v1172
      %v1193 = vadd.f32 %v1065, %v1175
      %v1194 = vsel %vm812, %v1178, 0.0
      %v1195 = vsel %vm812, %v1179, 0.0
      %v1196 = vadd.f32 %v1194, %v1195
      %v1197 = vsel %vm812, %v1180, 0.0
      %v1198 = vadd.f32 %v1196, %v1197
      %v1199 = vsel %vm812, %v1181, 0.0
      %v1200 = vadd.f32 %v1198, %v1199
      %v1201 = vsel %vm812, %v1182, 0.0
      %v1202 = vadd.f32 %v1200, %v1201
      %v1203 = vsel %vm812, %v1183, 0.0
      %v1204 = vadd.f32 %v1202, %v1203
      %v1205 = vsel %vm812, %v1184, 0.0
      %v1206 = vadd.f32 %v1204, %v1205
      %v1207 = vsel %vm812, %v1185, 0.0
      %v1208 = vadd.f32 %v1206, %v1207
      %v1209 = vsel %vm812, %v1186, 0.0
      %v1210 = vadd.f32 %v1208, %v1209
      %v1211 = vsel %vm812, %v1187, 0.0
      %v1212 = vadd.f32 %v1210, %v1211
      %v1213 = vsel %vm812, %v1188, 0.0
      %v1214 = vadd.f32 %v1212, %v1213
      %v1215 = vsel %vm812, %v1189, 0.0
      %v1216 = vadd.f32 %v1214, %v1215
      %v1217 = vsel %vm812, %v1190, 0.0
      %v1218 = vadd.f32 %v1216, %v1217
      %v1219 = vsel %vm812, %v1191, 0.0
      %v1220 = vadd.f32 %v1218, %v1219
      %v1221 = vsel %vm812, %v1192, 0.0
      %v1222 = vadd.f32 %v1220, %v1221
      %v1223 = vsel %vm812, %v1193, 0.0
      %v1224 = vadd.f32 %v1222, %v1223
      %v1225 = vrot.slane %v1224, 4
      %v1226 = vadd.f32 %v1224, %v1225
      %v1227 = vrot.slane %v1226, 2
      %v1228 = vadd.f32 %v1226, %v1227
      %v1229 = vrot.slane %v1228, 1
      %v1230 = vadd.f32 %v1228, %v1229
      %v1231 = vmul.f32 %v1178, %v1178
      %v1232 = vmul.f32 %v1179, %v1179
      %v1233 = vmul.f32 %v1180, %v1180
      %v1234 = vmul.f32 %v1181, %v1181
      %v1235 = vmul.f32 %v1182, %v1182
      %v1236 = vmul.f32 %v1183, %v1183
      %v1237 = vmul.f32 %v1184, %v1184
      %v1238 = vmul.f32 %v1185, %v1185
      %v1239 = vmul.f32 %v1186, %v1186
      %v1240 = vmul.f32 %v1187, %v1187
      %v1241 = vmul.f32 %v1188, %v1188
      %v1242 = vmul.f32 %v1189, %v1189
      %v1243 = vmul.f32 %v1190, %v1190
      %v1244 = vmul.f32 %v1191, %v1191
      %v1245 = vmul.f32 %v1192, %v1192
      %v1246 = vmul.f32 %v1193, %v1193
      %v1247 = vsel %vm812, %v1231, 0.0
      %v1248 = vsel %vm812, %v1232, 0.0
      %v1249 = vadd.f32 %v1247, %v1248
      %v1250 = vsel %vm812, %v1233, 0.0
      %v1251 = vadd.f32 %v1249, %v1250
      %v1252 = vsel %vm812, %v1234, 0.0
      %v1253 = vadd.f32 %v1251, %v1252
      %v1254 = vsel %vm812, %v1235, 0.0
      %v1255 = vadd.f32 %v1253, %v1254
      %v1256 = vsel %vm812, %v1236, 0.0
      %v1257 = vadd.f32 %v1255, %v1256
      %v1258 = vsel %vm812, %v1237, 0.0
      %v1259 = vadd.f32 %v1257, %v1258
      %v1260 = vsel %vm812, %v1238, 0.0
      %v1261 = vadd.f32 %v1259, %v1260
      %v1262 = vsel %vm812, %v1239, 0.0
      %v1263 = vadd.f32 %v1261, %v1262
      %v1264 = vsel %vm812, %v1240, 0.0
      %v1265 = vadd.f32 %v1263, %v1264
      %v1266 = vsel %vm812, %v1241, 0.0
      %v1267 = vadd.f32 %v1265, %v1266
      %v1268 = vsel %vm812, %v1242, 0.0
      %v1269 = vadd.f32 %v1267, %v1268
      %v1270 = vsel %vm812, %v1243, 0.0
      %v1271 = vadd.f32 %v1269, %v1270
      %v1272 = vsel %vm812, %v1244, 0.0
      %v1273 = vadd.f32 %v1271, %v1272
      %v1274 = vsel %vm812, %v1245, 0.0
      %v1275 = vadd.f32 %v1273, %v1274
      %v1276 = vsel %vm812, %v1246, 0.0
      %v1277 = vadd.f32 %v1275, %v1276
      %v1278 = vrot.slane %v1277, 4
      %v1279 = vadd.f32 %v1277, %v1278
      %v1280 = vrot.slane %v1279, 2
      %v1281 = vadd.f32 %v1279, %v1280
      %v1282 = vrot.slane %v1281, 1
      %v1283 = vadd.f32 %v1281, %v1282
      %vm1284 = vcmask 1040384
      %v1285 = vsel %vm1284, %v1230, %v1283
      %vm1286 = vcmask 58368
      %1287 = vst.msk [vmem:[%s467] sm:$0x3] %vm1286, %v1285
      %v1288 = vpack.c.bf16 %v1179, %v1178
      %v1289 = vpack.c.bf16 %v1181, %v1180
      %v1290 = vpack.c.bf16 %v1183, %v1182
      %v1291 = vpack.c.bf16 %v1185, %v1184
      %v1292 = vpack.c.bf16 %v1187, %v1186
      %v1293 = vpack.c.bf16 %v1189, %v1188
      %v1294 = vpack.c.bf16 %v1191, %v1190
      %v1295 = vpack.c.bf16 %v1193, %v1192
      %v1304 = vunpack.c.l.b16 %v1288
      %v1305 = vunpack.c.h.b16 %v1288
      %v1306 = vunpack.c.l.b16 %v1289
      %v1307 = vunpack.c.h.b16 %v1289
      %v1308 = vunpack.c.l.b16 %v1290
      %v1309 = vunpack.c.h.b16 %v1290
      %v1310 = vunpack.c.l.b16 %v1291
      %v1311 = vunpack.c.h.b16 %v1291
      %v1312 = vunpack.c.l.b16 %v1292
      %v1313 = vunpack.c.h.b16 %v1292
      %v1314 = vunpack.c.l.b16 %v1293
      %v1315 = vunpack.c.h.b16 %v1293
      %v1316 = vunpack.c.l.b16 %v1294
      %v1317 = vunpack.c.h.b16 %v1294
      %v1318 = vunpack.c.l.b16 %v1295
      %v1319 = vunpack.c.h.b16 %v1295
      %v1320 = vpack.c.b16 %v1304, %v1304
      %v1321 = vpack.c.b16 %v1305, %v1305
      %v1322 = vpack.c.b16 %v1306, %v1306
      %v1323 = vpack.c.b16 %v1307, %v1307
      %v1324 = vpack.c.b16 %v1308, %v1308
      %v1325 = vpack.c.b16 %v1309, %v1309
      %v1326 = vpack.c.b16 %v1310, %v1310
      %v1327 = vpack.c.b16 %v1311, %v1311
      %v1328 = vpack.c.b16 %v1312, %v1312
      %v1329 = vpack.c.b16 %v1313, %v1313
      %v1330 = vpack.c.b16 %v1314, %v1314
      %v1331 = vpack.c.b16 %v1315, %v1315
      %v1332 = vpack.c.b16 %v1316, %v1316
      %v1333 = vpack.c.b16 %v1317, %v1317
      %v1334 = vpack.c.b16 %v1318, %v1318
      %v1335 = vpack.c.b16 %v1319, %v1319
      %vm1352 = vcmask 60416
      %1353 = vst.msk [vmem:[%s458] sm:$0xf] %vm1352, %v1320
      %1354 = vst.msk [vmem:[%s458 + $0x4] sm:$0xf] %vm1352, %v1321
      %1355 = vst.msk [vmem:[%s458 + $0x8] sm:$0xf] %vm1352, %v1322
      %1356 = vst.msk [vmem:[%s458 + $0xc] sm:$0xf] %vm1352, %v1323
      %1357 = vst.msk [vmem:[%s458 + $0x10] sm:$0xf] %vm1352, %v1324
      %1358 = vst.msk [vmem:[%s458 + $0x14] sm:$0xf] %vm1352, %v1325
      %1359 = vst.msk [vmem:[%s458 + $0x18] sm:$0xf] %vm1352, %v1326
      %1360 = vst.msk [vmem:[%s458 + $0x1c] sm:$0xf] %vm1352, %v1327
      %1361 = vst.msk [vmem:[%s458 + $0x20] sm:$0xf] %vm1352, %v1328
      %1362 = vst.msk [vmem:[%s458 + $0x24] sm:$0xf] %vm1352, %v1329
      %1363 = vst.msk [vmem:[%s458 + $0x28] sm:$0xf] %vm1352, %v1330
      %1364 = vst.msk [vmem:[%s458 + $0x2c] sm:$0xf] %vm1352, %v1331
      %1365 = vst.msk [vmem:[%s458 + $0x30] sm:$0xf] %vm1352, %v1332
      %1366 = vst.msk [vmem:[%s458 + $0x34] sm:$0xf] %vm1352, %v1333
      %1367 = vst.msk [vmem:[%s458 + $0x38] sm:$0xf] %vm1352, %v1334
      %1368 = vst.msk [vmem:[%s458 + $0x3c] sm:$0xf] %vm1352, %v1335
      %s1369 = smul.u32 8, %s24
      %p1370 = scmp.lt.s32.totalorder %s23, 1
      %s1371 = scalar_select %p1370, %s23, 1
      %p1372 = scmp.lt.s32.totalorder %s1369, 15
      %s1373 = scalar_select %p1372, %s1369, 15
      %s1374 = smul.addr %s1373, 2
      %s1375 = smul.addr %s1371, 32
      %s1376 = sadd.s32 %s1374, %s1375
      %s1377 = smul.addr %s1376, 4
      %s1378 = scalar_lea.vmem %s6, %s1377
      %p1379 = scmp.lt.s32.totalorder %s23, 1
      %s1380 = scalar_select %p1379, %s23, 1
      %p1381 = scmp.lt.s32.totalorder %s24, 1
      %s1382 = scalar_select %p1381, %s24, 1
      %s1383 = smul.addr %s1380, 2
      %s1384 = sadd.s32 %s1382, %s1383
      %s1385 = smul.addr %s1384, 2
      %s1386 = scalar_lea.vmem %s7, %s1385
      // Predicated region
      $region45: #{residual_block_forward.4} parent=43 // pred_check
        %p1387 = pneg %p214
      $region46: #{residual_block_forward.4} parent=43 // pred_check_branch
        %1389 = sbr.rel (%p1387) target = $region48
      $region47: #{residual_block_forward.4} parent=43 // pred_region
        %s1390 = smul.u32 8, %s24
      $region48: #{residual_block_forward.4} parent=43 // pred_fallthru
        _
      // Predicated region
      $region49: #{residual_block_forward.4} parent=43 // pred_check
        %p1391 = pneg %p242
      $region50: #{residual_block_forward.4} parent=43 // pred_check_branch
        %1393 = sbr.rel (%p1391) target = $region52
      $region51: #{residual_block_forward.4} parent=43 // pred_region
        _
      $region52: #{residual_block_forward.4} parent=43 // pred_fallthru
        _
    $region44: #{residual_block_forward.4} parent=5 // pred_fallthru
      _
    %p1394 = scmp.le.s32.totalorder 2, %s14
    // Predicated region
    $region53: #{residual_block_forward.4} parent=5 // pred_check
      %p1395 = pneg %p1394
    $region54: #{residual_block_forward.4} parent=5 // pred_check_branch
      %1397 = sbr.rel (%p1395) target = $region56
    $region55: #{residual_block_forward.4} parent=5 // pred_region
      %s1398 = ssub.s32 %s14, 2
      // Predicated region
      $region57: #{residual_block_forward.4} parent=55 // pred_check
        %p1399 = pneg %p220
      $region58: #{residual_block_forward.4} parent=55 // pred_check_branch
        %1401 = sbr.rel (%p1399) target = $region60
      $region59: #{residual_block_forward.4} parent=55 // pred_region
        %s1402 = smul.u32 8, %s26
        %p1403 = scmp.lt.s32.totalorder %s25, 1
        %s1404 = scalar_select %p1403, %s25, 1
        %p1405 = scmp.lt.s32.totalorder %s1402, 15
        %s1406 = scalar_select %p1405, %s1402, 15
        %s1407 = smul.addr %s1406, 2
        %s1408 = smul.addr %s1404, 32
        %s1409 = sadd.s32 %s1407, %s1408
        %s1410 = smul.addr %s1409, 4
        %s1411 = scalar_lea.vmem %s6, %s1410
      $region60: #{residual_block_forward.4} parent=55 // pred_fallthru
        _
      // Predicated region
      $region61: #{residual_block_forward.4} parent=55 // pred_check
        %p1412 = pneg %p248
      $region62: #{residual_block_forward.4} parent=55 // pred_check_branch
        %1414 = sbr.rel (%p1412) target = $region64
      $region63: #{residual_block_forward.4} parent=55 // pred_region
        %p1415 = scmp.lt.s32.totalorder %s25, 1
        %s1416 = scalar_select %p1415, %s25, 1
        %p1417 = scmp.lt.s32.totalorder %s26, 1
        %s1418 = scalar_select %p1417, %s26, 1
        %s1419 = smul.addr %s1416, 2
        %s1420 = sadd.s32 %s1418, %s1419
        %s1421 = smul.addr %s1420, 2
        %s1422 = scalar_lea.vmem %s7, %s1421
      $region64: #{residual_block_forward.4} parent=55 // pred_fallthru
        _
    $region56: #{residual_block_forward.4} parent=5 // pred_fallthru
      _
  $region6: #{residual_block_forward.4} parent=0 // loop_footer
    %s18 = sadd.s32 1, %s14
  $region7: #{residual_block_forward.4} parent=0 // loop_footer_branch
    %13 = sbr.rel target = $region3
  $region8: #{residual_block_forward.4} parent=0 // loop_exit
    _

// kernel: residual_block_forward.5
$region0: #{residual_block_forward.5}
  #allocation0 [shape = 'u32[]', space=smem, size = 0x4, offset = 0x4, fixed_abs, tag = 'smem constant byte address 0x4 - core index']
  #allocation1 [shape = 'u32[144,128]{1,0:T(1,128)}', space=vmem, size = 0x12000, scoped, tag = 'internal scratch']
  %s0 = inlined_call_operand.vmem [shape: bf16[2,16,16,8], index: 0, kind: input, shape index: {}, may-alias: {0,1,2}]
  %s1 = inlined_call_operand.vmem [shape: bf16[2,16,16,8], index: 1, kind: input, shape index: {}, may-alias: {0,1,2}]
  %s2 = inlined_call_operand.vmem [shape: bf16[2,16,16,8], index: 2, kind: input, shape index: {}, may-alias: {0,1,2}]
  %s3 = inlined_call_operand.vmem [shape: bf16[3,24,8], index: 3, kind: input, shape index: {}]
  %s4 = inlined_call_operand.vmem [shape: f32[1,8], index: 4, kind: input, shape index: {}]
  %s5 = inlined_call_operand.vmem [shape: f32[1,8], index: 5, kind: input, shape index: {}]
  %s6 = inlined_call_operand.vmem [shape: f32[2,16,16,4], index: 6, kind: input, shape index: {}]
  %s7 = inlined_call_operand.vmem [shape: bf16[4,8], index: 7, kind: input, shape index: {}]
  %s8 = inlined_call_operand.vmem [shape: f32[2,16,16,8], index: 8, kind: output, shape index: {}]
  %s9 = sld [smem:[#allocation0]]
  $region65: #{residual_block_forward.5} parent=0
    _
  %s11 = ssub.s32 1, %s9
  %s12 = scalar_select 0, %s11, %s9
  loop: start=0, step=1, limit=6
  $region2: #{residual_block_forward.5} parent=0 // loop_pre_header
    _
  $region3: #{residual_block_forward.5} parent=0 // loop_header
    %s14 = sphi 0, %s18
    %p15 = scmp.ge.s32.totalorder %s14, 6
    %s21 = sphi 0, %s33
    %s22 = sphi 0, %s29
    %s23 = sphi 0, %s21
    %s24 = sphi 0, %s22
    %s25 = sphi 0, %s23
    %s26 = sphi 0, %s24
    %s38 = sphi 0, %s40
    %s41 = sphi 0, %s38
    %s42 = sphi 0, %s41
    %s58 = sphi 0, %s42
    %s74 = sphi 0, %s76
    %s77 = sphi 0, %s74
    %s78 = sphi 0, %s77
    %s94 = sphi 0, %s78
    %s110 = sphi 0, %s112
    %s113 = sphi 0, %s110
    %s114 = sphi 0, %s113
    %s130 = sphi 0, %s114
    %s134 = sphi 0, %s134
    %s136 = sphi 0, %s134
    %s137 = sphi 0, %s136
    %s151 = sphi 0, %s137
    %s155 = sphi 0, %s155
    %s157 = sphi 0, %s155
    %s158 = sphi 0, %s157
    %s172 = sphi 0, %s158
    %s176 = sphi 0, %s176
    %s178 = sphi 0, %s176
    %s179 = sphi 0, %s178
    %s193 = sphi 0, %s179
    %s201 = sphi 0, %s203
    %s204 = sphi 0, %s201
    %s205 = sphi 0, %s204
    %s221 = sphi 0, %s205
    %s225 = sphi 0, %s225
    %s227 = sphi 0, %s225
    %s228 = sphi 0, %s227
    %s242 = sphi 0, %s228
    %s250 = sphi 0, %s252
    %s253 = sphi 0, %s250
    %s254 = sphi 0, %s253
    %s270 = sphi 0, %s254
  $region4: #{residual_block_forward.5} parent=0 // loop_header_branch
    %17 = sbr.rel (%p15) target = $region8
  $region5: #{residual_block_forward.5} parent=0 // loop_body
    %s19 = ssub.s32 %s14, 1
    %s20 = ssub.s32 %s14, 2
    %s27 = sadd.s32 1, %s22
    %p28 = scmp.ge.s32.totalorder %s27, 2
    %s29 = scalar_select %p28, 0, %s27
    %s30 = sadd.s32 1, %s21
    %s31 = scalar_select %p28, %s30, %s21
    %p32 = scmp.ge.s32.totalorder %s31, 2
    %s33 = scalar_select %p32, 0, %s31
    %s34 = ssub.s32 %s21, %s33
    %s35 = ssub.s32 %s22, %s29
    %s36 = sor.u32 %s34, %s35
    %p37 = scmp.eq.s32.totalorder %s36, 0
    %s39 = sadd.s32 %s38, 1
    %s40 = scalar_select %p37, %s38, %s39
    %p43 = pneg %p37
    %p44 = scmp.eq.s32.totalorder %s14, 3
    %p45 = por %p43, %p44
    %p46 = scmp.ne.s32.totalorder %s38, %s41
    %p47 = scmp.eq.s32.totalorder %s14, 0
    %p48 = por %p46, %p47
    %p49 = scmp.ne.s32.totalorder %s38, %s41
    %p50 = scmp.eq.s32.totalorder %s19, 3
    %p51 = por %p49, %p50
    %p52 = scmp.ne.s32.totalorder %s41, %s42
    %p53 = scmp.eq.s32.totalorder %s19, 0
    %p54 = por %p52, %p53
    %p55 = scmp.ne.s32.totalorder %s41, %s42
    %p56 = scmp.eq.s32.totalorder %s20, 3
    %p57 = por %p55, %p56
    %p59 = scmp.ne.s32.totalorder %s42, %s58
    %p60 = scmp.eq.s32.totalorder %s20, 0
    %p61 = por %p59, %p60
    %s62 = smul.u32 %s22, 8
    %s63 = ssub.s32 %s62, 1
    %p64 = scmp.gt.s32.totalorder %s63, 0
    %s65 = scalar_select %p64, %s63, 0
    %s66 = smul.u32 %s29, 8
    %s67 = ssub.s32 %s66, 1
    %p68 = scmp.gt.s32.totalorder %s67, 0
    %s69 = scalar_select %p68, %s67, 0
    %s70 = ssub.s32 %s21, %s33
    %s71 = ssub.s32 %s65, %s69
    %s72 = sor.u32 %s70, %s71
    %p73 = scmp.eq.s32.totalorder %s72, 0
    %s75 = sadd.s32 %s74, 1
    %s76 = scalar_select %p73, %s74, %s75
    %p79 = pneg %p73
    %p80 = scmp.eq.s32.totalorder %s14, 3
    %p81 = por %p79, %p80
    %p82 = scmp.ne.s32.totalorder %s74, %s77
    %p83 = scmp.eq.s32.totalorder %s14, 0
    %p84 = por %p82, %p83
    %p85 = scmp.ne.s32.totalorder %s74, %s77
    %p86 = scmp.eq.s32.totalorder %s19, 3
    %p87 = por %p85, %p86
    %p88 = scmp.ne.s32.totalorder %s77, %s78
    %p89 = scmp.eq.s32.totalorder %s19, 0
    %p90 = por %p88, %p89
    %p91 = scmp.ne.s32.totalorder %s77, %s78
    %p92 = scmp.eq.s32.totalorder %s20, 3
    %p93 = por %p91, %p92
    %p95 = scmp.ne.s32.totalorder %s78, %s94
    %p96 = scmp.eq.s32.totalorder %s20, 0
    %p97 = por %p95, %p96
    %s98 = sadd.s32 %s22, 1
    %s99 = smul.u32 %s98, 8
    %p100 = scmp.lt.s32.totalorder %s99, 15
    %s101 = scalar_select %p100, %s99, 15
    %s102 = sadd.s32 %s29, 1
    %s103 = smul.u32 %s102, 8
    %p104 = scmp.lt.s32.totalorder %s103, 15
    %s105 = scalar_select %p104, %s103, 15
    %s106 = ssub.s32 %s21, %s33
    %s107 = ssub.s32 %s101, %s105
    %s108 = sor.u32 %s106, %s107
    %p109 = scmp.eq.s32.totalorder %s108, 0
    %s111 = sadd.s32 %s110, 1
    %s112 = scalar_select %p109, %s110, %s111
    %p115 = pneg %p109
    %p116 = scmp.eq.s32.totalorder %s14, 3
    %p117 = por %p115, %p116
    %p118 = scmp.ne.s32.totalorder %s110, %s113
    %p119 = scmp.eq.s32.totalorder %s14, 0
    %p120 = por %p118, %p119
    %p121 = scmp.ne.s32.totalorder %s110, %s113
    %p122 = scmp.eq.s32.totalorder %s19, 3
    %p123 = por %p121, %p122
    %p124 = scmp.ne.s32.totalorder %s113, %s114
    %p125 = scmp.eq.s32.totalorder %s19, 0
    %p126 = por %p124, %p125
    %p127 = scmp.ne.s32.totalorder %s113, %s114
    %p128 = scmp.eq.s32.totalorder %s20, 3
    %p129 = por %p127, %p128
    %p131 = scmp.ne.s32.totalorder %s114, %s130
    %p132 = scmp.eq.s32.totalorder %s20, 0
    %p133 = por %p131, %p132
    %s135 = sadd.s32 %s134, 1
    %p138 = scmp.eq.s32.totalorder %s14, 3
    %p139 = scmp.ne.s32.totalorder %s134, %s136
    %p140 = scmp.eq.s32.totalorder %s14, 0
    %p141 = por %p139, %p140
    %p142 = scmp.ne.s32.totalorder %s134, %s136
    %p143 = scmp.eq.s32.totalorder %s19, 3
    %p144 = por %p142, %p143
    %p145 = scmp.ne.s32.totalorder %s136, %s137
    %p146 = scmp.eq.s32.totalorder %s19, 0
    %p147 = por %p145, %p146
    %p148 = scmp.ne.s32.totalorder %s136, %s137
    %p149 = scmp.eq.s32.totalorder %s20, 3
    %p150 = por %p148, %p149
    %p152 = scmp.ne.s32.totalorder %s137, %s151
    %p153 = scmp.eq.s32.totalorder %s20, 0
    %p154 = por %p152, %p153
    %s156 = sadd.s32 %s155, 1
    %p159 = scmp.eq.s32.totalorder %s14, 3
    %p160 = scmp.ne.s32.totalorder %s155, %s157
    %p161 = scmp.eq.s32.totalorder %s14, 0
    %p162 = por %p160, %p161
    %p163 = scmp.ne.s32.totalorder %s155, %s157
    %p164 = scmp.eq.s32.totalorder %s19, 3
    %p165 = por %p163, %p164
    %p166 = scmp.ne.s32.totalorder %s157, %s158
    %p167 = scmp.eq.s32.totalorder %s19, 0
    %p168 = por %p166, %p167
    %p169 = scmp.ne.s32.totalorder %s157, %s158
    %p170 = scmp.eq.s32.totalorder %s20, 3
    %p171 = por %p169, %p170
    %p173 = scmp.ne.s32.totalorder %s158, %s172
    %p174 = scmp.eq.s32.totalorder %s20, 0
    %p175 = por %p173, %p174
    %s177 = sadd.s32 %s176, 1
    %p180 = scmp.eq.s32.totalorder %s14, 3
    %p181 = scmp.ne.s32.totalorder %s176, %s178
    %p182 = scmp.eq.s32.totalorder %s14, 0
    %p183 = por %p181, %p182
    %p184 = scmp.ne.s32.totalorder %s176, %s178
    %p185 = scmp.eq.s32.totalorder %s19, 3
    %p186 = por %p184, %p185
    %p187 = scmp.ne.s32.totalorder %s178, %s179
    %p188 = scmp.eq.s32.totalorder %s19, 0
    %p189 = por %p187, %p188
    %p190 = scmp.ne.s32.totalorder %s178, %s179
    %p191 = scmp.eq.s32.totalorder %s20, 3
    %p192 = por %p190, %p191
    %p194 = scmp.ne.s32.totalorder %s179, %s193
    %p195 = scmp.eq.s32.totalorder %s20, 0
    %p196 = por %p194, %p195
    %s197 = ssub.s32 %s21, %s33
    %s198 = ssub.s32 %s22, %s29
    %s199 = sor.u32 %s197, %s198
    %p200 = scmp.eq.s32.totalorder %s199, 0
    %s202 = sadd.s32 %s201, 1
    %s203 = scalar_select %p200, %s201, %s202
    %p206 = pneg %p200
    %p207 = scmp.eq.s32.totalorder %s14, 3
    %p208 = por %p206, %p207
    %p209 = scmp.ne.s32.totalorder %s201, %s204
    %p210 = scmp.eq.s32.totalorder %s14, 0
    %p211 = por %p209, %p210
    %p212 = scmp.ne.s32.totalorder %s201, %s204
    %p213 = scmp.eq.s32.totalorder %s19, 3
    %p214 = por %p212, %p213
    %p215 = scmp.ne.s32.totalorder %s204, %s205
    %p216 = scmp.eq.s32.totalorder %s19, 0
    %p217 = por %p215, %p216
    %p218 = scmp.ne.s32.totalorder %s204, %s205
    %p219 = scmp.eq.s32.totalorder %s20, 3
    %p220 = por %p218, %p219
    %p222 = scmp.ne.s32.totalorder %s205, %s221
    %p223 = scmp.eq.s32.totalorder %s20, 0
    %p224 = por %p222, %p223
    %s226 = sadd.s32 %s225, 1
    %p229 = scmp.eq.s32.totalorder %s14, 3
    %p230 = scmp.ne.s32.totalorder %s225, %s227
    %p231 = scmp.eq.s32.totalorder %s14, 0
    %p232 = por %p230, %p231
    %p233 = scmp.ne.s32.totalorder %s225, %s227
    %p234 = scmp.eq.s32.totalorder %s19, 3
    %p235 = por %p233, %p234
    %p236 = scmp.ne.s32.totalorder %s227, %s228
    %p237 = scmp.eq.s32.totalorder %s19, 0
    %p238 = por %p236, %p237
    %p239 = scmp.ne.s32.totalorder %s227, %s228
    %p240 = scmp.eq.s32.totalorder %s20, 3
    %p241 = por %p239, %p240
    %p243 = scmp.ne.s32.totalorder %s228, %s242
    %p244 = scmp.eq.s32.totalorder %s20, 0
    %p245 = por %p243, %p244
    %s246 = ssub.s32 %s21, %s33
    %s247 = ssub.s32 %s22, %s29
    %s248 = sor.u32 %s246, %s247
    %p249 = scmp.eq.s32.totalorder %s248, 0
    %s251 = sadd.s32 %s250, 1
    %s252 = scalar_select %p249, %s250, %s251
    %p255 = pneg %p249
    %p256 = scmp.eq.s32.totalorder %s14, 3
    %p257 = por %p255, %p256
    %p258 = scmp.ne.s32.totalorder %s250, %s253
    %p259 = scmp.eq.s32.totalorder %s14, 0
    %p260 = por %p258, %p259
    %p261 = scmp.ne.s32.totalorder %s250, %s253
    %p262 = scmp.eq.s32.totalorder %s19, 3
    %p263 = por %p261, %p262
    %p264 = scmp.ne.s32.totalorder %s253, %s254
    %p265 = scmp.eq.s32.totalorder %s19, 0
    %p266 = por %p264, %p265
    %p267 = scmp.ne.s32.totalorder %s253, %s254
    %p268 = scmp.eq.s32.totalorder %s20, 3
    %p269 = por %p267, %p268
    %p271 = scmp.ne.s32.totalorder %s254, %s270
    %p272 = scmp.eq.s32.totalorder %s20, 0
    %p273 = por %p271, %p272
    %p274 = scmp.le.s32.totalorder 1, %s14
    %p275 = scmp.lt.s32.totalorder %s14, 5
    %p276 = pnand %p274, %p275
    %p277 = pneg %p276
    // Predicated region
    $region9: #{residual_block_forward.5} parent=5 // pred_check
      _
    $region10: #{residual_block_forward.5} parent=5 // pred_check_branch
      %279 = sbr.rel (%p276) target = $region12
    $region11: #{residual_block_forward.5} parent=5 // pred_region
      %s280 = ssub.s32 %s14, 1
      // Predicated region
      $region13: #{residual_block_forward.5} parent=11 // pred_check
        %p281 = pneg %p147
      $region14: #{residual_block_forward.5} parent=11 // pred_check_branch
        %283 = sbr.rel (%p281) target = $region16
      $region15: #{residual_block_forward.5} parent=11 // pred_region
        _
      $region16: #{residual_block_forward.5} parent=11 // pred_fallthru
        _
      // Predicated region
      $region17: #{residual_block_forward.5} parent=11 // pred_check
        %p284 = pneg %p168
      $region18: #{residual_block_forward.5} parent=11 // pred_check_branch
        %286 = sbr.rel (%p284) target = $region20
      $region19: #{residual_block_forward.5} parent=11 // pred_region
        _
      $region20: #{residual_block_forward.5} parent=11 // pred_fallthru
        _
      // Predicated region
      $region21: #{residual_block_forward.5} parent=11 // pred_check
        %p287 = pneg %p189
      $region22: #{residual_block_forward.5} parent=11 // pred_check_branch
        %289 = sbr.rel (%p287) target = $region24
      $region23: #{residual_block_forward.5} parent=11 // pred_region
        _
      $region24: #{residual_block_forward.5} parent=11 // pred_fallthru
        _
      // Predicated region
      $region25: #{residual_block_forward.5} parent=11 // pred_check
        %p290 = pneg %p238
      $region26: #{residual_block_forward.5} parent=11 // pred_check_branch
        %292 = sbr.rel (%p290) target = $region28
      $region27: #{residual_block_forward.5} parent=11 // pred_region
        _
      $region28: #{residual_block_forward.5} parent=11 // pred_fallthru
        _
    $region12: #{residual_block_forward.5} parent=5 // pred_fallthru
      _
    %p293 = scmp.lt.s32.totalorder %s14, 4
    // Predicated region
    $region29: #{residual_block_forward.5} parent=5 // pred_check
      %p294 = pneg %p293
    $region30: #{residual_block_forward.5} parent=5 // pred_check_branch
      %296 = sbr.rel (%p294) target = $region32
    $region31: #{residual_block_forward.5} parent=5 // pred_region
      // Predicated region
      $region33: #{residual_block_forward.5} parent=31 // pred_check
        %p297 = pneg %p48
      $region34: #{residual_block_forward.5} parent=31 // pred_check_branch
        %299 = sbr.rel (%p297) target = $region36
      $region35: #{residual_block_forward.5} parent=31 // pred_region
        %s300 = smul.u32 8, %s22
        %p301 = scmp.lt.s32.totalorder %s21, 1
        %s302 = scalar_select %p301, %s21, 1
        %p303 = scmp.lt.s32.totalorder %s300, 15
        %s304 = scalar_select %p303, %s300, 15
        %s305 = smul.addr %s304, 2
        %s306 = smul.addr %s302, 32
        %s307 = sadd.s32 %s305, %s306
        %s308 = smul.addr %s307, 4
        %s309 = scalar_lea.vmem %s0, %s308
        %s310 = smul.u32 8, %s22
      $region36: #{residual_block_forward.5} parent=31 // pred_fallthru
        _
      // Predicated region
      $region37: #{residual_block_forward.5} parent=31 // pred_check
        %p311 = pneg %p84
      $region38: #{residual_block_forward.5} parent=31 // pred_check_branch
        %313 = sbr.rel (%p311) target = $region40
      $region39: #{residual_block_forward.5} parent=31 // pred_region
        %s314 = smul.u32 %s22, 8
        %s315 = ssub.s32 %s314, 1
        %p316 = scmp.gt.s32.totalorder %s315, 0
        %s317 = scalar_select %p316, %s315, 0
        %p318 = scmp.lt.s32.totalorder %s21, 1
        %s319 = scalar_select %p318, %s21, 1
        %p320 = scmp.lt.s32.totalorder %s317, 15
        %s321 = scalar_select %p320, %s317, 15
        %s322 = smul.addr %s321, 2
        %s323 = smul.addr %s319, 32
        %s324 = sadd.s32 %s322, %s323
        %s325 = smul.addr %s324, 4
        %s326 = scalar_lea.vmem %s1, %s325
        %s327 = smul.u32 %s22, 8
        %s328 = ssub.s32 %s327, 1
        %p329 = scmp.gt.s32.totalorder %s328, 0
        %s330 = scalar_select %p329, %s328, 0
      $region40: #{residual_block_forward.5} parent=31 // pred_fallthru
        _
      // Predicated region
      $region41: #{residual_block_forward.5} parent=31 // pred_check
        %p331 = pneg %p120
      $region42: #{residual_block_forward.5} parent=31 // pred_check_branch
        %333 = sbr.rel (%p331) target = $region44
      $region43: #{residual_block_forward.5} parent=31 // pred_region
        %s334 = sadd.s32 %s22, 1
        %s335 = smul.u32 %s334, 8
        %p336 = scmp.lt.s32.totalorder %s335, 15
        %s337 = scalar_select %p336, %s335, 15
        %p338 = scmp.lt.s32.totalorder %s21, 1
        %s339 = scalar_select %p338, %s21, 1
        %p340 = scmp.lt.s32.totalorder %s337, 15
        %s341 = scalar_select %p340, %s337, 15
        %s342 = smul.addr %s341, 2
        %s343 = smul.addr %s339, 32
        %s344 = sadd.s32 %s342, %s343
        %s345 = smul.addr %s344, 4
        %s346 = scalar_lea.vmem %s2, %s345
        %s347 = sadd.s32 %s22, 1
        %s348 = smul.u32 %s347, 8
        %p349 = scmp.lt.s32.totalorder %s348, 15
        %s350 = scalar_select %p349, %s348, 15
      $region44: #{residual_block_forward.5} parent=31 // pred_fallthru
        _
      // Predicated region
      $region45: #{residual_block_forward.5} parent=31 // pred_check
        %p351 = pneg %p211
      $region46: #{residual_block_forward.5} parent=31 // pred_check_branch
        %353 = sbr.rel (%p351) target = $region48
      $region47: #{residual_block_forward.5} parent=31 // pred_region
        %s354 = smul.u32 8, %s22
        %p355 = scmp.lt.s32.totalorder %s21, 1
        %s356 = scalar_select %p355, %s21, 1
        %p357 = scmp.lt.s32.totalorder %s354, 15
        %s358 = scalar_select %p357, %s354, 15
        %s359 = smul.addr %s358, 2
        %s360 = smul.addr %s356, 32
        %s361 = sadd.s32 %s359, %s360
        %s362 = smul.addr %s361, 8
        %s363 = scalar_lea.vmem %s6, %s362
        %s364 = smul.u32 8, %s22
      $region48: #{residual_block_forward.5} parent=31 // pred_fallthru
        _
    $region32: #{residual_block_forward.5} parent=5 // pred_fallthru
      _
    %p365 = scmp.le.s32.totalorder 1, %s14
    %p366 = scmp.lt.s32.totalorder %s14, 5
    %p367 = pnand %p365, %p366
    %p368 = pneg %p367
    // Predicated region
    $region49: #{residual_block_forward.5} parent=5 // pred_check
      _
    $region50: #{residual_block_forward.5} parent=5 // pred_check_branch
      %370 = sbr.rel (%p367) target = $region52
    $region51: #{residual_block_forward.5} parent=5 // pred_region
      %s371 = ssub.s32 %s14, 1
      %s372 = smul.u32 8, %s24
      %p373 = scmp.lt.s32.totalorder %s23, 1
      %s374 = scalar_select %p373, %s23, 1
      %p375 = scmp.lt.s32.totalorder %s372, 15
      %s376 = scalar_select %p375, %s372, 15
      %s377 = smul.addr %s376, 2
      %s378 = smul.addr %s374, 32
      %s379 = sadd.s32 %s377, %s378
      %s380 = smul.addr %s379, 4
      %s381 = scalar_lea.vmem %s0, %s380
      %p382 = pneg %p54
      %p383 = pneg %p51
      %s384 = smul.u32 %s24, 8
      %s385 = ssub.s32 %s384, 1
      %p386 = scmp.gt.s32.totalorder %s385, 0
      %s387 = scalar_select %p386, %s385, 0
      %p388 = scmp.lt.s32.totalorder %s23, 1
      %s389 = scalar_select %p388, %s23, 1
      %p390 = scmp.lt.s32.totalorder %s387, 15
      %s391 = scalar_select %p390, %s387, 15
      %s392 = smul.addr %s391, 2
      %s393 = smul.addr %s389, 32
      %s394 = sadd.s32 %s392, %s393
      %s395 = smul.addr %s394, 4
      %s396 = scalar_lea.vmem %s1, %s395
      %p397 = pneg %p90
      %p398 = pneg %p87
      %s399 = sadd.s32 %s24, 1
      %s400 = smul.u32 %s399, 8
      %p401 = scmp.lt.s32.totalorder %s400, 15
      %s402 = scalar_select %p401, %s400, 15
      %p403 = scmp.lt.s32.totalorder %s23, 1
      %s404 = scalar_select %p403, %s23, 1
      %p405 = scmp.lt.s32.totalorder %s402, 15
      %s406 = scalar_select %p405, %s402, 15
      %s407 = smul.addr %s406, 2
      %s408 = smul.addr %s404, 32
      %s409 = sadd.s32 %s407, %s408
      %s410 = smul.addr %s409, 4
      %s411 = scalar_lea.vmem %s2, %s410
      %p412 = pneg %p126
      %p413 = pneg %p123
      %p414 = pneg %p147
      %p415 = pneg %p144
      %p416 = pneg %p168
      %p417 = pneg %p165
      %p418 = pneg %p189
      %p419 = pneg %p186
      %s420 = smul.u32 8, %s24
      %p421 = scmp.lt.s32.totalorder %s23, 1
      %s422 = scalar_select %p421, %s23, 1
      %p423 = scmp.lt.s32.totalorder %s420, 15
      %s424 = scalar_select %p423, %s420, 15
      %s425 = smul.addr %s424, 2
      %s426 = smul.addr %s422, 32
      %s427 = sadd.s32 %s425, %s426
      %s428 = smul.addr %s427, 8
      %s429 = scalar_lea.vmem %s6, %s428
      %p430 = pneg %p217
      %p431 = pneg %p214
      %p432 = pneg %p238
      %p433 = pneg %p235
      %p434 = pneg %p266
      %p435 = pneg %p263
      %s436 = smul.u32 8, %s24
      %p437 = scmp.lt.s32.totalorder %s23, 1
      %s438 = scalar_select %p437, %s23, 1
      %p439 = scmp.lt.s32.totalorder %s436, 15
      %s440 = scalar_select %p439, %s436, 15
      %s441 = smul.addr %s440, 2
      %s442 = smul.addr %s438, 32
      %s443 = sadd.s32 %s441, %s442
      %s444 = smul.addr %s443, 8
      %s445 = scalar_lea.vmem %s8, %s444
      %s446 = smul.u32 8, %s24
      %p447 = scmp.lt.s32.totalorder %s23, 1
      %s448 = scalar_select %p447, %s23, 1
      %p449 = scmp.lt.s32.totalorder %s446, 15
      %s450 = scalar_select %p449, %s446, 15
      %s451 = smul.addr %s450, 2
      %s452 = smul.addr %s448, 32
      %s453 = sadd.s32 %s451, %s452
      %s454 = smul.addr %s453, 4
      %s455 = scalar_lea.vmem %s0, %s454
      %s456 = smul.u32 8, %s24
      %s457 = smul.u32 %s24, 8
      %s458 = ssub.s32 %s457, 1
      %p459 = scmp.gt.s32.totalorder %s458, 0
      %s460 = scalar_select %p459, %s458, 0
      %p461 = scmp.lt.s32.totalorder %s23, 1
      %s462 = scalar_select %p461, %s23, 1
      %p463 = scmp.lt.s32.totalorder %s460, 15
      %s464 = scalar_select %p463, %s460, 15
      %s465 = smul.addr %s464, 2
      %s466 = smul.addr %s462, 32
      %s467 = sadd.s32 %s465, %s466
      %s468 = smul.addr %s467, 4
      %s469 = scalar_lea.vmem %s1, %s468
      %s470 = smul.u32 %s24, 8
      %s471 = ssub.s32 %s470, 1
      %p472 = scmp.gt.s32.totalorder %s471, 0
      %s473 = scalar_select %p472, %s471, 0
      %s474 = sadd.s32 %s24, 1
      %s475 = smul.u32 %s474, 8
      %p476 = scmp.lt.s32.totalorder %s475, 15
      %s477 = scalar_select %p476, %s475, 15
      %p478 = scmp.lt.s32.totalorder %s23, 1
      %s479 = scalar_select %p478, %s23, 1
      %p480 = scmp.lt.s32.totalorder %s477, 15
      %s481 = scalar_select %p480, %s477, 15
      %s482 = smul.addr %s481, 2
      %s483 = smul.addr %s479, 32
      %s484 = sadd.s32 %s482, %s483
      %s485 = smul.addr %s484, 4
      %s486 = scalar_lea.vmem %s2, %s485
      %s487 = sadd.s32 %s24, 1
      %s488 = smul.u32 %s487, 8
      %p489 = scmp.lt.s32.totalorder %s488, 15
      %s490 = scalar_select %p489, %s488, 15
      %s491 = smul.u32 8, %s24
      %p492 = scmp.lt.s32.totalorder %s23, 1
      %s493 = scalar_select %p492, %s23, 1
      %p494 = scmp.lt.s32.totalorder %s491, 15
      %s495 = scalar_select %p494, %s491, 15
      %s496 = smul.addr %s495, 2
      %s497 = smul.addr %s493, 32
      %s498 = sadd.s32 %s496, %s497
      %s499 = smul.addr %s498, 8
      %s500 = scalar_lea.vmem %s6, %s499
      %s501 = smul.u32 8, %s24
      %s502 = smul.u32 8, %s24
      %p503 = scmp.lt.s32.totalorder %s23, 1
      %s504 = scalar_select %p503, %s23, 1
      %p505 = scmp.lt.s32.totalorder %s502, 15
      %s506 = scalar_select %p505, %s502, 15
      %s507 = smul.addr %s506, 2
      %s508 = smul.addr %s504, 32
      %s509 = sadd.s32 %s507, %s508
      %s510 = smul.addr %s509, 8
      %s511 = scalar_lea.vmem %s8, %s510
      %s512 = smul.u32 8, %s24
      %v514 = vld [vmem:[%s455] sm:$0xf]
      %v515 = vld [vmem:[%s455 + $0x4] sm:$0xf]
      %v516 = vld [vmem:[%s455 + $0x8] sm:$0xf]
      %v517 = vld [vmem:[%s455 + $0xc] sm:$0xf]
      %v518 = vld [vmem:[%s455 + $0x10] sm:$0xf]
      %v519 = vld [vmem:[%s455 + $0x14] sm:$0xf]
      %v520 = vld [vmem:[%s455 + $0x18] sm:$0xf]
      %v521 = vld [vmem:[%s455 + $0x1c] sm:$0xf]
      %v522 = vld [vmem:[%s455 + $0x20] sm:$0xf]
      %v523 = vld [vmem:[%s455 + $0x24] sm:$0xf]
      %v524 = vld [vmem:[%s455 + $0x28] sm:$0xf]
      %v525 = vld [vmem:[%s455 + $0x2c] sm:$0xf]
      %v526 = vld [vmem:[%s455 + $0x30] sm:$0xf]
      %v527 = vld [vmem:[%s455 + $0x34] sm:$0xf]
      %v528 = vld [vmem:[%s455 + $0x38] sm:$0xf]
      %v529 = vld [vmem:[%s455 + $0x3c] sm:$0xf]
      %v530 = vld [vmem:[%s469] sm:$0xf]
      %v531 = vld [vmem:[%s469 + $0x4] sm:$0xf]
      %v532 = vld [vmem:[%s486] sm:$0xf]
      %v533 = vld [vmem:[%s486 + $0x4] sm:$0xf]
      %v534 = vld [vmem:[%s4] sm:$0x1]
      %v535 = vld [vmem:[%s5] sm:$0x1]
      %v536 = vunpack.c.l.bf16 %v514
      %v537 = vunpack.c.l.bf16 %v515
      %v538 = vunpack.c.l.bf16 %v516
      %v539 = vunpack.c.l.bf16 %v517
      %v540 = vunpack.c.l.bf16 %v518
      %v541 = vunpack.c.l.bf16 %v519
      %v542 = vunpack.c.l.bf16 %v520
      %v543 = vunpack.c.l.bf16 %v521
      %v544 = vunpack.c.l.bf16 %v522
      %v545 = vunpack.c.l.bf16 %v523
      %v546 = vunpack.c.l.bf16 %v524
      %v547 = vunpack.c.l.bf16 %v525
      %v548 = vunpack.c.l.bf16 %v526
      %v549 = vunpack.c.l.bf16 %v527
      %v550 = vunpack.c.l.bf16 %v528
      %v551 = vunpack.c.l.bf16 %v529
      %v553 = vlaneseq
      %v554 = vshrl.u32 %v553, 7
      %v555 = vsub.s32 0, %v554
      %v556 = vrot.slane %v534, %v555
      %v558 = vmul.f32 %v536, %v556
      %v559 = vmul.f32 %v537, %v556
      %v560 = vmul.f32 %v538, %v556
      %v561 = vmul.f32 %v539, %v556
      %v562 = vmul.f32 %v540, %v556
      %v563 = vmul.f32 %v541, %v556
      %v564 = vmul.f32 %v542, %v556
      %v565 = vmul.f32 %v543, %v556
      %v566 = vmul.f32 %v544, %v556
      %v567 = vmul.f32 %v545, %v556
      %v568 = vmul.f32 %v546, %v556
      %v569 = vmul.f32 %v547, %v556
      %v570 = vmul.f32 %v548, %v556
      %v571 = vmul.f32 %v549, %v556
      %v572 = vmul.f32 %v550, %v556
      %v573 = vmul.f32 %v551, %v556
      %v575 = vlaneseq
      %v576 = vshrl.u32 %v575, 7
      %v577 = vsub.s32 0, %v576
      %v578 = vrot.slane %v535, %v577
      %v580 = vadd.f32 %v558, %v578
      %v581 = vadd.f32 %v559, %v578
      %v582 = vadd.f32 %v560, %v578
      %v583 = vadd.f32 %v561, %v578
      %v584 = vadd.f32 %v562, %v578
      %v585 = vadd.f32 %v563, %v578
      %v586 = vadd.f32 %v564, %v578
      %v587 = vadd.f32 %v565, %v578
      %v588 = vadd.f32 %v566, %v578
      %v589 = vadd.f32 %v567, %v578
      %v590 = vadd.f32 %v568, %v578
      %v591 = vadd.f32 %v569, %v578
      %v592 = vadd.f32 %v570, %v578
      %v593 = vadd.f32 %v571, %v578
      %v594 = vadd.f32 %v572, %v578
      %v595 = vadd.f32 %v573, %v578
      %v596 = vmax.f32 %v580, 0.0
      %v597 = vmax.f32 %v581, 0.0
      %v598 = vmax.f32 %v582, 0.0
      %v599 = vmax.f32 %v583, 0.0
      %v600 = vmax.f32 %v584, 0.0
      %v601 = vmax.f32 %v585, 0.0
      %v602 = vmax.f32 %v586, 0.0
      %v603 = vmax.f32 %v587, 0.0
      %v604 = vmax.f32 %v588, 0.0
      %v605 = vmax.f32 %v589, 0.0
      %v606 = vmax.f32 %v590, 0.0
      %v607 = vmax.f32 %v591, 0.0
      %v608 = vmax.f32 %v592, 0.0
      %v609 = vmax.f32 %v593, 0.0
      %v610 = vmax.f32 %v594, 0.0
      %v611 = vmax.f32 %v595, 0.0
      %v612 = vunpack.c.l.bf16 %v530
      %v613 = vunpack.c.l.bf16 %v531
      %v614 = vmul.f32 %v612, %v556
      %v615 = vmul.f32 %v613, %v556
      %v616 = vadd.f32 %v614, %v578
      %v617 = vadd.f32 %v615, %v578
      %v618 = vmax.f32 %v616, 0.0
      %v619 = vmax.f32 %v617, 0.0
      %p620 = scmp.gt.s32.totalorder %s24, 0
      %s621 = scalar_select %p620, 1, 0
      %s622 = scvt.s32.f32 %s621
      %v623 = vstv %s622
      %v624 = vmul.f32 %v618, %v623
      %v625 = vmul.f32 %v619, %v623
      %v626 = vunpack.c.l.bf16 %v532
      %v627 = vunpack.c.l.bf16 %v533
      %v628 = vmul.f32 %v626, %v556
      %v629 = vmul.f32 %v627, %v556
      %v630 = vadd.f32 %v628, %v578
      %v631 = vadd.f32 %v629, %v578
      %v632 = vmax.f32 %v630, 0.0
      %v633 = vmax.f32 %v631, 0.0
      %p634 = scmp.lt.s32.totalorder %s24, 1
      %s635 = scalar_select %p634, 1, 0
      %s636 = scvt.s32.f32 %s635
      %v637 = vstv %s636
      %v638 = vmul.f32 %v632, %v637
      %v639 = vmul.f32 %v633, %v637
      %v640 = vpack.c.bf16 %v625, %v624
      %v641 = vpack.c.bf16 %v597, %v596
      %v642 = vpack.c.bf16 %v599, %v598
      %v643 = vpack.c.bf16 %v601, %v600
      %v644 = vpack.c.bf16 %v603, %v602
      %v645 = vpack.c.bf16 %v605, %v604
      %v646 = vpack.c.bf16 %v607, %v606
      %v647 = vpack.c.bf16 %v609, %v608
      %v648 = vpack.c.bf16 %v611, %v610
      %v649 = vpack.c.bf16 %v639, %v638
      %v651 = vshrl.u32 %v640, 16
      %v653 = vrot.slane %v651, 7
      %v654 = vshll.u32 %v640, 16
      %v656 = vor.u32 %v653, %v654
      %v658 = vshrl.u32 %v641, 16
      %v660 = vrot.slane %v658, 7
      %v661 = vshll.u32 %v641, 16
      %v663 = vor.u32 %v660, %v661
      %v665 = vshrl.u32 %v642, 16
      %v667 = vrot.slane %v665, 7
      %v668 = vshll.u32 %v642, 16
      %v670 = vor.u32 %v667, %v668
      %v672 = vshrl.u32 %v643, 16
      %v674 = vrot.slane %v672, 7
      %v675 = vshll.u32 %v643, 16
      %v677 = vor.u32 %v674, %v675
      %v679 = vshrl.u32 %v644, 16
      %v681 = vrot.slane %v679, 7
      %v682 = vshll.u32 %v644, 16
      %v684 = vor.u32 %v681, %v682
      %v686 = vshrl.u32 %v645, 16
      %v688 = vrot.slane %v686, 7
      %v689 = vshll.u32 %v645, 16
      %v691 = vor.u32 %v688, %v689
      %v693 = vshrl.u32 %v646, 16
      %v695 = vrot.slane %v693, 7
      %v696 = vshll.u32 %v646, 16
      %v698 = vor.u32 %v695, %v696
      %v700 = vshrl.u32 %v647, 16
      %v702 = vrot.slane %v700, 7
      %v703 = vshll.u32 %v647, 16
      %v705 = vor.u32 %v702, %v703
      %v707 = vshrl.u32 %v648, 16
      %v709 = vrot.slane %v707, 7
      %v710 = vshll.u32 %v648, 16
      %v712 = vor.u32 %v709, %v710
      %v714 = vshrl.u32 %v649, 16
      %v716 = vrot.slane %v714, 7
      %v717 = vshll.u32 %v649, 16
      %v719 = vor.u32 %v716, %v717
      %vm730 = vcmask 1040384
      %vm731 = vsmask.f32 256
      %vm732 = vmand %vm730, %vm731
      %v733 = vsel %vm732, 0, %v656
      %v734 = vsel %vm732, 0, %v663
      %v735 = vsel %vm732, 0, %v670
      %v736 = vsel %vm732, 0, %v677
      %v737 = vsel %vm732, 0, %v684
      %v738 = vsel %vm732, 0, %v691
      %v739 = vsel %vm732, 0, %v698
      %v740 = vsel %vm732, 0, %v705
      %v741 = vsel %vm732, 0, %v712
      %v742 = vsel %vm732, 0, %v719
      %v743 = vrot.slane %v654, 1
      %v744 = vor.u32 %v651, %v743
      %v745 = vrot.slane %v661, 1
      %v746 = vor.u32 %v658, %v745
      %v747 = vrot.slane %v668, 1
      %v748 = vor.u32 %v665, %v747
      %v749 = vrot.slane %v675, 1
      %v750 = vor.u32 %v672, %v749
      %v751 = vrot.slane %v682, 1
      %v752 = vor.u32 %v679, %v751
      %v753 = vrot.slane %v689, 1
      %v754 = vor.u32 %v686, %v753
      %v755 = vrot.slane %v696, 1
      %v756 = vor.u32 %v693, %v755
      %v757 = vrot.slane %v703, 1
      %v758 = vor.u32 %v700, %v757
      %v759 = vrot.slane %v710, 1
      %v760 = vor.u32 %v707, %v759
      %v761 = vrot.slane %v717, 1
      %v762 = vor.u32 %v714, %v761
      %vm773 = vcmask 1047552
      %vm774 = vsmask.f32 7424
      %vm775 = vmand %vm773, %vm774
      %v776 = vsel %vm775, %v744, 0
      %v777 = vsel %vm775, %v746, 0
      %v778 = vsel %vm775, %v748, 0
      %v779 = vsel %vm775, %v750, 0
      %v780 = vsel %vm775, %v752, 0
      %v781 = vsel %vm775, %v754, 0
      %v782 = vsel %vm775, %v756, 0
      %v783 = vsel %vm775, %v758, 0
      %v784 = vsel %vm775, %v760, 0
      %v785 = vsel %vm775, %v762, 0
      %796 = vrot.lane.b32.xlu0 %v640, 8
      %v797 = vpop.permute.xlu0 %796
      %798 = vrot.lane.b32.xlu0 %v641, 8
      %v799 = vpop.permute.xlu0 %798
      %800 = vrot.lane.b32.xlu0 %v642, 8
      %v801 = vpop.permute.xlu0 %800
      %802 = vrot.lane.b32.xlu0 %v643, 8
      %v803 = vpop.permute.xlu0 %802
      %804 = vrot.lane.b32.xlu0 %v644, 8
      %v805 = vpop.permute.xlu0 %804
      %806 = vrot.lane.b32.xlu0 %v645, 8
      %v807 = vpop.permute.xlu0 %806
      %808 = vrot.lane.b32.xlu0 %v646, 8
      %v809 = vpop.permute.xlu0 %808
      %810 = vrot.lane.b32.xlu0 %v647, 8
      %v811 = vpop.permute.xlu0 %810
      %812 = vrot.lane.b32.xlu0 %v648, 8
      %v813 = vpop.permute.xlu0 %812
      %814 = vrot.lane.b32.xlu0 %v649, 8
      %v815 = vpop.permute.xlu0 %814
      %826 = vrot.lane.b32.xlu0 %v776, 16
      %v827 = vpop.permute.xlu0 %826
      %828 = vrot.lane.b32.xlu0 %v777, 16
      %v829 = vpop.permute.xlu0 %828
      %830 = vrot.lane.b32.xlu0 %v778, 16
      %v831 = vpop.permute.xlu0 %830
      %832 = vrot.lane.b32.xlu0 %v779, 16
      %v833 = vpop.permute.xlu0 %832
      %834 = vrot.lane.b32.xlu0 %v780, 16
      %v835 = vpop.permute.xlu0 %834
      %836 = vrot.lane.b32.xlu0 %v781, 16
      %v837 = vpop.permute.xlu0 %836
      %838 = vrot.lane.b32.xlu0 %v782, 16
      %v839 = vpop.permute.xlu0 %838
      %840 = vrot.lane.b32.xlu0 %v783, 16
      %v841 = vpop.permute.xlu0 %840
      %842 = vrot.lane.b32.xlu0 %v784, 16
      %v843 = vpop.permute.xlu0 %842
      %844 = vrot.lane.b32.xlu0 %v785, 16
      %v845 = vpop.permute.xlu0 %844
      %vm846 = vcmask 64512
      %v849 = vsel %vm846, %v733, %v797
      %v852 = vsel %vm846, %v734, %v799
      %v855 = vsel %vm846, %v735, %v801
      %v858 = vsel %vm846, %v736, %v803
      %v861 = vsel %vm846, %v737, %v805
      %v864 = vsel %vm846, %v738, %v807
      %v867 = vsel %vm846, %v739, %v809
      %v870 = vsel %vm846, %v740, %v811
      %v873 = vsel %vm846, %v741, %v813
      %v876 = vsel %vm846, %v742, %v815
      %vm877 = vcmask 130048
      %v879 = vsel %vm877, %v849, %v827
      %v881 = vsel %vm877, %v852, %v829
      %v883 = vsel %vm877, %v855, %v831
      %v885 = vsel %vm877, %v858, %v833
      %v887 = vsel %vm877, %v861, %v835
      %v889 = vsel %vm877, %v864, %v837
      %v891 = vsel %vm877, %v867, %v839
      %v893 = vsel %vm877, %v870, %v841
      %v895 = vsel %vm877, %v873, %v843
      %v897 = vsel %vm877, %v876, %v845
      %v898 = vld [vmem:[%s3] sm:$0xf]
      %v899 = vld [vmem:[%s3 + $0x4] sm:$0xf]
      %v900 = vld [vmem:[%s3 + $0x8] sm:$0xf]
      %s901 = scalar_lea.vmem %s3, 12
      %v902 = vld [vmem:[%s901] sm:$0xf]
      %v903 = vld [vmem:[%s901 + $0x4] sm:$0xf]
      %v904 = vld [vmem:[%s901 + $0x8] sm:$0xf]
      %v908 = vunpack.c.l.b16 %v902
      %v909 = vunpack.c.l.b16 %v903
      %v910 = vunpack.c.l.b16 %v904
      %v911 = vpack.c.b16 %v909, %v908
      %v912 = vpack.c.b16 %v910, %v910
      %vm914 = vcmask 195584
      %v915 = vsel %vm914, %v881, 0
      %v917 = vsel %vm914, %v883, 0
      %v919 = vsel %vm914, %v885, 0
      %v921 = vsel %vm914, %v887, 0
      %v923 = vsel %vm914, %v889, 0
      %v925 = vsel %vm914, %v891, 0
      %v927 = vsel %vm914, %v893, 0
      %v929 = vsel %vm914, %v895, 0
      %vm931 = vcmask 1043456
      %v933 = vsel %vm931, %v912, 0
      %935 = vmatprep.subr.bf16.mxu0 0
      %936 = vmatpush1.bf16.msra.mxu0 %v911
      %937 = vmatprep.subr.bf16.mxu0 0
      %938 = vmatpush1.bf16.msra.mxu0 %v933
      %939 = vmatprep.subr.bf16.mxu0 0
      %940 = vmatpush1.bf16.msra.mxu0 0
      %941 = vmatprep.subr.bf16.mxu0 0
      %942 = vmatpush1.bf16.msra.mxu0 0
      %943 = vmatprep.subr.bf16.mxu0 0
      %944 = vmatpush1.bf16.msra.mxu0 0
      %945 = vmatprep.subr.bf16.mxu0 0
      %946 = vmatpush1.bf16.msra.mxu0 0
      %947 = vmatprep.subr.bf16.mxu0 0
      %948 = vmatpush1.bf16.msra.mxu0 0
      %949 = vmatprep.subr.bf16.mxu0 0
      %950 = vmatpush1.bf16.msra.mxu0 0
      %951 = vmatprep.subr.bf16.mxu0 0
      %952 = vmatpush1.bf16.msra.mxu0 0
      %953 = vmatprep.subr.bf16.mxu0 0
      %954 = vmatpush1.bf16.msra.mxu0 0
      %955 = vmatprep.subr.bf16.mxu0 0
      %956 = vmatpush1.bf16.msra.mxu0 0
      %957 = vmatprep.subr.bf16.mxu0 0
      %958 = vmatpush1.bf16.msra.mxu0 0
      %959 = vmatprep.subr.bf16.mxu0 0
      %960 = vmatpush1.bf16.msra.mxu0 0
      %961 = vmatprep.subr.bf16.mxu0 0
      %962 = vmatpush1.bf16.msra.mxu0 0
      %963 = vmatprep.subr.bf16.mxu0 0
      %964 = vmatpush1.bf16.msra.mxu0 0
      %965 = vmatprep.subr.bf16.mxu0 0
      %966 = vmatpush1.bf16.msra.mxu0 0
      %967 = vmatprep.mubr.bf16.mxu0 0
      %968 = vmatmul.mubr.bf16.gmra.mrb[0].mxu0 %v915
      %v969 = vpop.f32.mrb[0].mxu0
      %v970 = vadd.f32 0.0, %v969
      %v971 = vpop.f32.mrb[0].mxu0
      %v972 = vpop.f32.mrb[0].mxu0
      %v973 = vadd.f32 0.0, %v972
      %v974 = vpop.f32.mrb[0].mxu0
      %975 = vmatprep.mubr.bf16.mxu0 0
      %976 = vmatmul.mubr.bf16.gmra.mrb[0].mxu0 %v917
      %v977 = vpop.f32.mrb[0].mxu0
      %v978 = vadd.f32 0.0, %v977
      %v979 = vpop.f32.mrb[0].mxu0
      %v980 = vpop.f32.mrb[0].mxu0
      %v981 = vadd.f32 0.0, %v980
      %v982 = vpop.f32.mrb[0].mxu0
      %983 = vmatprep.mubr.bf16.mxu0 0
      %984 = vmatmul.mubr.bf16.gmra.mrb[0].mxu0 %v919
      %v985 = vpop.f32.mrb[0].mxu0
      %v986 = vadd.f32 0.0, %v985
      %v987 = vpop.f32.mrb[0].mxu0
      %v988 = vpop.f32.mrb[0].mxu0
      %v989 = vadd.f32 0.0, %v988
      %v990 = vpop.f32.mrb[0].mxu0
      %991 = vmatprep.mubr.bf16.mxu0 0
      %992 = vmatmul.mubr.bf16.gmra.mrb[0].mxu0 %v921
      %v993 = vpop.f32.mrb[0].mxu0
      %v994 = vadd.f32 0.0, %v993
      %v995 = vpop.f32.mrb[0].mxu0
      %v996 = vpop.f32.mrb[0].mxu0
      %v997 = vadd.f32 0.0, %v996
      %v998 = vpop.f32.mrb[0].mxu0
      %999 = vmatprep.mubr.bf16.mxu0 0
      %1000 = vmatmul.mubr.bf16.gmra.mrb[0].mxu0 %v923
      %v1001 = vpop.f32.mrb[0].mxu0
      %v1002 = vadd.f32 0.0, %v1001
      %v1003 = vpop.f32.mrb[0].mxu0
      %v1004 = vpop.f32.mrb[0].mxu0
      %v1005 = vadd.f32 0.0, %v1004
      %v1006 = vpop.f32.mrb[0].mxu0
      %1007 = vmatprep.mubr.bf16.mxu0 0
      %1008 = vmatmul.mubr.bf16.gmra.mrb[0].mxu0 %v925
      %v1009 = vpop.f32.mrb[0].mxu0
      %v1010 = vadd.f32 0.0, %v1009
      %v1011 = vpop.f32.mrb[0].mxu0
      %v1012 = vpop.f32.mrb[0].mxu0
      %v1013 = vadd.f32 0.0, %v1012
      %v1014 = vpop.f32.mrb[0].mxu0
      %1015 = vmatprep.mubr.bf16.mxu0 0
      %1016 = vmatmul.mubr.bf16.gmra.mrb[0].mxu0 %v927
      %v1017 = vpop.f32.mrb[0].mxu0
      %v1018 = vadd.f32 0.0, %v1017
      %v1019 = vpop.f32.mrb[0].mxu0
      %v1020 = vpop.f32.mrb[0].mxu0
      %v1021 = vadd.f32 0.0, %v1020
      %v1022 = vpop.f32.mrb[0].mxu0
      %1023 = vmatprep.mubr.bf16.mxu0 0
      %1024 = vmatmul.mubr.bf16.gmra.mrb[0].mxu0 %v929
      %v1025 = vpop.f32.mrb[0].mxu0
      %v1026 = vadd.f32 0.0, %v1025
      %v1027 = vpop.f32.mrb[0].mxu0
      %v1028 = vpop.f32.mrb[0].mxu0
      %v1029 = vadd.f32 0.0, %v1028
      %v1030 = vpop.f32.mrb[0].mxu0
      %1031 = vdwg.mxu0
      %v1035 = vunpack.c.l.b16 %v898
      %v1036 = vunpack.c.l.b16 %v899
      %v1037 = vunpack.c.l.b16 %v900
      %v1038 = vpack.c.b16 %v1036, %v1035
      %v1039 = vpack.c.b16 %v1037, %v1037
      %v1041 = vsel %vm914, %v879, 0
      %v1044 = vsel %vm931, %v1039, 0
      %1046 = vmatprep.subr.bf16.mxu0 0
      %1047 = vmatpush1.bf16.msra.mxu0 %v1038
      %1048 = vmatprep.subr.bf16.mxu0 0
      %1049 = vmatpush1.bf16.msra.mxu0 %v1044
      %1050 = vmatprep.subr.bf16.mxu0 0
      %1051 = vmatpush1.bf16.msra.mxu0 0
      %1052 = vmatprep.subr.bf16.mxu0 0
      %1053 = vmatpush1.bf16.msra.mxu0 0
      %1054 = vmatprep.subr.bf16.mxu0 0
      %1055 = vmatpush1.bf16.msra.mxu0 0
      %1056 = vmatprep.subr.bf16.mxu0 0
      %1057 = vmatpush1.bf16.msra.mxu0 0
      %1058 = vmatprep.subr.bf16.mxu0 0
      %1059 = vmatpush1.bf16.msra.mxu0 0
      %1060 = vmatprep.subr.bf16.mxu0 0
      %1061 = vmatpush1.bf16.msra.mxu0 0
      %1062 = vmatprep.subr.bf16.mxu0 0
      %1063 = vmatpush1.bf16.msra.mxu0 0
      %1064 = vmatprep.subr.bf16.mxu0 0
      %1065 = vmatpush1.bf16.msra.mxu0 0
      %1066 = vmatprep.subr.bf16.mxu0 0
      %1067 = vmatpush1.bf16.msra.mxu0 0
      %1068 = vmatprep.subr.bf16.mxu0 0
      %1069 = vmatpush1.bf16.msra.mxu0 0
      %1070 = vmatprep.subr.bf16.mxu0 0
      %1071 = vmatpush1.bf16.msra.mxu0 0
      %1072 = vmatprep.subr.bf16.mxu0 0
      %1073 = vmatpush1.bf16.msra.mxu0 0
      %1074 = vmatprep.subr.bf16.mxu0 0
      %1075 = vmatpush1.bf16.msra.mxu0 0
      %1076 = vmatprep.subr.bf16.mxu0 0
      %1077 = vmatpush1.bf16.msra.mxu0 0
      %1078 = vmatprep.mubr.bf16.mxu0 0
      %1079 = vmatmul.mubr.bf16.gmra.mrb[0].mxu0 %v1041
      %v1080 = vpop.f32.mrb[0].mxu0
      %v1081 = vadd.f32 %v970, %v1080
      %v1082 = vpop.f32.mrb[0].mxu0
      %v1083 = vpop.f32.mrb[0].mxu0
      %v1084 = vadd.f32 %v973, %v1083
      %v1085 = vpop.f32.mrb[0].mxu0
      %1086 = vmatprep.mubr.bf16.mxu0 0
      %1087 = vmatmul.mubr.bf16.gmra.mrb[0].mxu0 %v915
      %v1088 = vpop.f32.mrb[0].mxu0
      %v1089 = vadd.f32 %v978, %v1088
      %v1090 = vpop.f32.mrb[0].mxu0
      %v1091 = vpop.f32.mrb[0].mxu0
      %v1092 = vadd.f32 %v981, %v1091
      %v1093 = vpop.f32.mrb[0].mxu0
      %1094 = vmatprep.mubr.bf16.mxu0 0
      %1095 = vmatmul.mubr.bf16.gmra.mrb[0].mxu0 %v917
      %v1096 = vpop.f32.mrb[0].mxu0
      %v1097 = vadd.f32 %v986, %v1096
      %v1098 = vpop.f32.mrb[0].mxu0
      %v1099 = vpop.f32.mrb[0].mxu0
      %v1100 = vadd.f32 %v989, %v1099
      %v1101 = vpop.f32.mrb[0].mxu0
      %1102 = vmatprep.mubr.bf16.mxu0 0
      %1103 = vmatmul.mubr.bf16.gmra.mrb[0].mxu0 %v919
      %v1104 = vpop.f32.mrb[0].mxu0
      %v1105 = vadd.f32 %v994, %v1104
      %v1106 = vpop.f32.mrb[0].mxu0
      %v1107 = vpop.f32.mrb[0].mxu0
      %v1108 = vadd.f32 %v997, %v1107
      %v1109 = vpop.f32.mrb[0].mxu0
      %1110 = vmatprep.mubr.bf16.mxu0 0
      %1111 = vmatmul.mubr.bf16.gmra.mrb[0].mxu0 %v921
      %v1112 = vpop.f32.mrb[0].mxu0
      %v1113 = vadd.f32 %v1002, %v1112
      %v1114 = vpop.f32.mrb[0].mxu0
      %v1115 = vpop.f32.mrb[0].mxu0
      %v1116 = vadd.f32 %v1005, %v1115
      %v1117 = vpop.f32.mrb[0].mxu0
      %1118 = vmatprep.mubr.bf16.mxu0 0
      %1119 = vmatmul.mubr.bf16.gmra.mrb[0].mxu0 %v923
      %v1120 = vpop.f32.mrb[0].mxu0
      %v1121 = vadd.f32 %v1010, %v1120
      %v1122 = vpop.f32.mrb[0].mxu0
      %v1123 = vpop.f32.mrb[0].mxu0
      %v1124 = vadd.f32 %v1013, %v1123
      %v1125 = vpop.f32.mrb[0].mxu0
      %1126 = vmatprep.mubr.bf16.mxu0 0
      %1127 = vmatmul.mubr.bf16.gmra.mrb[0].mxu0 %v925
      %v1128 = vpop.f32.mrb[0].mxu0
      %v1129 = vadd.f32 %v1018, %v1128
      %v1130 = vpop.f32.mrb[0].mxu0
      %v1131 = vpop.f32.mrb[0].mxu0
      %v1132 = vadd.f32 %v1021, %v1131
      %v1133 = vpop.f32.mrb[0].mxu0
      %1134 = vmatprep.mubr.bf16.mxu0 0
      %1135 = vmatmul.mubr.bf16.gmra.mrb[0].mxu0 %v927
      %v1136 = vpop.f32.mrb[0].mxu0
      %v1137 = vadd.f32 %v1026, %v1136
      %v1138 = vpop.f32.mrb[0].mxu0
      %v1139 = vpop.f32.mrb[0].mxu0
      %v1140 = vadd.f32 %v1029, %v1139
      %v1141 = vpop.f32.mrb[0].mxu0
      %1142 = vdwg.mxu0
      %s1143 = scalar_lea.vmem %s3, 24
      %v1144 = vld [vmem:[%s1143] sm:$0xf]
      %v1145 = vld [vmem:[%s1143 + $0x4] sm:$0xf]
      %v1146 = vld [vmem:[%s1143 + $0x8] sm:$0xf]
      %v1150 = vunpack.c.l.b16 %v1144
      %v1151 = vunpack.c.l.b16 %v1145
      %v1152 = vunpack.c.l.b16 %v1146
      %v1153 = vpack.c.b16 %v1151, %v1150
      %v1154 = vpack.c.b16 %v1152, %v1152
      %v1156 = vsel %vm914, %v897, 0
      %v1159 = vsel %vm931, %v1154, 0
      %1161 = vmatprep.subr.bf16.mxu0 0
      %1162 = vmatpush1.bf16.msra.mxu0 %v1153
      %1163 = vmatprep.subr.bf16.mxu0 0
      %1164 = vmatpush1.bf16.msra.mxu0 %v1159
      %1165 = vmatprep.subr.bf16.mxu0 0
      %1166 = vmatpush1.bf16.msra.mxu0 0
      %1167 = vmatprep.subr.bf16.mxu0 0
      %1168 = vmatpush1.bf16.msra.mxu0 0
      %1169 = vmatprep.subr.bf16.mxu0 0
      %1170 = vmatpush1.bf16.msra.mxu0 0
      %1171 = vmatprep.subr.bf16.mxu0 0
      %1172 = vmatpush1.bf16.msra.mxu0 0
      %1173 = vmatprep.subr.bf16.mxu0 0
      %1174 = vmatpush1.bf16.msra.mxu0 0
      %1175 = vmatprep.subr.bf16.mxu0 0
      %1176 = vmatpush1.bf16.msra.mxu0 0
      %1177 = vmatprep.subr.bf16.mxu0 0
      %1178 = vmatpush1.bf16.msra.mxu0 0
      %1179 = vmatprep.subr.bf16.mxu0 0
      %1180 = vmatpush1.bf16.msra.mxu0 0
      %1181 = vmatprep.subr.bf16.mxu0 0
      %1182 = vmatpush1.bf16.msra.mxu0 0
      %1183 = vmatprep.subr.bf16.mxu0 0
      %1184 = vmatpush1.bf16.msra.mxu0 0
      %1185 = vmatprep.subr.bf16.mxu0 0
      %1186 = vmatpush1.bf16.msra.mxu0 0
      %1187 = vmatprep.subr.bf16.mxu0 0
      %1188 = vmatpush1.bf16.msra.mxu0 0
      %1189 = vmatprep.subr.bf16.mxu0 0
      %1190 = vmatpush1.bf16.msra.mxu0 0
      %1191 = vmatprep.subr.bf16.mxu0 0
      %1192 = vmatpush1.bf16.msra.mxu0 0
      %1193 = vmatprep.mubr.bf16.mxu0 0
      %1194 = vmatmul.mubr.bf16.gmra.mrb[0].mxu0 %v917
      %v1195 = vpop.f32.mrb[0].mxu0
      %v1196 = vadd.f32 0.0, %v1195
      %v1197 = vpop.f32.mrb[0].mxu0
      %v1198 = vpop.f32.mrb[0].mxu0
      %v1199 = vadd.f32 0.0, %v1198
      %v1200 = vpop.f32.mrb[0].mxu0
      %1201 = vmatprep.mubr.bf16.mxu0 0
      %1202 = vmatmul.mubr.bf16.gmra.mrb[0].mxu0 %v919
      %v1203 = vpop.f32.mrb[0].mxu0
      %v1204 = vadd.f32 0.0, %v1203
      %v1205 = vpop.f32.mrb[0].mxu0
      %v1206 = vpop.f32.mrb[0].mxu0
      %v1207 = vadd.f32 0.0, %v1206
      %v1208 = vpop.f32.mrb[0].mxu0
      %1209 = vmatprep.mubr.bf16.mxu0 0
      %1210 = vmatmul.mubr.bf16.gmra.mrb[0].mxu0 %v921
      %v1211 = vpop.f32.mrb[0].mxu0
      %v1212 = vadd.f32 0.0, %v1211
      %v1213 = vpop.f32.mrb[0].mxu0
      %v1214 = vpop.f32.mrb[0].mxu0
      %v1215 = vadd.f32 0.0, %v1214
      %v1216 = vpop.f32.mrb[0].mxu0
      %1217 = vmatprep.mubr.bf16.mxu0 0
      %1218 = vmatmul.mubr.bf16.gmra.mrb[0].mxu0 %v923
      %v1219 = vpop.f32.mrb[0].mxu0
      %v1220 = vadd.f32 0.0, %v1219
      %v1221 = vpop.f32.mrb[0].mxu0
      %v1222 = vpop.f32.mrb[0].mxu0
      %v1223 = vadd.f32 0.0, %v1222
      %v1224 = vpop.f32.mrb[0].mxu0
      %1225 = vmatprep.mubr.bf16.mxu0 0
      %1226 = vmatmul.mubr.bf16.gmra.mrb[0].mxu0 %v925
      %v1227 = vpop.f32.mrb[0].mxu0
      %v1228 = vadd.f32 0.0, %v1227
      %v1229 = vpop.f32.mrb[0].mxu0
      %v1230 = vpop.f32.mrb[0].mxu0
      %v1231 = vadd.f32 0.0, %v1230
      %v1232 = vpop.f32.mrb[0].mxu0
      %1233 = vmatprep.mubr.bf16.mxu0 0
      %1234 = vmatmul.mubr.bf16.gmra.mrb[0].mxu0 %v927
      %v1235 = vpop.f32.mrb[0].mxu0
      %v1236 = vadd.f32 0.0, %v1235
      %v1237 = vpop.f32.mrb[0].mxu0
      %v1238 = vpop.f32.mrb[0].mxu0
      %v1239 = vadd.f32 0.0, %v1238
      %v1240 = vpop.f32.mrb[0].mxu0
      %1241 = vmatprep.mubr.bf16.mxu0 0
      %1242 = vmatmul.mubr.bf16.gmra.mrb[0].mxu0 %v929
      %v1243 = vpop.f32.mrb[0].mxu0
      %v1244 = vadd.f32 0.0, %v1243
      %v1245 = vpop.f32.mrb[0].mxu0
      %v1246 = vpop.f32.mrb[0].mxu0
      %v1247 = vadd.f32 0.0, %v1246
      %v1248 = vpop.f32.mrb[0].mxu0
      %1249 = vmatprep.mubr.bf16.mxu0 0
      %1250 = vmatmul.mubr.bf16.gmra.mrb[0].mxu0 %v1156
      %v1251 = vpop.f32.mrb[0].mxu0
      %v1252 = vadd.f32 0.0, %v1251
      %v1253 = vpop.f32.mrb[0].mxu0
      %v1254 = vpop.f32.mrb[0].mxu0
      %v1255 = vadd.f32 0.0, %v1254
      %v1256 = vpop.f32.mrb[0].mxu0
      %1257 = vdwg.mxu0
      %v1258 = vadd.f32 %v1081, %v1196
      %v1259 = vadd.f32 %v1084, %v1199
      %v1260 = vadd.f32 %v1089, %v1204
      %v1261 = vadd.f32 %v1092, %v1207
      %v1262 = vadd.f32 %v1097, %v1212
      %v1263 = vadd.f32 %v1100, %v1215
      %v1264 = vadd.f32 %v1105, %v1220
      %v1265 = vadd.f32 %v1108, %v1223
      %v1266 = vadd.f32 %v1113, %v1228
      %v1267 = vadd.f32 %v1116, %v1231
      %v1268 = vadd.f32 %v1121, %v1236
      %v1269 = vadd.f32 %v1124, %v1239
      %v1270 = vadd.f32 %v1129, %v1244
      %v1271 = vadd.f32 %v1132, %v1247
      %v1272 = vadd.f32 %v1137, %v1252
      %v1273 = vadd.f32 %v1140, %v1255
      %v1274 = vld [vmem:[%s500] sm:$0xff]
      %v1275 = vld [vmem:[%s500 + $0x8] sm:$0xff]
      %v1276 = vld [vmem:[%s500 + $0x10] sm:$0xff]
      %v1277 = vld [vmem:[%s500 + $0x18] sm:$0xff]
      %v1278 = vld [vmem:[%s500 + $0x20] sm:$0xff]
      %v1279 = vld [vmem:[%s500 + $0x28] sm:$0xff]
      %v1280 = vld [vmem:[%s500 + $0x30] sm:$0xff]
      %v1281 = vld [vmem:[%s500 + $0x38] sm:$0xff]
      %v1282 = vld [vmem:[%s500 + $0x40] sm:$0xff]
      %v1283 = vld [vmem:[%s500 + $0x48] sm:$0xff]
      %v1284 = vld [vmem:[%s500 + $0x50] sm:$0xff]
      %v1285 = vld [vmem:[%s500 + $0x58] sm:$0xff]
      %v1286 = vld [vmem:[%s500 + $0x60] sm:$0xff]
      %v1287 = vld [vmem:[%s500 + $0x68] sm:$0xff]
      %v1288 = vld [vmem:[%s500 + $0x70] sm:$0xff]
      %v1289 = vld [vmem:[%s500 + $0x78] sm:$0xff]
      %v1290 = vpack.c.bf16 %v1275, %v1274
      %v1291 = vpack.c.bf16 %v1277, %v1276
      %v1292 = vpack.c.bf16 %v1279, %v1278
      %v1293 = vpack.c.bf16 %v1281, %v1280
      %v1294 = vpack.c.bf16 %v1283, %v1282
      %v1295 = vpack.c.bf16 %v1285, %v1284
      %v1296 = vpack.c.bf16 %v1287, %v1286
      %v1297 = vpack.c.bf16 %v1289, %v1288
      %v1298 = vld [vmem:[%s7] sm:$0x3]
      %vm1299 = vcmask 31744
      %v1301 = vsel %vm1299, %v1290, 0
      %v1304 = vsel %vm1299, %v1291, 0
      %v1307 = vsel %vm1299, %v1292, 0
      %v1310 = vsel %vm1299, %v1293, 0
      %v1313 = vsel %vm1299, %v1294, 0
      %v1316 = vsel %vm1299, %v1295, 0
      %v1319 = vsel %vm1299, %v1296, 0
      %v1322 = vsel %vm1299, %v1297, 0
      %vm1324 = vcmask 1041408
      %v1326 = vsel %vm1324, %v1298, 0
      %1328 = vmatprep.subr.bf16.mxu0 0
      %1329 = vmatpush1.bf16.msra.mxu0 %v1326
      %1330 = vmatprep.subr.bf16.mxu0 0
      %1331 = vmatpush1.bf16.msra.mxu0 0
      %1332 = vmatprep.subr.bf16.mxu0 0
      %1333 = vmatpush1.bf16.msra.mxu0 0
      %1334 = vmatprep.subr.bf16.mxu0 0
      %1335 = vmatpush1.bf16.msra.mxu0 0
      %1336 = vmatprep.subr.bf16.mxu0 0
      %1337 = vmatpush1.bf16.msra.mxu0 0
      %1338 = vmatprep.subr.bf16.mxu0 0
      %1339 = vmatpush1.bf16.msra.mxu0 0
      %1340 = vmatprep.subr.bf16.mxu0 0
      %1341 = vmatpush1.bf16.msra.mxu0 0
      %1342 = vmatprep.subr.bf16.mxu0 0
      %1343 = vmatpush1.bf16.msra.mxu0 0
      %1344 = vmatprep.subr.bf16.mxu0 0
      %1345 = vmatpush1.bf16.msra.mxu0 0
      %1346 = vmatprep.subr.bf16.mxu0 0
      %1347 = vmatpush1.bf16.msra.mxu0 0
      %1348 = vmatprep.subr.bf16.mxu0 0
      %1349 = vmatpush1.bf16.msra.mxu0 0
      %1350 = vmatprep.subr.bf16.mxu0 0
      %1351 = vmatpush1.bf16.msra.mxu0 0
      %1352 = vmatprep.subr.bf16.mxu0 0
      %1353 = vmatpush1.bf16.msra.mxu0 0
      %1354 = vmatprep.subr.bf16.mxu0 0
      %1355 = vmatpush1.bf16.msra.mxu0 0
      %1356 = vmatprep.subr.bf16.mxu0 0
      %1357 = vmatpush1.bf16.msra.mxu0 0
      %1358 = vmatprep.subr.bf16.mxu0 0
      %1359 = vmatpush1.bf16.msra.mxu0 0
      %1360 = vmatprep.mubr.bf16.mxu0 0
      %1361 = vmatmul.mubr.bf16.gmra.mrb[0].mxu0 %v1301
      %v1362 = vpop.f32.mrb[0].mxu0
      %v1363 = vadd.f32 0.0, %v1362
      %v1364 = vpop.f32.mrb[0].mxu0
      %v1365 = vpop.f32.mrb[0].mxu0
      %v1366 = vadd.f32 0.0, %v1365
      %v1367 = vpop.f32.mrb[0].mxu0
      %1368 = vmatprep.mubr.bf16.mxu0 0
      %1369 = vmatmul.mubr.bf16.gmra.mrb[0].mxu0 %v1304
      %v1370 = vpop.f32.mrb[0].mxu0
      %v1371 = vadd.f32 0.0, %v1370
      %v1372 = vpop.f32.mrb[0].mxu0
      %v1373 = vpop.f32.mrb[0].mxu0
      %v1374 = vadd.f32 0.0, %v1373
      %v1375 = vpop.f32.mrb[0].mxu0
      %1376 = vmatprep.mubr.bf16.mxu0 0
      %1377 = vmatmul.mubr.bf16.gmra.mrb[0].mxu0 %v1307
      %v1378 = vpop.f32.mrb[0].mxu0
      %v1379 = vadd.f32 0.0, %v1378
      %v1380 = vpop.f32.mrb[0].mxu0
      %v1381 = vpop.f32.mrb[0].mxu0
      %v1382 = vadd.f32 0.0, %v1381
      %v1383 = vpop.f32.mrb[0].mxu0
      %1384 = vmatprep.mubr.bf16.mxu0 0
      %1385 = vmatmul.mubr.bf16.gmra.mrb[0].mxu0 %v1310
      %v1386 = vpop.f32.mrb[0].mxu0
      %v1387 = vadd.f32 0.0, %v1386
      %v1388 = vpop.f32.mrb[0].mxu0
      %v1389 = vpop.f32.mrb[0].mxu0
      %v1390 = vadd.f32 0.0, %v1389
      %v1391 = vpop.f32.mrb[0].mxu0
      %1392 = vmatprep.mubr.bf16.mxu0 0
      %1393 = vmatmul.mubr.bf16.gmra.mrb[0].mxu0 %v1313
      %v1394 = vpop.f32.mrb[0].mxu0
      %v1395 = vadd.f32 0.0, %v1394
      %v1396 = vpop.f32.mrb[0].mxu0
      %v1397 = vpop.f32.mrb[0].mxu0
      %v1398 = vadd.f32 0.0, %v1397
      %v1399 = vpop.f32.mrb[0].mxu0
      %1400 = vmatprep.mubr.bf16.mxu0 0
      %1401 = vmatmul.mubr.bf16.gmra.mrb[0].mxu0 %v1316
      %v1402 = vpop.f32.mrb[0].mxu0
      %v1403 = vadd.f32 0.0, %v1402
      %v1404 = vpop.f32.mrb[0].mxu0
      %v1405 = vpop.f32.mrb[0].mxu0
      %v1406 = vadd.f32 0.0, %v1405
      %v1407 = vpop.f32.mrb[0].mxu0
      %1408 = vmatprep.mubr.bf16.mxu0 0
      %1409 = vmatmul.mubr.bf16.gmra.mrb[0].mxu0 %v1319
      %v1410 = vpop.f32.mrb[0].mxu0
      %v1411 = vadd.f32 0.0, %v1410
      %v1412 = vpop.f32.mrb[0].mxu0
      %v1413 = vpop.f32.mrb[0].mxu0
      %v1414 = vadd.f32 0.0, %v1413
      %v1415 = vpop.f32.mrb[0].mxu0
      %1416 = vmatprep.mubr.bf16.mxu0 0
      %1417 = vmatmul.mubr.bf16.gmra.mrb[0].mxu0 %v1322
      %v1418 = vpop.f32.mrb[0].mxu0
      %v1419 = vadd.f32 0.0, %v1418
      %v1420 = vpop.f32.mrb[0].mxu0
      %v1421 = vpop.f32.mrb[0].mxu0
      %v1422 = vadd.f32 0.0, %v1421
      %v1423 = vpop.f32.mrb[0].mxu0
      %1424 = vdwg.mxu0
      %v1425 = vadd.f32 %v1258, %v1363
      %v1426 = vadd.f32 %v1259, %v1366
      %v1427 = vadd.f32 %v1260, %v1371
      %v1428 = vadd.f32 %v1261, %v1374
      %v1429 = vadd.f32 %v1262, %v1379
      %v1430 = vadd.f32 %v1263, %v1382
      %v1431 = vadd.f32 %v1264, %v1387
      %v1432 = vadd.f32 %v1265, %v1390
      %v1433 = vadd.f32 %v1266, %v1395
      %v1434 = vadd.f32 %v1267, %v1398
      %v1435 = vadd.f32 %v1268, %v1403
      %v1436 = vadd.f32 %v1269, %v1406
      %v1437 = vadd.f32 %v1270, %v1411
      %v1438 = vadd.f32 %v1271, %v1414
      %v1439 = vadd.f32 %v1272, %v1419
      %v1440 = vadd.f32 %v1273, %v1422
      %1441 = vst.msk [vmem:[%s511] sm:$0xff] %vm846, %v1425
      %1442 = vst.msk [vmem:[%s511 + $0x8] sm:$0xff] %vm846, %v1426
      %1443 = vst.msk [vmem:[%s511 + $0x10] sm:$0xff] %vm846, %v1427
      %1444 = vst.msk [vmem:[%s511 + $0x18] sm:$0xff] %vm846, %v1428
      %1445 = vst.msk [vmem:[%s511 + $0x20] sm:$0xff] %vm846, %v1429
      %1446 = vst.msk [vmem:[%s511 + $0x28] sm:$0xff] %vm846, %v1430
      %1447 = vst.msk [vmem:[%s511 + $0x30] sm:$0xff] %vm846, %v1431
      %1448 = vst.msk [vmem:[%s511 + $0x38] sm:$0xff] %vm846, %v1432
      %1449 = vst.msk [vmem:[%s511 + $0x40] sm:$0xff] %vm846, %v1433
      %1450 = vst.msk [vmem:[%s511 + $0x48] sm:$0xff] %vm846, %v1434
      %1451 = vst.msk [vmem:[%s511 + $0x50] sm:$0xff] %vm846, %v1435
      %1452 = vst.msk [vmem:[%s511 + $0x58] sm:$0xff] %vm846, %v1436
      %1453 = vst.msk [vmem:[%s511 + $0x60] sm:$0xff] %vm846, %v1437
      %1454 = vst.msk [vmem:[%s511 + $0x68] sm:$0xff] %vm846, %v1438
      %1455 = vst.msk [vmem:[%s511 + $0x70] sm:$0xff] %vm846, %v1439
      %1456 = vst.msk [vmem:[%s511 + $0x78] sm:$0xff] %vm846, %v1440
      %s1457 = smul.u32 8, %s24
      %p1458 = scmp.lt.s32.totalorder %s23, 1
      %s1459 = scalar_select %p1458, %s23, 1
      %p1460 = scmp.lt.s32.totalorder %s1457, 15
      %s1461 = scalar_select %p1460, %s1457, 15
      %s1462 = smul.addr %s1461, 2
      %s1463 = smul.addr %s1459, 32
      %s1464 = sadd.s32 %s1462, %s1463
      %s1465 = smul.addr %s1464, 8
      %s1466 = scalar_lea.vmem %s8, %s1465
      // Predicated region
      $region53: #{residual_block_forward.5} parent=51 // pred_check
        %p1467 = pneg %p263
      $region54: #{residual_block_forward.5} parent=51 // pred_check_branch
        %1469 = sbr.rel (%p1467) target = $region56
      $region55: #{residual_block_forward.5} parent=51 // pred_region
        %s1470 = smul.u32 8, %s24
      $region56: #{residual_block_forward.5} parent=51 // pred_fallthru
        _
    $region52: #{residual_block_forward.5} parent=5 // pred_fallthru
      _
    %p1471 = scmp.le.s32.totalorder 2, %s14
    // Predicated region
    $region57: #{residual_block_forward.5} parent=5 // pred_check
      %p1472 = pneg %p1471
    $region58: #{residual_block_forward.5} parent=5 // pred_check_branch
      %1474 = sbr.rel (%p1472) target = $region60
    $region59: #{residual_block_forward.5} parent=5 // pred_region
      %s1475 = ssub.s32 %s14, 2
      // Predicated region
      $region61: #{residual_block_forward.5} parent=59 // pred_check
        %p1476 = pneg %p269
      $region62: #{residual_block_forward.5} parent=59 // pred_check_branch
        %1478 = sbr.rel (%p1476) target = $region64
      $region63: #{residual_block_forward.5} parent=59 // pred_region
        %s1479 = smul.u32 8, %s26
        %p1480 = scmp.lt.s32.totalorder %s25, 1
        %s1481 = scalar_select %p1480, %s25, 1
        %p1482 = scmp.lt.s32.totalorder %s1479, 15
        %s1483 = scalar_select %p1482, %s1479, 15
        %s1484 = smul.addr %s1483, 2
        %s1485 = smul.addr %s1481, 32
        %s1486 = sadd.s32 %s1484, %s1485
        %s1487 = smul.addr %s1486, 8
        %s1488 = scalar_lea.vmem %s8, %s1487
      $region64: #{residual_block_forward.5} parent=59 // pred_fallthru
        _
    $region60: #{residual_block_forward.5} parent=5 // pred_fallthru
      _
  $region6: #{residual_block_forward.5} parent=0 // loop_footer
    %s18 = sadd.s32 1, %s14
  $region7: #{residual_block_forward.5} parent=0 // loop_footer_branch
    %13 = sbr.rel target = $region3
  $region8: #{residual_block_forward.5} parent=0 // loop_exit
    _

</llo_original>
